<compile_context>
chip_gen: v6e
topology: v6e:2x2x1
jax: 0.10.0
libtpu: 0.0.40
codegen_flags: <defaults>
</compile_context>

<pallas_src>
import math
from functools import partial

import jax
import jax.numpy as jnp
from jax import lax
from jax.experimental import pallas as pl
from jax.experimental.pallas import tpu as pltpu


# ----------------------------- fused Pallas kernels --------------------------

def _attn_block_kernel(x_ref, *rest, nhead, scale, has_pe, eps):
    """Fused (optional PE add) + QKV proj + per-head softmax attention +
    output proj + residual + LayerNorm.  One batch element per grid step.

    x_ref: (1, S, H) f32
    [pe_ref: (1, S, H) resident positional encoding, layer 0 only]
    wqkv_ref: (H, 3H) bf16, bqkv_ref: (1, 3H) f32
    wout_ref: (H, H)  bf16, bout_ref: (1, H)  f32
    g_ref, b_ref: (1, H) f32 LayerNorm affine
    o_ref: (1, S, H)
    """
    if has_pe:
        pe_ref, wqkv_ref, bqkv_ref, wout_ref, bout_ref, g_ref, b_ref, o_ref = rest
    else:
        wqkv_ref, bqkv_ref, wout_ref, bout_ref, g_ref, b_ref, o_ref = rest

    x = x_ref[0].astype(jnp.float32)                       # (S, H)
    if has_pe:
        x = x + pe_ref[0].astype(jnp.float32)
    S, H = x.shape
    hd = H // nhead

    # QKV projection: bf16 MXU operands, f32 accumulation.
    qkv = jnp.dot(x.astype(jnp.bfloat16), wqkv_ref[...],
                  preferred_element_type=jnp.float32) + bqkv_ref[...]      # (S, 3H)
    q = qkv[:, :H]
    k = qkv[:, H:2 * H]
    v = qkv[:, 2 * H:]

    # Per-head attention (statically unrolled over nhead), f32 softmax stats.
    heads = []
    for h in range(nhead):
        sl = slice(h * hd, (h + 1) * hd)
        qh = q[:, sl].astype(jnp.bfloat16)
        kh = k[:, sl].astype(jnp.bfloat16)
        vh = v[:, sl].astype(jnp.bfloat16)
        s = lax.dot_general(qh, kh, (((1,), (1,)), ((), ())),
                            preferred_element_type=jnp.float32) * scale    # (S, S)
        m = jnp.max(s, axis=-1, keepdims=True)
        p = jnp.exp(s - m)
        p = p * pl.reciprocal(jnp.sum(p, axis=-1, keepdims=True), approx=True)
        heads.append(jnp.dot(p.astype(jnp.bfloat16), vh,
                             preferred_element_type=jnp.float32))           # (S, hd)
    attn = jnp.concatenate(heads, axis=-1)                                  # (S, H)

    # Output projection + residual add + LayerNorm (f32).
    y = jnp.dot(attn.astype(jnp.bfloat16), wout_ref[...],
                preferred_element_type=jnp.float32) + bout_ref[...]
    z = x + y
    mean = jnp.mean(z, axis=-1, keepdims=True)
    zc = z - mean
    var = jnp.mean(zc * zc, axis=-1, keepdims=True)
    out = zc * lax.rsqrt(var + eps) * g_ref[...] + b_ref[...]
    o_ref[0] = out.astype(o_ref.dtype)


def _ffn_block_kernel(x_ref, w1_ref, b1_ref, w2_ref, b2_ref, g_ref, b_ref,
                      o_ref, *, eps):
    """Fused lin1 + ReLU + lin2 + residual + LayerNorm for one M-tile; the
    (tile_M, 2048) activation stays on-chip."""
    x = x_ref[...].astype(jnp.float32)                                      # (tm, H)
    h = jnp.dot(x.astype(jnp.bfloat16), w1_ref[...],
                preferred_element_type=jnp.float32) + b1_ref[...]           # (tm, F)
    h = jnp.maximum(h, 0.0)
    y = jnp.dot(h.astype(jnp.bfloat16), w2_ref[...],
                preferred_element_type=jnp.float32) + b2_ref[...]           # (tm, H)
    z = x + y
    mean = jnp.mean(z, axis=-1, keepdims=True)
    zc = z - mean
    var = jnp.mean(zc * zc, axis=-1, keepdims=True)
    out = zc * lax.rsqrt(var + eps) * g_ref[...] + b_ref[...]
    o_ref[...] = out.astype(o_ref.dtype)


# ------------------------------ Pallas wrappers -------------------------------

def fused_attention_block(x_bsh, pe, p, *, nhead, eps=1e-5):
    """x_bsh: (B, S, H) f32; pe: (1, S, H) f32 or None; returns (B, S, H)."""
    B, S, H = x_bsh.shape
    scale = 1.0 / math.sqrt(H // nhead)
    has_pe = pe is not None

    x_spec = pl.BlockSpec((1, S, H), lambda b: (b, 0, 0))
    resident = lambda shape: pl.BlockSpec(shape, lambda b: (0, 0))

    in_specs = [x_spec]
    inputs = [x_bsh]
    if has_pe:
        in_specs.append(pl.BlockSpec((1, S, H), lambda b: (0, 0, 0)))
        inputs.append(pe)
    in_specs += [
        resident((H, 3 * H)), resident((1, 3 * H)),
        resident((H, H)), resident((1, H)),
        resident((1, H)), resident((1, H)),
    ]
    inputs += [p["wqkv"], p["bqkv"], p["wout"], p["bout"],
               p["ln1_g"], p["ln1_b"]]

    return pl.pallas_call(
        partial(_attn_block_kernel, nhead=nhead, scale=scale,
                has_pe=has_pe, eps=eps),
        grid=(B,),
        in_specs=in_specs,
        out_specs=x_spec,
        out_shape=jax.ShapeDtypeStruct((B, S, H), x_bsh.dtype),
        compiler_params=pltpu.CompilerParams(dimension_semantics=("parallel",)),
    )(*inputs)


def _pick_tile_m(M):
    for t in (512, 256, 128):
        if M % t == 0:
            return t
    return M


def fused_ffn_block(x, p, *, eps=1e-5):
    """x: (M, H) f32; returns norm2(x + W2 relu(W1 x))."""
    M, H = x.shape
    F = p["w1"].shape[1]
    tm = _pick_tile_m(M)

    row_spec = pl.BlockSpec((tm, H), lambda i: (i, 0))
    resident = lambda shape: pl.BlockSpec(shape, lambda i: (0, 0))

    return pl.pallas_call(
        partial(_ffn_block_kernel, eps=eps),
        grid=(M // tm,),
        in_specs=[row_spec,
                  resident((H, F)), resident((1, F)),
                  resident((F, H)), resident((1, H)),
                  resident((1, H)), resident((1, H))],
        out_specs=row_spec,
        out_shape=jax.ShapeDtypeStruct((M, H), x.dtype),
        compiler_params=pltpu.CompilerParams(dimension_semantics=("parallel",)),
    )(x, p["w1"], p["b1"], p["w2"], p["b2"], p["ln2_g"], p["ln2_b"])


# ------------------------------- model glue -----------------------------------

def make_positional_encoding(max_len, d_model):
    position = jnp.arange(max_len, dtype=jnp.float32)[:, None]
    div_term = jnp.exp(
        jnp.arange(0, d_model, 2, dtype=jnp.float32) * (-math.log(10000.0) / d_model)
    )
    pe = jnp.zeros((max_len, d_model), jnp.float32)
    pe = pe.at[:, 0::2].set(jnp.sin(position * div_term))
    pe = pe.at[:, 1::2].set(jnp.cos(position * div_term))
    return pe[:, None, :]  # (max_len, 1, d_model)


def init_params(key, hidden, num_layers, ff=2048):
    """PyTorch-layout parameters: Linear weight is (out_features, in_features)."""
    params = []
    for l in range(num_layers):
        keys = jax.random.split(jax.random.fold_in(key, l), 4)
        params.append(dict(
            in_proj_w=jax.random.normal(keys[0], (3 * hidden, hidden), jnp.float32) * 0.05,
            in_proj_b=jnp.zeros((3 * hidden,), jnp.float32),
            out_proj_w=jax.random.normal(keys[1], (hidden, hidden), jnp.float32) * 0.05,
            out_proj_b=jnp.zeros((hidden,), jnp.float32),
            lin1_w=jax.random.normal(keys[2], (ff, hidden), jnp.float32) * 0.05,
            lin1_b=jnp.zeros((ff,), jnp.float32),
            lin2_w=jax.random.normal(keys[3], (hidden, ff), jnp.float32) * 0.05,
            lin2_b=jnp.zeros((hidden,), jnp.float32),
            ln1_g=jnp.ones((hidden,), jnp.float32),
            ln1_b=jnp.zeros((hidden,), jnp.float32),
            ln2_g=jnp.ones((hidden,), jnp.float32),
            ln2_b=jnp.zeros((hidden,), jnp.float32),
        ))
    return params


def prepare_params(raw_params):
    """One-time prep: transpose weights to (in, out), cast matmul weights to
    bf16 (f32 accumulation is used in-kernel), reshape biases / LN params to
    (1, N) so the kernels can add / scale with a plain broadcast."""
    prepped = []
    for p in raw_params:
        prepped.append(dict(
            wqkv=p["in_proj_w"].T.astype(jnp.bfloat16),
            bqkv=p["in_proj_b"].reshape(1, -1).astype(jnp.float32),
            wout=p["out_proj_w"].T.astype(jnp.bfloat16),
            bout=p["out_proj_b"].reshape(1, -1).astype(jnp.float32),
            w1=p["lin1_w"].T.astype(jnp.bfloat16),
            b1=p["lin1_b"].reshape(1, -1).astype(jnp.float32),
            w2=p["lin2_w"].T.astype(jnp.bfloat16),
            b2=p["lin2_b"].reshape(1, -1).astype(jnp.float32),
            ln1_g=p["ln1_g"].reshape(1, -1).astype(jnp.float32),
            ln1_b=p["ln1_b"].reshape(1, -1).astype(jnp.float32),
            ln2_g=p["ln2_g"].reshape(1, -1).astype(jnp.float32),
            ln2_b=p["ln2_b"].reshape(1, -1).astype(jnp.float32),
        ))
    return prepped


def extractive_transformer_encoder(x, pe, layer_params, nhead=8):
    """x: (S, B, H); pe: (max_len, 1, H); returns (S, B, H)."""
    S, B, H = x.shape
    assert len(layer_params) >= 1  # PE add is fused into layer 0's kernel
    x = jnp.transpose(x, (1, 0, 2))                             # (B, S, H), once
    pe_b = jnp.transpose(pe[:S], (1, 0, 2)).astype(jnp.float32)  # (1, S, H), no bcast
    for i, p in enumerate(layer_params):
        x = fused_attention_block(x, pe_b if i == 0 else None, p, nhead=nhead)
        x = fused_ffn_block(x.reshape(B * S, H), p).reshape(B, S, H)
    return jnp.transpose(x, (1, 0, 2))                          # back to (S, B, H)


# ---------------------------------- main ---------------------------------------

if __name__ == "__main__":
    S, B, H = 8, 2, 32                       # seq_len, batch, hidden_size
    num_layers, max_len, nhead = 2, 64, 8    # nhead=8, ff=2048 fixed by the module

    key = jax.random.PRNGKey(0)
    kx, kp = jax.random.split(key)
    x = jax.random.normal(kx, (S, B, H), jnp.float32)

    pe = make_positional_encoding(max_len, H)
    params = prepare_params(init_params(kp, H, num_layers, ff=2048))

    fwd = jax.jit(extractive_transformer_encoder)
    out = fwd(x, pe, params)
    jax.block_until_ready(out)

    assert out.shape == (S, B, H) and out.dtype == jnp.float32
    assert bool(jnp.all(jnp.isfinite(out)))
    print("KERNEL_OK")
</pallas_src>

<mosaic_0001>
module attributes {stable_mosaic.version = 11 : i64} {
  func.func @_attn_block_kernel(%arg0: i32, %arg1: memref<1x8x32xf32, #tpu.memory_space<vmem>>, %arg2: memref<1x8x32xf32, #tpu.memory_space<vmem>>, %arg3: memref<32x96xbf16, #tpu.memory_space<vmem>>, %arg4: memref<1x96xf32, #tpu.memory_space<vmem>>, %arg5: memref<32x32xbf16, #tpu.memory_space<vmem>>, %arg6: memref<1x32xf32, #tpu.memory_space<vmem>>, %arg7: memref<1x32xf32, #tpu.memory_space<vmem>>, %arg8: memref<1x32xf32, #tpu.memory_space<vmem>>, %arg9: memref<1x8x32xf32, #tpu.memory_space<vmem>>) attributes {dimension_semantics = [#tpu.dimension_semantics<parallel>], iteration_bounds = array<i64: 2>, scalar_prefetch = 0 : i64, scratch_operands = 0 : i64, tpu.core_type = #tpu.core_type<tc>, window_params = [{transform_indices = @transform_0, window_bounds = array<i64: 1, 8, 32>}, {pipeline_mode = #tpu.pipeline_mode<synchronous>, transform_indices = @transform_1, window_bounds = array<i64: 1, 8, 32>}, {pipeline_mode = #tpu.pipeline_mode<synchronous>, transform_indices = @transform_2, window_bounds = array<i64: 32, 96>}, {pipeline_mode = #tpu.pipeline_mode<synchronous>, transform_indices = @transform_3, window_bounds = array<i64: 1, 96>}, {pipeline_mode = #tpu.pipeline_mode<synchronous>, transform_indices = @transform_4, window_bounds = array<i64: 32, 32>}, {pipeline_mode = #tpu.pipeline_mode<synchronous>, transform_indices = @transform_5, window_bounds = array<i64: 1, 32>}, {pipeline_mode = #tpu.pipeline_mode<synchronous>, transform_indices = @transform_6, window_bounds = array<i64: 1, 32>}, {pipeline_mode = #tpu.pipeline_mode<synchronous>, transform_indices = @transform_7, window_bounds = array<i64: 1, 32>}, {transform_indices = @transform_8, window_bounds = array<i64: 1, 8, 32>}]} {
    %c0 = arith.constant 0 : index
    %c0_0 = arith.constant 0 : index
    %c0_1 = arith.constant 0 : index
    %0 = vector.load %arg1[%c0, %c0_0, %c0_1] : memref<1x8x32xf32, #tpu.memory_space<vmem>>, vector<1x8x32xf32>
    %1 = vector.shape_cast %0 : vector<1x8x32xf32> to vector<8x32xf32>
    %c0_2 = arith.constant 0 : index
    %c0_3 = arith.constant 0 : index
    %c0_4 = arith.constant 0 : index
    %2 = vector.load %arg2[%c0_2, %c0_3, %c0_4] : memref<1x8x32xf32, #tpu.memory_space<vmem>>, vector<1x8x32xf32>
    %3 = vector.shape_cast %2 : vector<1x8x32xf32> to vector<8x32xf32>
    %4 = arith.addf %1, %3 : vector<8x32xf32>
    %5 = arith.truncf %4 : vector<8x32xf32> to vector<8x32xbf16>
    %c0_5 = arith.constant 0 : index
    %c0_6 = arith.constant 0 : index
    %6 = vector.load %arg3[%c0_5, %c0_6] : memref<32x96xbf16, #tpu.memory_space<vmem>>, vector<32x96xbf16>
    %cst = arith.constant dense<0.000000e+00> : vector<8x96xf32>
    %7 = tpu.matmul %5, %6, %cst {dimension_numbers = #tpu.dot_dimension_numbers<[1], [0], [0], [1], [0, 0, 1, 1], [], []>} : vector<8x32xbf16>, vector<32x96xbf16>, vector<8x96xf32> -> vector<8x96xf32>
    %c0_7 = arith.constant 0 : index
    %c0_8 = arith.constant 0 : index
    %8 = vector.load %arg4[%c0_7, %c0_8] : memref<1x96xf32, #tpu.memory_space<vmem>>, vector<1x96xf32>
    %9 = vector.broadcast %8 : vector<1x96xf32> to vector<8x96xf32>
    %10 = arith.addf %7, %9 : vector<8x96xf32>
    %11 = vector.extract_strided_slice %10 {offsets = [0, 0], sizes = [8, 32], strides = [1, 1]} : vector<8x96xf32> to vector<8x32xf32>
    %12 = vector.extract_strided_slice %10 {offsets = [0, 32], sizes = [8, 32], strides = [1, 1]} : vector<8x96xf32> to vector<8x32xf32>
    %13 = vector.extract_strided_slice %10 {offsets = [0, 64], sizes = [8, 32], strides = [1, 1]} : vector<8x96xf32> to vector<8x32xf32>
    %14 = vector.extract_strided_slice %11 {offsets = [0, 0], sizes = [8, 4], strides = [1, 1]} : vector<8x32xf32> to vector<8x4xf32>
    %15 = arith.truncf %14 : vector<8x4xf32> to vector<8x4xbf16>
    %16 = vector.extract_strided_slice %12 {offsets = [0, 0], sizes = [8, 4], strides = [1, 1]} : vector<8x32xf32> to vector<8x4xf32>
    %17 = arith.truncf %16 : vector<8x4xf32> to vector<8x4xbf16>
    %18 = vector.extract_strided_slice %13 {offsets = [0, 0], sizes = [8, 4], strides = [1, 1]} : vector<8x32xf32> to vector<8x4xf32>
    %19 = arith.truncf %18 : vector<8x4xf32> to vector<8x4xbf16>
    %cst_9 = arith.constant dense<0.000000e+00> : vector<8x8xf32>
    %20 = tpu.matmul %15, %17, %cst_9 {dimension_numbers = #tpu.dot_dimension_numbers<[1], [1], [0], [0], [0, 0, 1, 0], [], []>} : vector<8x4xbf16>, vector<8x4xbf16>, vector<8x8xf32> -> vector<8x8xf32>
    %cst_10 = arith.constant 5.000000e-01 : f32
    %21 = vector.broadcast %cst_10 : f32 to vector<8x8xf32>
    %22 = arith.mulf %20, %21 : vector<8x8xf32>
    %cst_11 = arith.constant dense<0xFF800000> : vector<8xf32>
    %23 = vector.multi_reduction <maximumf>, %22, %cst_11 [1] : vector<8x8xf32> to vector<8xf32>
    %24 = vector.shape_cast %23 : vector<8xf32> to vector<8x1xf32>
    %25 = vector.broadcast %24 : vector<8x1xf32> to vector<8x8xf32>
    %26 = arith.subf %22, %25 : vector<8x8xf32>
    %27 = math.exp %26 : vector<8x8xf32>
    %cst_12 = arith.constant dense<0.000000e+00> : vector<8xf32>
    %28 = vector.multi_reduction <add>, %27, %cst_12 [1] : vector<8x8xf32> to vector<8xf32>
    %29 = vector.shape_cast %28 : vector<8xf32> to vector<8x1xf32>
    %30 = tpu.reciprocal %29 {approx = true} : vector<8x1xf32> -> vector<8x1xf32>
    %31 = vector.broadcast %30 : vector<8x1xf32> to vector<8x8xf32>
    %32 = arith.mulf %27, %31 : vector<8x8xf32>
    %33 = arith.truncf %32 : vector<8x8xf32> to vector<8x8xbf16>
    %cst_13 = arith.constant dense<0.000000e+00> : vector<8x4xf32>
    %34 = tpu.matmul %33, %19, %cst_13 {dimension_numbers = #tpu.dot_dimension_numbers<[1], [0], [0], [1], [0, 0, 1, 1], [], []>} : vector<8x8xbf16>, vector<8x4xbf16>, vector<8x4xf32> -> vector<8x4xf32>
    %35 = vector.extract_strided_slice %11 {offsets = [0, 4], sizes = [8, 4], strides = [1, 1]} : vector<8x32xf32> to vector<8x4xf32>
    %36 = arith.truncf %35 : vector<8x4xf32> to vector<8x4xbf16>
    %37 = vector.extract_strided_slice %12 {offsets = [0, 4], sizes = [8, 4], strides = [1, 1]} : vector<8x32xf32> to vector<8x4xf32>
    %38 = arith.truncf %37 : vector<8x4xf32> to vector<8x4xbf16>
    %39 = vector.extract_strided_slice %13 {offsets = [0, 4], sizes = [8, 4], strides = [1, 1]} : vector<8x32xf32> to vector<8x4xf32>
    %40 = arith.truncf %39 : vector<8x4xf32> to vector<8x4xbf16>
    %cst_14 = arith.constant dense<0.000000e+00> : vector<8x8xf32>
    %41 = tpu.matmul %36, %38, %cst_14 {dimension_numbers = #tpu.dot_dimension_numbers<[1], [1], [0], [0], [0, 0, 1, 0], [], []>} : vector<8x4xbf16>, vector<8x4xbf16>, vector<8x8xf32> -> vector<8x8xf32>
    %cst_15 = arith.constant 5.000000e-01 : f32
    %42 = vector.broadcast %cst_15 : f32 to vector<8x8xf32>
    %43 = arith.mulf %41, %42 : vector<8x8xf32>
    %cst_16 = arith.constant dense<0xFF800000> : vector<8xf32>
    %44 = vector.multi_reduction <maximumf>, %43, %cst_16 [1] : vector<8x8xf32> to vector<8xf32>
    %45 = vector.shape_cast %44 : vector<8xf32> to vector<8x1xf32>
    %46 = vector.broadcast %45 : vector<8x1xf32> to vector<8x8xf32>
    %47 = arith.subf %43, %46 : vector<8x8xf32>
    %48 = math.exp %47 : vector<8x8xf32>
    %cst_17 = arith.constant dense<0.000000e+00> : vector<8xf32>
    %49 = vector.multi_reduction <add>, %48, %cst_17 [1] : vector<8x8xf32> to vector<8xf32>
    %50 = vector.shape_cast %49 : vector<8xf32> to vector<8x1xf32>
    %51 = tpu.reciprocal %50 {approx = true} : vector<8x1xf32> -> vector<8x1xf32>
    %52 = vector.broadcast %51 : vector<8x1xf32> to vector<8x8xf32>
    %53 = arith.mulf %48, %52 : vector<8x8xf32>
    %54 = arith.truncf %53 : vector<8x8xf32> to vector<8x8xbf16>
    %cst_18 = arith.constant dense<0.000000e+00> : vector<8x4xf32>
    %55 = tpu.matmul %54, %40, %cst_18 {dimension_numbers = #tpu.dot_dimension_numbers<[1], [0], [0], [1], [0, 0, 1, 1], [], []>} : vector<8x8xbf16>, vector<8x4xbf16>, vector<8x4xf32> -> vector<8x4xf32>
    %56 = vector.extract_strided_slice %11 {offsets = [0, 8], sizes = [8, 4], strides = [1, 1]} : vector<8x32xf32> to vector<8x4xf32>
    %57 = arith.truncf %56 : vector<8x4xf32> to vector<8x4xbf16>
    %58 = vector.extract_strided_slice %12 {offsets = [0, 8], sizes = [8, 4], strides = [1, 1]} : vector<8x32xf32> to vector<8x4xf32>
    %59 = arith.truncf %58 : vector<8x4xf32> to vector<8x4xbf16>
    %60 = vector.extract_strided_slice %13 {offsets = [0, 8], sizes = [8, 4], strides = [1, 1]} : vector<8x32xf32> to vector<8x4xf32>
    %61 = arith.truncf %60 : vector<8x4xf32> to vector<8x4xbf16>
    %cst_19 = arith.constant dense<0.000000e+00> : vector<8x8xf32>
    %62 = tpu.matmul %57, %59, %cst_19 {dimension_numbers = #tpu.dot_dimension_numbers<[1], [1], [0], [0], [0, 0, 1, 0], [], []>} : vector<8x4xbf16>, vector<8x4xbf16>, vector<8x8xf32> -> vector<8x8xf32>
    %cst_20 = arith.constant 5.000000e-01 : f32
    %63 = vector.broadcast %cst_20 : f32 to vector<8x8xf32>
    %64 = arith.mulf %62, %63 : vector<8x8xf32>
    %cst_21 = arith.constant dense<0xFF800000> : vector<8xf32>
    %65 = vector.multi_reduction <maximumf>, %64, %cst_21 [1] : vector<8x8xf32> to vector<8xf32>
    %66 = vector.shape_cast %65 : vector<8xf32> to vector<8x1xf32>
    %67 = vector.broadcast %66 : vector<8x1xf32> to vector<8x8xf32>
    %68 = arith.subf %64, %67 : vector<8x8xf32>
    %69 = math.exp %68 : vector<8x8xf32>
    %cst_22 = arith.constant dense<0.000000e+00> : vector<8xf32>
    %70 = vector.multi_reduction <add>, %69, %cst_22 [1] : vector<8x8xf32> to vector<8xf32>
    %71 = vector.shape_cast %70 : vector<8xf32> to vector<8x1xf32>
    %72 = tpu.reciprocal %71 {approx = true} : vector<8x1xf32> -> vector<8x1xf32>
    %73 = vector.broadcast %72 : vector<8x1xf32> to vector<8x8xf32>
    %74 = arith.mulf %69, %73 : vector<8x8xf32>
    %75 = arith.truncf %74 : vector<8x8xf32> to vector<8x8xbf16>
    %cst_23 = arith.constant dense<0.000000e+00> : vector<8x4xf32>
    %76 = tpu.matmul %75, %61, %cst_23 {dimension_numbers = #tpu.dot_dimension_numbers<[1], [0], [0], [1], [0, 0, 1, 1], [], []>} : vector<8x8xbf16>, vector<8x4xbf16>, vector<8x4xf32> -> vector<8x4xf32>
    %77 = vector.extract_strided_slice %11 {offsets = [0, 12], sizes = [8, 4], strides = [1, 1]} : vector<8x32xf32> to vector<8x4xf32>
    %78 = arith.truncf %77 : vector<8x4xf32> to vector<8x4xbf16>
    %79 = vector.extract_strided_slice %12 {offsets = [0, 12], sizes = [8, 4], strides = [1, 1]} : vector<8x32xf32> to vector<8x4xf32>
    %80 = arith.truncf %79 : vector<8x4xf32> to vector<8x4xbf16>
    %81 = vector.extract_strided_slice %13 {offsets = [0, 12], sizes = [8, 4], strides = [1, 1]} : vector<8x32xf32> to vector<8x4xf32>
    %82 = arith.truncf %81 : vector<8x4xf32> to vector<8x4xbf16>
    %cst_24 = arith.constant dense<0.000000e+00> : vector<8x8xf32>
    %83 = tpu.matmul %78, %80, %cst_24 {dimension_numbers = #tpu.dot_dimension_numbers<[1], [1], [0], [0], [0, 0, 1, 0], [], []>} : vector<8x4xbf16>, vector<8x4xbf16>, vector<8x8xf32> -> vector<8x8xf32>
    %cst_25 = arith.constant 5.000000e-01 : f32
    %84 = vector.broadcast %cst_25 : f32 to vector<8x8xf32>
    %85 = arith.mulf %83, %84 : vector<8x8xf32>
    %cst_26 = arith.constant dense<0xFF800000> : vector<8xf32>
    %86 = vector.multi_reduction <maximumf>, %85, %cst_26 [1] : vector<8x8xf32> to vector<8xf32>
    %87 = vector.shape_cast %86 : vector<8xf32> to vector<8x1xf32>
    %88 = vector.broadcast %87 : vector<8x1xf32> to vector<8x8xf32>
    %89 = arith.subf %85, %88 : vector<8x8xf32>
    %90 = math.exp %89 : vector<8x8xf32>
    %cst_27 = arith.constant dense<0.000000e+00> : vector<8xf32>
    %91 = vector.multi_reduction <add>, %90, %cst_27 [1] : vector<8x8xf32> to vector<8xf32>
    %92 = vector.shape_cast %91 : vector<8xf32> to vector<8x1xf32>
    %93 = tpu.reciprocal %92 {approx = true} : vector<8x1xf32> -> vector<8x1xf32>
    %94 = vector.broadcast %93 : vector<8x1xf32> to vector<8x8xf32>
    %95 = arith.mulf %90, %94 : vector<8x8xf32>
    %96 = arith.truncf %95 : vector<8x8xf32> to vector<8x8xbf16>
    %cst_28 = arith.constant dense<0.000000e+00> : vector<8x4xf32>
    %97 = tpu.matmul %96, %82, %cst_28 {dimension_numbers = #tpu.dot_dimension_numbers<[1], [0], [0], [1], [0, 0, 1, 1], [], []>} : vector<8x8xbf16>, vector<8x4xbf16>, vector<8x4xf32> -> vector<8x4xf32>
    %98 = vector.extract_strided_slice %11 {offsets = [0, 16], sizes = [8, 4], strides = [1, 1]} : vector<8x32xf32> to vector<8x4xf32>
    %99 = arith.truncf %98 : vector<8x4xf32> to vector<8x4xbf16>
    %100 = vector.extract_strided_slice %12 {offsets = [0, 16], sizes = [8, 4], strides = [1, 1]} : vector<8x32xf32> to vector<8x4xf32>
    %101 = arith.truncf %100 : vector<8x4xf32> to vector<8x4xbf16>
    %102 = vector.extract_strided_slice %13 {offsets = [0, 16], sizes = [8, 4], strides = [1, 1]} : vector<8x32xf32> to vector<8x4xf32>
    %103 = arith.truncf %102 : vector<8x4xf32> to vector<8x4xbf16>
    %cst_29 = arith.constant dense<0.000000e+00> : vector<8x8xf32>
    %104 = tpu.matmul %99, %101, %cst_29 {dimension_numbers = #tpu.dot_dimension_numbers<[1], [1], [0], [0], [0, 0, 1, 0], [], []>} : vector<8x4xbf16>, vector<8x4xbf16>, vector<8x8xf32> -> vector<8x8xf32>
    %cst_30 = arith.constant 5.000000e-01 : f32
    %105 = vector.broadcast %cst_30 : f32 to vector<8x8xf32>
    %106 = arith.mulf %104, %105 : vector<8x8xf32>
    %cst_31 = arith.constant dense<0xFF800000> : vector<8xf32>
    %107 = vector.multi_reduction <maximumf>, %106, %cst_31 [1] : vector<8x8xf32> to vector<8xf32>
    %108 = vector.shape_cast %107 : vector<8xf32> to vector<8x1xf32>
    %109 = vector.broadcast %108 : vector<8x1xf32> to vector<8x8xf32>
    %110 = arith.subf %106, %109 : vector<8x8xf32>
    %111 = math.exp %110 : vector<8x8xf32>
    %cst_32 = arith.constant dense<0.000000e+00> : vector<8xf32>
    %112 = vector.multi_reduction <add>, %111, %cst_32 [1] : vector<8x8xf32> to vector<8xf32>
    %113 = vector.shape_cast %112 : vector<8xf32> to vector<8x1xf32>
    %114 = tpu.reciprocal %113 {approx = true} : vector<8x1xf32> -> vector<8x1xf32>
    %115 = vector.broadcast %114 : vector<8x1xf32> to vector<8x8xf32>
    %116 = arith.mulf %111, %115 : vector<8x8xf32>
    %117 = arith.truncf %116 : vector<8x8xf32> to vector<8x8xbf16>
    %cst_33 = arith.constant dense<0.000000e+00> : vector<8x4xf32>
    %118 = tpu.matmul %117, %103, %cst_33 {dimension_numbers = #tpu.dot_dimension_numbers<[1], [0], [0], [1], [0, 0, 1, 1], [], []>} : vector<8x8xbf16>, vector<8x4xbf16>, vector<8x4xf32> -> vector<8x4xf32>
    %119 = vector.extract_strided_slice %11 {offsets = [0, 20], sizes = [8, 4], strides = [1, 1]} : vector<8x32xf32> to vector<8x4xf32>
    %120 = arith.truncf %119 : vector<8x4xf32> to vector<8x4xbf16>
    %121 = vector.extract_strided_slice %12 {offsets = [0, 20], sizes = [8, 4], strides = [1, 1]} : vector<8x32xf32> to vector<8x4xf32>
    %122 = arith.truncf %121 : vector<8x4xf32> to vector<8x4xbf16>
    %123 = vector.extract_strided_slice %13 {offsets = [0, 20], sizes = [8, 4], strides = [1, 1]} : vector<8x32xf32> to vector<8x4xf32>
    %124 = arith.truncf %123 : vector<8x4xf32> to vector<8x4xbf16>
    %cst_34 = arith.constant dense<0.000000e+00> : vector<8x8xf32>
    %125 = tpu.matmul %120, %122, %cst_34 {dimension_numbers = #tpu.dot_dimension_numbers<[1], [1], [0], [0], [0, 0, 1, 0], [], []>} : vector<8x4xbf16>, vector<8x4xbf16>, vector<8x8xf32> -> vector<8x8xf32>
    %cst_35 = arith.constant 5.000000e-01 : f32
    %126 = vector.broadcast %cst_35 : f32 to vector<8x8xf32>
    %127 = arith.mulf %125, %126 : vector<8x8xf32>
    %cst_36 = arith.constant dense<0xFF800000> : vector<8xf32>
    %128 = vector.multi_reduction <maximumf>, %127, %cst_36 [1] : vector<8x8xf32> to vector<8xf32>
    %129 = vector.shape_cast %128 : vector<8xf32> to vector<8x1xf32>
    %130 = vector.broadcast %129 : vector<8x1xf32> to vector<8x8xf32>
    %131 = arith.subf %127, %130 : vector<8x8xf32>
    %132 = math.exp %131 : vector<8x8xf32>
    %cst_37 = arith.constant dense<0.000000e+00> : vector<8xf32>
    %133 = vector.multi_reduction <add>, %132, %cst_37 [1] : vector<8x8xf32> to vector<8xf32>
    %134 = vector.shape_cast %133 : vector<8xf32> to vector<8x1xf32>
    %135 = tpu.reciprocal %134 {approx = true} : vector<8x1xf32> -> vector<8x1xf32>
    %136 = vector.broadcast %135 : vector<8x1xf32> to vector<8x8xf32>
    %137 = arith.mulf %132, %136 : vector<8x8xf32>
    %138 = arith.truncf %137 : vector<8x8xf32> to vector<8x8xbf16>
    %cst_38 = arith.constant dense<0.000000e+00> : vector<8x4xf32>
    %139 = tpu.matmul %138, %124, %cst_38 {dimension_numbers = #tpu.dot_dimension_numbers<[1], [0], [0], [1], [0, 0, 1, 1], [], []>} : vector<8x8xbf16>, vector<8x4xbf16>, vector<8x4xf32> -> vector<8x4xf32>
    %140 = vector.extract_strided_slice %11 {offsets = [0, 24], sizes = [8, 4], strides = [1, 1]} : vector<8x32xf32> to vector<8x4xf32>
    %141 = arith.truncf %140 : vector<8x4xf32> to vector<8x4xbf16>
    %142 = vector.extract_strided_slice %12 {offsets = [0, 24], sizes = [8, 4], strides = [1, 1]} : vector<8x32xf32> to vector<8x4xf32>
    %143 = arith.truncf %142 : vector<8x4xf32> to vector<8x4xbf16>
    %144 = vector.extract_strided_slice %13 {offsets = [0, 24], sizes = [8, 4], strides = [1, 1]} : vector<8x32xf32> to vector<8x4xf32>
    %145 = arith.truncf %144 : vector<8x4xf32> to vector<8x4xbf16>
    %cst_39 = arith.constant dense<0.000000e+00> : vector<8x8xf32>
    %146 = tpu.matmul %141, %143, %cst_39 {dimension_numbers = #tpu.dot_dimension_numbers<[1], [1], [0], [0], [0, 0, 1, 0], [], []>} : vector<8x4xbf16>, vector<8x4xbf16>, vector<8x8xf32> -> vector<8x8xf32>
    %cst_40 = arith.constant 5.000000e-01 : f32
    %147 = vector.broadcast %cst_40 : f32 to vector<8x8xf32>
    %148 = arith.mulf %146, %147 : vector<8x8xf32>
    %cst_41 = arith.constant dense<0xFF800000> : vector<8xf32>
    %149 = vector.multi_reduction <maximumf>, %148, %cst_41 [1] : vector<8x8xf32> to vector<8xf32>
    %150 = vector.shape_cast %149 : vector<8xf32> to vector<8x1xf32>
    %151 = vector.broadcast %150 : vector<8x1xf32> to vector<8x8xf32>
    %152 = arith.subf %148, %151 : vector<8x8xf32>
    %153 = math.exp %152 : vector<8x8xf32>
    %cst_42 = arith.constant dense<0.000000e+00> : vector<8xf32>
    %154 = vector.multi_reduction <add>, %153, %cst_42 [1] : vector<8x8xf32> to vector<8xf32>
    %155 = vector.shape_cast %154 : vector<8xf32> to vector<8x1xf32>
    %156 = tpu.reciprocal %155 {approx = true} : vector<8x1xf32> -> vector<8x1xf32>
    %157 = vector.broadcast %156 : vector<8x1xf32> to vector<8x8xf32>
    %158 = arith.mulf %153, %157 : vector<8x8xf32>
    %159 = arith.truncf %158 : vector<8x8xf32> to vector<8x8xbf16>
    %cst_43 = arith.constant dense<0.000000e+00> : vector<8x4xf32>
    %160 = tpu.matmul %159, %145, %cst_43 {dimension_numbers = #tpu.dot_dimension_numbers<[1], [0], [0], [1], [0, 0, 1, 1], [], []>} : vector<8x8xbf16>, vector<8x4xbf16>, vector<8x4xf32> -> vector<8x4xf32>
    %161 = vector.extract_strided_slice %11 {offsets = [0, 28], sizes = [8, 4], strides = [1, 1]} : vector<8x32xf32> to vector<8x4xf32>
    %162 = arith.truncf %161 : vector<8x4xf32> to vector<8x4xbf16>
    %163 = vector.extract_strided_slice %12 {offsets = [0, 28], sizes = [8, 4], strides = [1, 1]} : vector<8x32xf32> to vector<8x4xf32>
    %164 = arith.truncf %163 : vector<8x4xf32> to vector<8x4xbf16>
    %165 = vector.extract_strided_slice %13 {offsets = [0, 28], sizes = [8, 4], strides = [1, 1]} : vector<8x32xf32> to vector<8x4xf32>
    %166 = arith.truncf %165 : vector<8x4xf32> to vector<8x4xbf16>
    %cst_44 = arith.constant dense<0.000000e+00> : vector<8x8xf32>
    %167 = tpu.matmul %162, %164, %cst_44 {dimension_numbers = #tpu.dot_dimension_numbers<[1], [1], [0], [0], [0, 0, 1, 0], [], []>} : vector<8x4xbf16>, vector<8x4xbf16>, vector<8x8xf32> -> vector<8x8xf32>
    %cst_45 = arith.constant 5.000000e-01 : f32
    %168 = vector.broadcast %cst_45 : f32 to vector<8x8xf32>
    %169 = arith.mulf %167, %168 : vector<8x8xf32>
    %cst_46 = arith.constant dense<0xFF800000> : vector<8xf32>
    %170 = vector.multi_reduction <maximumf>, %169, %cst_46 [1] : vector<8x8xf32> to vector<8xf32>
    %171 = vector.shape_cast %170 : vector<8xf32> to vector<8x1xf32>
    %172 = vector.broadcast %171 : vector<8x1xf32> to vector<8x8xf32>
    %173 = arith.subf %169, %172 : vector<8x8xf32>
    %174 = math.exp %173 : vector<8x8xf32>
    %cst_47 = arith.constant dense<0.000000e+00> : vector<8xf32>
    %175 = vector.multi_reduction <add>, %174, %cst_47 [1] : vector<8x8xf32> to vector<8xf32>
    %176 = vector.shape_cast %175 : vector<8xf32> to vector<8x1xf32>
    %177 = tpu.reciprocal %176 {approx = true} : vector<8x1xf32> -> vector<8x1xf32>
    %178 = vector.broadcast %177 : vector<8x1xf32> to vector<8x8xf32>
    %179 = arith.mulf %174, %178 : vector<8x8xf32>
    %180 = arith.truncf %179 : vector<8x8xf32> to vector<8x8xbf16>
    %cst_48 = arith.constant dense<0.000000e+00> : vector<8x4xf32>
    %181 = tpu.matmul %180, %166, %cst_48 {dimension_numbers = #tpu.dot_dimension_numbers<[1], [0], [0], [1], [0, 0, 1, 1], [], []>} : vector<8x8xbf16>, vector<8x4xbf16>, vector<8x4xf32> -> vector<8x4xf32>
    %182 = tpu.concatenate %34, %55, %76, %97, %118, %139, %160, %181 in 1 : vector<8x4xf32>, vector<8x4xf32>, vector<8x4xf32>, vector<8x4xf32>, vector<8x4xf32>, vector<8x4xf32>, vector<8x4xf32>, vector<8x4xf32> -> vector<8x32xf32>
    %183 = arith.truncf %182 : vector<8x32xf32> to vector<8x32xbf16>
    %c0_49 = arith.constant 0 : index
    %c0_50 = arith.constant 0 : index
    %184 = vector.load %arg5[%c0_49, %c0_50] : memref<32x32xbf16, #tpu.memory_space<vmem>>, vector<32x32xbf16>
    %cst_51 = arith.constant dense<0.000000e+00> : vector<8x32xf32>
    %185 = tpu.matmul %183, %184, %cst_51 {dimension_numbers = #tpu.dot_dimension_numbers<[1], [0], [0], [1], [0, 0, 1, 1], [], []>} : vector<8x32xbf16>, vector<32x32xbf16>, vector<8x32xf32> -> vector<8x32xf32>
    %c0_52 = arith.constant 0 : index
    %c0_53 = arith.constant 0 : index
    %186 = vector.load %arg6[%c0_52, %c0_53] : memref<1x32xf32, #tpu.memory_space<vmem>>, vector<1x32xf32>
    %187 = vector.broadcast %186 : vector<1x32xf32> to vector<8x32xf32>
    %188 = arith.addf %185, %187 : vector<8x32xf32>
    %189 = arith.addf %4, %188 : vector<8x32xf32>
    %cst_54 = arith.constant dense<0.000000e+00> : vector<8xf32>
    %190 = vector.multi_reduction <add>, %189, %cst_54 [1] : vector<8x32xf32> to vector<8xf32>
    %191 = vector.shape_cast %190 : vector<8xf32> to vector<8x1xf32>
    %cst_55 = arith.constant 3.200000e+01 : f32
    %192 = vector.broadcast %cst_55 : f32 to vector<8x1xf32>
    %193 = arith.divf %191, %192 : vector<8x1xf32>
    %194 = vector.broadcast %193 : vector<8x1xf32> to vector<8x32xf32>
    %195 = arith.subf %189, %194 : vector<8x32xf32>
    %196 = arith.mulf %195, %195 : vector<8x32xf32>
    %cst_56 = arith.constant dense<0.000000e+00> : vector<8xf32>
    %197 = vector.multi_reduction <add>, %196, %cst_56 [1] : vector<8x32xf32> to vector<8xf32>
    %198 = vector.shape_cast %197 : vector<8xf32> to vector<8x1xf32>
    %cst_57 = arith.constant 3.200000e+01 : f32
    %199 = vector.broadcast %cst_57 : f32 to vector<8x1xf32>
    %200 = arith.divf %198, %199 : vector<8x1xf32>
    %cst_58 = arith.constant 9.99999974E-6 : f32
    %201 = vector.broadcast %cst_58 : f32 to vector<8x1xf32>
    %202 = arith.addf %200, %201 : vector<8x1xf32>
    %203 = math.rsqrt %202 : vector<8x1xf32>
    %204 = vector.broadcast %203 : vector<8x1xf32> to vector<8x32xf32>
    %205 = arith.mulf %195, %204 : vector<8x32xf32>
    %c0_59 = arith.constant 0 : index
    %c0_60 = arith.constant 0 : index
    %206 = vector.load %arg7[%c0_59, %c0_60] : memref<1x32xf32, #tpu.memory_space<vmem>>, vector<1x32xf32>
    %207 = vector.broadcast %206 : vector<1x32xf32> to vector<8x32xf32>
    %208 = arith.mulf %205, %207 : vector<8x32xf32>
    %c0_61 = arith.constant 0 : index
    %c0_62 = arith.constant 0 : index
    %209 = vector.load %arg8[%c0_61, %c0_62] : memref<1x32xf32, #tpu.memory_space<vmem>>, vector<1x32xf32>
    %210 = vector.broadcast %209 : vector<1x32xf32> to vector<8x32xf32>
    %211 = arith.addf %208, %210 : vector<8x32xf32>
    %c0_63 = arith.constant 0 : index
    %c0_64 = arith.constant 0 : index
    %c0_65 = arith.constant 0 : index
    %212 = vector.load %arg9[%c0_63, %c0_64, %c0_65] : memref<1x8x32xf32, #tpu.memory_space<vmem>>, vector<1x8x32xf32>
    %213 = vector.shape_cast %212 : vector<1x8x32xf32> to vector<8x32xf32>
    %214 = vector.shape_cast %211 : vector<8x32xf32> to vector<1x8x32xf32>
    tpu.vector_store %arg9[%c0_63, %c0_64, %c0_65], %214 {strides = array<i32>} : memref<1x8x32xf32, #tpu.memory_space<vmem>>, vector<1x8x32xf32>,
    return
  }
  func.func @transform_0(%arg0: i32) -> (i32, i32, i32) {
    %c0_i32 = arith.constant 0 : i32
    %c0_i32_0 = arith.constant 0 : i32
    %c0_i32_1 = arith.constant 0 : i32
    return %arg0, %c0_i32, %c0_i32_0 : i32, i32, i32
  }
  func.func @transform_1(%arg0: i32) -> (i32, i32, i32) {
    %c0_i32 = arith.constant 0 : i32
    %c0_i32_0 = arith.constant 0 : i32
    %c0_i32_1 = arith.constant 0 : i32
    %c0_i32_2 = arith.constant 0 : i32
    return %c0_i32, %c0_i32_0, %c0_i32_1 : i32, i32, i32
  }
  func.func @transform_2(%arg0: i32) -> (i32, i32) {
    %c0_i32 = arith.constant 0 : i32
    %c0_i32_0 = arith.constant 0 : i32
    %c0_i32_1 = arith.constant 0 : i32
    return %c0_i32, %c0_i32_0 : i32, i32
  }
  func.func @transform_3(%arg0: i32) -> (i32, i32) {
    %c0_i32 = arith.constant 0 : i32
    %c0_i32_0 = arith.constant 0 : i32
    %c0_i32_1 = arith.constant 0 : i32
    return %c0_i32, %c0_i32_0 : i32, i32
  }
  func.func @transform_4(%arg0: i32) -> (i32, i32) {
    %c0_i32 = arith.constant 0 : i32
    %c0_i32_0 = arith.constant 0 : i32
    %c0_i32_1 = arith.constant 0 : i32
    return %c0_i32, %c0_i32_0 : i32, i32
  }
  func.func @transform_5(%arg0: i32) -> (i32, i32) {
    %c0_i32 = arith.constant 0 : i32
    %c0_i32_0 = arith.constant 0 : i32
    %c0_i32_1 = arith.constant 0 : i32
    return %c0_i32, %c0_i32_0 : i32, i32
  }
  func.func @transform_6(%arg0: i32) -> (i32, i32) {
    %c0_i32 = arith.constant 0 : i32
    %c0_i32_0 = arith.constant 0 : i32
    %c0_i32_1 = arith.constant 0 : i32
    return %c0_i32, %c0_i32_0 : i32, i32
  }
  func.func @transform_7(%arg0: i32) -> (i32, i32) {
    %c0_i32 = arith.constant 0 : i32
    %c0_i32_0 = arith.constant 0 : i32
    %c0_i32_1 = arith.constant 0 : i32
    return %c0_i32, %c0_i32_0 : i32, i32
  }
  func.func @transform_8(%arg0: i32) -> (i32, i32, i32) {
    %c0_i32 = arith.constant 0 : i32
    %c0_i32_0 = arith.constant 0 : i32
    %c0_i32_1 = arith.constant 0 : i32
    return %arg0, %c0_i32, %c0_i32_0 : i32, i32, i32
  }
}

module attributes {stable_mosaic.version = 11 : i64} {
  func.func @_attn_block_kernel(%arg0: i32, %arg1: memref<1x8x32xf32, #tpu.memory_space<vmem>>, %arg2: memref<32x96xbf16, #tpu.memory_space<vmem>>, %arg3: memref<1x96xf32, #tpu.memory_space<vmem>>, %arg4: memref<32x32xbf16, #tpu.memory_space<vmem>>, %arg5: memref<1x32xf32, #tpu.memory_space<vmem>>, %arg6: memref<1x32xf32, #tpu.memory_space<vmem>>, %arg7: memref<1x32xf32, #tpu.memory_space<vmem>>, %arg8: memref<1x8x32xf32, #tpu.memory_space<vmem>>) attributes {dimension_semantics = [#tpu.dimension_semantics<parallel>], iteration_bounds = array<i64: 2>, scalar_prefetch = 0 : i64, scratch_operands = 0 : i64, tpu.core_type = #tpu.core_type<tc>, window_params = [{transform_indices = @transform_0, window_bounds = array<i64: 1, 8, 32>}, {pipeline_mode = #tpu.pipeline_mode<synchronous>, transform_indices = @transform_1, window_bounds = array<i64: 32, 96>}, {pipeline_mode = #tpu.pipeline_mode<synchronous>, transform_indices = @transform_2, window_bounds = array<i64: 1, 96>}, {pipeline_mode = #tpu.pipeline_mode<synchronous>, transform_indices = @transform_3, window_bounds = array<i64: 32, 32>}, {pipeline_mode = #tpu.pipeline_mode<synchronous>, transform_indices = @transform_4, window_bounds = array<i64: 1, 32>}, {pipeline_mode = #tpu.pipeline_mode<synchronous>, transform_indices = @transform_5, window_bounds = array<i64: 1, 32>}, {pipeline_mode = #tpu.pipeline_mode<synchronous>, transform_indices = @transform_6, window_bounds = array<i64: 1, 32>}, {transform_indices = @transform_7, window_bounds = array<i64: 1, 8, 32>}]} {
    %c0 = arith.constant 0 : index
    %c0_0 = arith.constant 0 : index
    %c0_1 = arith.constant 0 : index
    %0 = vector.load %arg1[%c0, %c0_0, %c0_1] : memref<1x8x32xf32, #tpu.memory_space<vmem>>, vector<1x8x32xf32>
    %1 = vector.shape_cast %0 : vector<1x8x32xf32> to vector<8x32xf32>
    %2 = arith.truncf %1 : vector<8x32xf32> to vector<8x32xbf16>
    %c0_2 = arith.constant 0 : index
    %c0_3 = arith.constant 0 : index
    %3 = vector.load %arg2[%c0_2, %c0_3] : memref<32x96xbf16, #tpu.memory_space<vmem>>, vector<32x96xbf16>
    %cst = arith.constant dense<0.000000e+00> : vector<8x96xf32>
    %4 = tpu.matmul %2, %3, %cst {dimension_numbers = #tpu.dot_dimension_numbers<[1], [0], [0], [1], [0, 0, 1, 1], [], []>} : vector<8x32xbf16>, vector<32x96xbf16>, vector<8x96xf32> -> vector<8x96xf32>
    %c0_4 = arith.constant 0 : index
    %c0_5 = arith.constant 0 : index
    %5 = vector.load %arg3[%c0_4, %c0_5] : memref<1x96xf32, #tpu.memory_space<vmem>>, vector<1x96xf32>
    %6 = vector.broadcast %5 : vector<1x96xf32> to vector<8x96xf32>
    %7 = arith.addf %4, %6 : vector<8x96xf32>
    %8 = vector.extract_strided_slice %7 {offsets = [0, 0], sizes = [8, 32], strides = [1, 1]} : vector<8x96xf32> to vector<8x32xf32>
    %9 = vector.extract_strided_slice %7 {offsets = [0, 32], sizes = [8, 32], strides = [1, 1]} : vector<8x96xf32> to vector<8x32xf32>
    %10 = vector.extract_strided_slice %7 {offsets = [0, 64], sizes = [8, 32], strides = [1, 1]} : vector<8x96xf32> to vector<8x32xf32>
    %11 = vector.extract_strided_slice %8 {offsets = [0, 0], sizes = [8, 4], strides = [1, 1]} : vector<8x32xf32> to vector<8x4xf32>
    %12 = arith.truncf %11 : vector<8x4xf32> to vector<8x4xbf16>
    %13 = vector.extract_strided_slice %9 {offsets = [0, 0], sizes = [8, 4], strides = [1, 1]} : vector<8x32xf32> to vector<8x4xf32>
    %14 = arith.truncf %13 : vector<8x4xf32> to vector<8x4xbf16>
    %15 = vector.extract_strided_slice %10 {offsets = [0, 0], sizes = [8, 4], strides = [1, 1]} : vector<8x32xf32> to vector<8x4xf32>
    %16 = arith.truncf %15 : vector<8x4xf32> to vector<8x4xbf16>
    %cst_6 = arith.constant dense<0.000000e+00> : vector<8x8xf32>
    %17 = tpu.matmul %12, %14, %cst_6 {dimension_numbers = #tpu.dot_dimension_numbers<[1], [1], [0], [0], [0, 0, 1, 0], [], []>} : vector<8x4xbf16>, vector<8x4xbf16>, vector<8x8xf32> -> vector<8x8xf32>
    %cst_7 = arith.constant 5.000000e-01 : f32
    %18 = vector.broadcast %cst_7 : f32 to vector<8x8xf32>
    %19 = arith.mulf %17, %18 : vector<8x8xf32>
    %cst_8 = arith.constant dense<0xFF800000> : vector<8xf32>
    %20 = vector.multi_reduction <maximumf>, %19, %cst_8 [1] : vector<8x8xf32> to vector<8xf32>
    %21 = vector.shape_cast %20 : vector<8xf32> to vector<8x1xf32>
    %22 = vector.broadcast %21 : vector<8x1xf32> to vector<8x8xf32>
    %23 = arith.subf %19, %22 : vector<8x8xf32>
    %24 = math.exp %23 : vector<8x8xf32>
    %cst_9 = arith.constant dense<0.000000e+00> : vector<8xf32>
    %25 = vector.multi_reduction <add>, %24, %cst_9 [1] : vector<8x8xf32> to vector<8xf32>
    %26 = vector.shape_cast %25 : vector<8xf32> to vector<8x1xf32>
    %27 = tpu.reciprocal %26 {approx = true} : vector<8x1xf32> -> vector<8x1xf32>
    %28 = vector.broadcast %27 : vector<8x1xf32> to vector<8x8xf32>
    %29 = arith.mulf %24, %28 : vector<8x8xf32>
    %30 = arith.truncf %29 : vector<8x8xf32> to vector<8x8xbf16>
    %cst_10 = arith.constant dense<0.000000e+00> : vector<8x4xf32>
    %31 = tpu.matmul %30, %16, %cst_10 {dimension_numbers = #tpu.dot_dimension_numbers<[1], [0], [0], [1], [0, 0, 1, 1], [], []>} : vector<8x8xbf16>, vector<8x4xbf16>, vector<8x4xf32> -> vector<8x4xf32>
    %32 = vector.extract_strided_slice %8 {offsets = [0, 4], sizes = [8, 4], strides = [1, 1]} : vector<8x32xf32> to vector<8x4xf32>
    %33 = arith.truncf %32 : vector<8x4xf32> to vector<8x4xbf16>
    %34 = vector.extract_strided_slice %9 {offsets = [0, 4], sizes = [8, 4], strides = [1, 1]} : vector<8x32xf32> to vector<8x4xf32>
    %35 = arith.truncf %34 : vector<8x4xf32> to vector<8x4xbf16>
    %36 = vector.extract_strided_slice %10 {offsets = [0, 4], sizes = [8, 4], strides = [1, 1]} : vector<8x32xf32> to vector<8x4xf32>
    %37 = arith.truncf %36 : vector<8x4xf32> to vector<8x4xbf16>
    %cst_11 = arith.constant dense<0.000000e+00> : vector<8x8xf32>
    %38 = tpu.matmul %33, %35, %cst_11 {dimension_numbers = #tpu.dot_dimension_numbers<[1], [1], [0], [0], [0, 0, 1, 0], [], []>} : vector<8x4xbf16>, vector<8x4xbf16>, vector<8x8xf32> -> vector<8x8xf32>
    %cst_12 = arith.constant 5.000000e-01 : f32
    %39 = vector.broadcast %cst_12 : f32 to vector<8x8xf32>
    %40 = arith.mulf %38, %39 : vector<8x8xf32>
    %cst_13 = arith.constant dense<0xFF800000> : vector<8xf32>
    %41 = vector.multi_reduction <maximumf>, %40, %cst_13 [1] : vector<8x8xf32> to vector<8xf32>
    %42 = vector.shape_cast %41 : vector<8xf32> to vector<8x1xf32>
    %43 = vector.broadcast %42 : vector<8x1xf32> to vector<8x8xf32>
    %44 = arith.subf %40, %43 : vector<8x8xf32>
    %45 = math.exp %44 : vector<8x8xf32>
    %cst_14 = arith.constant dense<0.000000e+00> : vector<8xf32>
    %46 = vector.multi_reduction <add>, %45, %cst_14 [1] : vector<8x8xf32> to vector<8xf32>
    %47 = vector.shape_cast %46 : vector<8xf32> to vector<8x1xf32>
    %48 = tpu.reciprocal %47 {approx = true} : vector<8x1xf32> -> vector<8x1xf32>
    %49 = vector.broadcast %48 : vector<8x1xf32> to vector<8x8xf32>
    %50 = arith.mulf %45, %49 : vector<8x8xf32>
    %51 = arith.truncf %50 : vector<8x8xf32> to vector<8x8xbf16>
    %cst_15 = arith.constant dense<0.000000e+00> : vector<8x4xf32>
    %52 = tpu.matmul %51, %37, %cst_15 {dimension_numbers = #tpu.dot_dimension_numbers<[1], [0], [0], [1], [0, 0, 1, 1], [], []>} : vector<8x8xbf16>, vector<8x4xbf16>, vector<8x4xf32> -> vector<8x4xf32>
    %53 = vector.extract_strided_slice %8 {offsets = [0, 8], sizes = [8, 4], strides = [1, 1]} : vector<8x32xf32> to vector<8x4xf32>
    %54 = arith.truncf %53 : vector<8x4xf32> to vector<8x4xbf16>
    %55 = vector.extract_strided_slice %9 {offsets = [0, 8], sizes = [8, 4], strides = [1, 1]} : vector<8x32xf32> to vector<8x4xf32>
    %56 = arith.truncf %55 : vector<8x4xf32> to vector<8x4xbf16>
    %57 = vector.extract_strided_slice %10 {offsets = [0, 8], sizes = [8, 4], strides = [1, 1]} : vector<8x32xf32> to vector<8x4xf32>
    %58 = arith.truncf %57 : vector<8x4xf32> to vector<8x4xbf16>
    %cst_16 = arith.constant dense<0.000000e+00> : vector<8x8xf32>
    %59 = tpu.matmul %54, %56, %cst_16 {dimension_numbers = #tpu.dot_dimension_numbers<[1], [1], [0], [0], [0, 0, 1, 0], [], []>} : vector<8x4xbf16>, vector<8x4xbf16>, vector<8x8xf32> -> vector<8x8xf32>
    %cst_17 = arith.constant 5.000000e-01 : f32
    %60 = vector.broadcast %cst_17 : f32 to vector<8x8xf32>
    %61 = arith.mulf %59, %60 : vector<8x8xf32>
    %cst_18 = arith.constant dense<0xFF800000> : vector<8xf32>
    %62 = vector.multi_reduction <maximumf>, %61, %cst_18 [1] : vector<8x8xf32> to vector<8xf32>
    %63 = vector.shape_cast %62 : vector<8xf32> to vector<8x1xf32>
    %64 = vector.broadcast %63 : vector<8x1xf32> to vector<8x8xf32>
    %65 = arith.subf %61, %64 : vector<8x8xf32>
    %66 = math.exp %65 : vector<8x8xf32>
    %cst_19 = arith.constant dense<0.000000e+00> : vector<8xf32>
    %67 = vector.multi_reduction <add>, %66, %cst_19 [1] : vector<8x8xf32> to vector<8xf32>
    %68 = vector.shape_cast %67 : vector<8xf32> to vector<8x1xf32>
    %69 = tpu.reciprocal %68 {approx = true} : vector<8x1xf32> -> vector<8x1xf32>
    %70 = vector.broadcast %69 : vector<8x1xf32> to vector<8x8xf32>
    %71 = arith.mulf %66, %70 : vector<8x8xf32>
    %72 = arith.truncf %71 : vector<8x8xf32> to vector<8x8xbf16>
    %cst_20 = arith.constant dense<0.000000e+00> : vector<8x4xf32>
    %73 = tpu.matmul %72, %58, %cst_20 {dimension_numbers = #tpu.dot_dimension_numbers<[1], [0], [0], [1], [0, 0, 1, 1], [], []>} : vector<8x8xbf16>, vector<8x4xbf16>, vector<8x4xf32> -> vector<8x4xf32>
    %74 = vector.extract_strided_slice %8 {offsets = [0, 12], sizes = [8, 4], strides = [1, 1]} : vector<8x32xf32> to vector<8x4xf32>
    %75 = arith.truncf %74 : vector<8x4xf32> to vector<8x4xbf16>
    %76 = vector.extract_strided_slice %9 {offsets = [0, 12], sizes = [8, 4], strides = [1, 1]} : vector<8x32xf32> to vector<8x4xf32>
    %77 = arith.truncf %76 : vector<8x4xf32> to vector<8x4xbf16>
    %78 = vector.extract_strided_slice %10 {offsets = [0, 12], sizes = [8, 4], strides = [1, 1]} : vector<8x32xf32> to vector<8x4xf32>
    %79 = arith.truncf %78 : vector<8x4xf32> to vector<8x4xbf16>
    %cst_21 = arith.constant dense<0.000000e+00> : vector<8x8xf32>
    %80 = tpu.matmul %75, %77, %cst_21 {dimension_numbers = #tpu.dot_dimension_numbers<[1], [1], [0], [0], [0, 0, 1, 0], [], []>} : vector<8x4xbf16>, vector<8x4xbf16>, vector<8x8xf32> -> vector<8x8xf32>
    %cst_22 = arith.constant 5.000000e-01 : f32
    %81 = vector.broadcast %cst_22 : f32 to vector<8x8xf32>
    %82 = arith.mulf %80, %81 : vector<8x8xf32>
    %cst_23 = arith.constant dense<0xFF800000> : vector<8xf32>
    %83 = vector.multi_reduction <maximumf>, %82, %cst_23 [1] : vector<8x8xf32> to vector<8xf32>
    %84 = vector.shape_cast %83 : vector<8xf32> to vector<8x1xf32>
    %85 = vector.broadcast %84 : vector<8x1xf32> to vector<8x8xf32>
    %86 = arith.subf %82, %85 : vector<8x8xf32>
    %87 = math.exp %86 : vector<8x8xf32>
    %cst_24 = arith.constant dense<0.000000e+00> : vector<8xf32>
    %88 = vector.multi_reduction <add>, %87, %cst_24 [1] : vector<8x8xf32> to vector<8xf32>
    %89 = vector.shape_cast %88 : vector<8xf32> to vector<8x1xf32>
    %90 = tpu.reciprocal %89 {approx = true} : vector<8x1xf32> -> vector<8x1xf32>
    %91 = vector.broadcast %90 : vector<8x1xf32> to vector<8x8xf32>
    %92 = arith.mulf %87, %91 : vector<8x8xf32>
    %93 = arith.truncf %92 : vector<8x8xf32> to vector<8x8xbf16>
    %cst_25 = arith.constant dense<0.000000e+00> : vector<8x4xf32>
    %94 = tpu.matmul %93, %79, %cst_25 {dimension_numbers = #tpu.dot_dimension_numbers<[1], [0], [0], [1], [0, 0, 1, 1], [], []>} : vector<8x8xbf16>, vector<8x4xbf16>, vector<8x4xf32> -> vector<8x4xf32>
    %95 = vector.extract_strided_slice %8 {offsets = [0, 16], sizes = [8, 4], strides = [1, 1]} : vector<8x32xf32> to vector<8x4xf32>
    %96 = arith.truncf %95 : vector<8x4xf32> to vector<8x4xbf16>
    %97 = vector.extract_strided_slice %9 {offsets = [0, 16], sizes = [8, 4], strides = [1, 1]} : vector<8x32xf32> to vector<8x4xf32>
    %98 = arith.truncf %97 : vector<8x4xf32> to vector<8x4xbf16>
    %99 = vector.extract_strided_slice %10 {offsets = [0, 16], sizes = [8, 4], strides = [1, 1]} : vector<8x32xf32> to vector<8x4xf32>
    %100 = arith.truncf %99 : vector<8x4xf32> to vector<8x4xbf16>
    %cst_26 = arith.constant dense<0.000000e+00> : vector<8x8xf32>
    %101 = tpu.matmul %96, %98, %cst_26 {dimension_numbers = #tpu.dot_dimension_numbers<[1], [1], [0], [0], [0, 0, 1, 0], [], []>} : vector<8x4xbf16>, vector<8x4xbf16>, vector<8x8xf32> -> vector<8x8xf32>
    %cst_27 = arith.constant 5.000000e-01 : f32
    %102 = vector.broadcast %cst_27 : f32 to vector<8x8xf32>
    %103 = arith.mulf %101, %102 : vector<8x8xf32>
    %cst_28 = arith.constant dense<0xFF800000> : vector<8xf32>
    %104 = vector.multi_reduction <maximumf>, %103, %cst_28 [1] : vector<8x8xf32> to vector<8xf32>
    %105 = vector.shape_cast %104 : vector<8xf32> to vector<8x1xf32>
    %106 = vector.broadcast %105 : vector<8x1xf32> to vector<8x8xf32>
    %107 = arith.subf %103, %106 : vector<8x8xf32>
    %108 = math.exp %107 : vector<8x8xf32>
    %cst_29 = arith.constant dense<0.000000e+00> : vector<8xf32>
    %109 = vector.multi_reduction <add>, %108, %cst_29 [1] : vector<8x8xf32> to vector<8xf32>
    %110 = vector.shape_cast %109 : vector<8xf32> to vector<8x1xf32>
    %111 = tpu.reciprocal %110 {approx = true} : vector<8x1xf32> -> vector<8x1xf32>
    %112 = vector.broadcast %111 : vector<8x1xf32> to vector<8x8xf32>
    %113 = arith.mulf %108, %112 : vector<8x8xf32>
    %114 = arith.truncf %113 : vector<8x8xf32> to vector<8x8xbf16>
    %cst_30 = arith.constant dense<0.000000e+00> : vector<8x4xf32>
    %115 = tpu.matmul %114, %100, %cst_30 {dimension_numbers = #tpu.dot_dimension_numbers<[1], [0], [0], [1], [0, 0, 1, 1], [], []>} : vector<8x8xbf16>, vector<8x4xbf16>, vector<8x4xf32> -> vector<8x4xf32>
    %116 = vector.extract_strided_slice %8 {offsets = [0, 20], sizes = [8, 4], strides = [1, 1]} : vector<8x32xf32> to vector<8x4xf32>
    %117 = arith.truncf %116 : vector<8x4xf32> to vector<8x4xbf16>
    %118 = vector.extract_strided_slice %9 {offsets = [0, 20], sizes = [8, 4], strides = [1, 1]} : vector<8x32xf32> to vector<8x4xf32>
    %119 = arith.truncf %118 : vector<8x4xf32> to vector<8x4xbf16>
    %120 = vector.extract_strided_slice %10 {offsets = [0, 20], sizes = [8, 4], strides = [1, 1]} : vector<8x32xf32> to vector<8x4xf32>
    %121 = arith.truncf %120 : vector<8x4xf32> to vector<8x4xbf16>
    %cst_31 = arith.constant dense<0.000000e+00> : vector<8x8xf32>
    %122 = tpu.matmul %117, %119, %cst_31 {dimension_numbers = #tpu.dot_dimension_numbers<[1], [1], [0], [0], [0, 0, 1, 0], [], []>} : vector<8x4xbf16>, vector<8x4xbf16>, vector<8x8xf32> -> vector<8x8xf32>
    %cst_32 = arith.constant 5.000000e-01 : f32
    %123 = vector.broadcast %cst_32 : f32 to vector<8x8xf32>
    %124 = arith.mulf %122, %123 : vector<8x8xf32>
    %cst_33 = arith.constant dense<0xFF800000> : vector<8xf32>
    %125 = vector.multi_reduction <maximumf>, %124, %cst_33 [1] : vector<8x8xf32> to vector<8xf32>
    %126 = vector.shape_cast %125 : vector<8xf32> to vector<8x1xf32>
    %127 = vector.broadcast %126 : vector<8x1xf32> to vector<8x8xf32>
    %128 = arith.subf %124, %127 : vector<8x8xf32>
    %129 = math.exp %128 : vector<8x8xf32>
    %cst_34 = arith.constant dense<0.000000e+00> : vector<8xf32>
    %130 = vector.multi_reduction <add>, %129, %cst_34 [1] : vector<8x8xf32> to vector<8xf32>
    %131 = vector.shape_cast %130 : vector<8xf32> to vector<8x1xf32>
    %132 = tpu.reciprocal %131 {approx = true} : vector<8x1xf32> -> vector<8x1xf32>
    %133 = vector.broadcast %132 : vector<8x1xf32> to vector<8x8xf32>
    %134 = arith.mulf %129, %133 : vector<8x8xf32>
    %135 = arith.truncf %134 : vector<8x8xf32> to vector<8x8xbf16>
    %cst_35 = arith.constant dense<0.000000e+00> : vector<8x4xf32>
    %136 = tpu.matmul %135, %121, %cst_35 {dimension_numbers = #tpu.dot_dimension_numbers<[1], [0], [0], [1], [0, 0, 1, 1], [], []>} : vector<8x8xbf16>, vector<8x4xbf16>, vector<8x4xf32> -> vector<8x4xf32>
    %137 = vector.extract_strided_slice %8 {offsets = [0, 24], sizes = [8, 4], strides = [1, 1]} : vector<8x32xf32> to vector<8x4xf32>
    %138 = arith.truncf %137 : vector<8x4xf32> to vector<8x4xbf16>
    %139 = vector.extract_strided_slice %9 {offsets = [0, 24], sizes = [8, 4], strides = [1, 1]} : vector<8x32xf32> to vector<8x4xf32>
    %140 = arith.truncf %139 : vector<8x4xf32> to vector<8x4xbf16>
    %141 = vector.extract_strided_slice %10 {offsets = [0, 24], sizes = [8, 4], strides = [1, 1]} : vector<8x32xf32> to vector<8x4xf32>
    %142 = arith.truncf %141 : vector<8x4xf32> to vector<8x4xbf16>
    %cst_36 = arith.constant dense<0.000000e+00> : vector<8x8xf32>
    %143 = tpu.matmul %138, %140, %cst_36 {dimension_numbers = #tpu.dot_dimension_numbers<[1], [1], [0], [0], [0, 0, 1, 0], [], []>} : vector<8x4xbf16>, vector<8x4xbf16>, vector<8x8xf32> -> vector<8x8xf32>
    %cst_37 = arith.constant 5.000000e-01 : f32
    %144 = vector.broadcast %cst_37 : f32 to vector<8x8xf32>
    %145 = arith.mulf %143, %144 : vector<8x8xf32>
    %cst_38 = arith.constant dense<0xFF800000> : vector<8xf32>
    %146 = vector.multi_reduction <maximumf>, %145, %cst_38 [1] : vector<8x8xf32> to vector<8xf32>
    %147 = vector.shape_cast %146 : vector<8xf32> to vector<8x1xf32>
    %148 = vector.broadcast %147 : vector<8x1xf32> to vector<8x8xf32>
    %149 = arith.subf %145, %148 : vector<8x8xf32>
    %150 = math.exp %149 : vector<8x8xf32>
    %cst_39 = arith.constant dense<0.000000e+00> : vector<8xf32>
    %151 = vector.multi_reduction <add>, %150, %cst_39 [1] : vector<8x8xf32> to vector<8xf32>
    %152 = vector.shape_cast %151 : vector<8xf32> to vector<8x1xf32>
    %153 = tpu.reciprocal %152 {approx = true} : vector<8x1xf32> -> vector<8x1xf32>
    %154 = vector.broadcast %153 : vector<8x1xf32> to vector<8x8xf32>
    %155 = arith.mulf %150, %154 : vector<8x8xf32>
    %156 = arith.truncf %155 : vector<8x8xf32> to vector<8x8xbf16>
    %cst_40 = arith.constant dense<0.000000e+00> : vector<8x4xf32>
    %157 = tpu.matmul %156, %142, %cst_40 {dimension_numbers = #tpu.dot_dimension_numbers<[1], [0], [0], [1], [0, 0, 1, 1], [], []>} : vector<8x8xbf16>, vector<8x4xbf16>, vector<8x4xf32> -> vector<8x4xf32>
    %158 = vector.extract_strided_slice %8 {offsets = [0, 28], sizes = [8, 4], strides = [1, 1]} : vector<8x32xf32> to vector<8x4xf32>
    %159 = arith.truncf %158 : vector<8x4xf32> to vector<8x4xbf16>
    %160 = vector.extract_strided_slice %9 {offsets = [0, 28], sizes = [8, 4], strides = [1, 1]} : vector<8x32xf32> to vector<8x4xf32>
    %161 = arith.truncf %160 : vector<8x4xf32> to vector<8x4xbf16>
    %162 = vector.extract_strided_slice %10 {offsets = [0, 28], sizes = [8, 4], strides = [1, 1]} : vector<8x32xf32> to vector<8x4xf32>
    %163 = arith.truncf %162 : vector<8x4xf32> to vector<8x4xbf16>
    %cst_41 = arith.constant dense<0.000000e+00> : vector<8x8xf32>
    %164 = tpu.matmul %159, %161, %cst_41 {dimension_numbers = #tpu.dot_dimension_numbers<[1], [1], [0], [0], [0, 0, 1, 0], [], []>} : vector<8x4xbf16>, vector<8x4xbf16>, vector<8x8xf32> -> vector<8x8xf32>
    %cst_42 = arith.constant 5.000000e-01 : f32
    %165 = vector.broadcast %cst_42 : f32 to vector<8x8xf32>
    %166 = arith.mulf %164, %165 : vector<8x8xf32>
    %cst_43 = arith.constant dense<0xFF800000> : vector<8xf32>
    %167 = vector.multi_reduction <maximumf>, %166, %cst_43 [1] : vector<8x8xf32> to vector<8xf32>
    %168 = vector.shape_cast %167 : vector<8xf32> to vector<8x1xf32>
    %169 = vector.broadcast %168 : vector<8x1xf32> to vector<8x8xf32>
    %170 = arith.subf %166, %169 : vector<8x8xf32>
    %171 = math.exp %170 : vector<8x8xf32>
    %cst_44 = arith.constant dense<0.000000e+00> : vector<8xf32>
    %172 = vector.multi_reduction <add>, %171, %cst_44 [1] : vector<8x8xf32> to vector<8xf32>
    %173 = vector.shape_cast %172 : vector<8xf32> to vector<8x1xf32>
    %174 = tpu.reciprocal %173 {approx = true} : vector<8x1xf32> -> vector<8x1xf32>
    %175 = vector.broadcast %174 : vector<8x1xf32> to vector<8x8xf32>
    %176 = arith.mulf %171, %175 : vector<8x8xf32>
    %177 = arith.truncf %176 : vector<8x8xf32> to vector<8x8xbf16>
    %cst_45 = arith.constant dense<0.000000e+00> : vector<8x4xf32>
    %178 = tpu.matmul %177, %163, %cst_45 {dimension_numbers = #tpu.dot_dimension_numbers<[1], [0], [0], [1], [0, 0, 1, 1], [], []>} : vector<8x8xbf16>, vector<8x4xbf16>, vector<8x4xf32> -> vector<8x4xf32>
    %179 = tpu.concatenate %31, %52, %73, %94, %115, %136, %157, %178 in 1 : vector<8x4xf32>, vector<8x4xf32>, vector<8x4xf32>, vector<8x4xf32>, vector<8x4xf32>, vector<8x4xf32>, vector<8x4xf32>, vector<8x4xf32> -> vector<8x32xf32>
    %180 = arith.truncf %179 : vector<8x32xf32> to vector<8x32xbf16>
    %c0_46 = arith.constant 0 : index
    %c0_47 = arith.constant 0 : index
    %181 = vector.load %arg4[%c0_46, %c0_47] : memref<32x32xbf16, #tpu.memory_space<vmem>>, vector<32x32xbf16>
    %cst_48 = arith.constant dense<0.000000e+00> : vector<8x32xf32>
    %182 = tpu.matmul %180, %181, %cst_48 {dimension_numbers = #tpu.dot_dimension_numbers<[1], [0], [0], [1], [0, 0, 1, 1], [], []>} : vector<8x32xbf16>, vector<32x32xbf16>, vector<8x32xf32> -> vector<8x32xf32>
    %c0_49 = arith.constant 0 : index
    %c0_50 = arith.constant 0 : index
    %183 = vector.load %arg5[%c0_49, %c0_50] : memref<1x32xf32, #tpu.memory_space<vmem>>, vector<1x32xf32>
    %184 = vector.broadcast %183 : vector<1x32xf32> to vector<8x32xf32>
    %185 = arith.addf %182, %184 : vector<8x32xf32>
    %186 = arith.addf %1, %185 : vector<8x32xf32>
    %cst_51 = arith.constant dense<0.000000e+00> : vector<8xf32>
    %187 = vector.multi_reduction <add>, %186, %cst_51 [1] : vector<8x32xf32> to vector<8xf32>
    %188 = vector.shape_cast %187 : vector<8xf32> to vector<8x1xf32>
    %cst_52 = arith.constant 3.200000e+01 : f32
    %189 = vector.broadcast %cst_52 : f32 to vector<8x1xf32>
    %190 = arith.divf %188, %189 : vector<8x1xf32>
    %191 = vector.broadcast %190 : vector<8x1xf32> to vector<8x32xf32>
    %192 = arith.subf %186, %191 : vector<8x32xf32>
    %193 = arith.mulf %192, %192 : vector<8x32xf32>
    %cst_53 = arith.constant dense<0.000000e+00> : vector<8xf32>
    %194 = vector.multi_reduction <add>, %193, %cst_53 [1] : vector<8x32xf32> to vector<8xf32>
    %195 = vector.shape_cast %194 : vector<8xf32> to vector<8x1xf32>
    %cst_54 = arith.constant 3.200000e+01 : f32
    %196 = vector.broadcast %cst_54 : f32 to vector<8x1xf32>
    %197 = arith.divf %195, %196 : vector<8x1xf32>
    %cst_55 = arith.constant 9.99999974E-6 : f32
    %198 = vector.broadcast %cst_55 : f32 to vector<8x1xf32>
    %199 = arith.addf %197, %198 : vector<8x1xf32>
    %200 = math.rsqrt %199 : vector<8x1xf32>
    %201 = vector.broadcast %200 : vector<8x1xf32> to vector<8x32xf32>
    %202 = arith.mulf %192, %201 : vector<8x32xf32>
    %c0_56 = arith.constant 0 : index
    %c0_57 = arith.constant 0 : index
    %203 = vector.load %arg6[%c0_56, %c0_57] : memref<1x32xf32, #tpu.memory_space<vmem>>, vector<1x32xf32>
    %204 = vector.broadcast %203 : vector<1x32xf32> to vector<8x32xf32>
    %205 = arith.mulf %202, %204 : vector<8x32xf32>
    %c0_58 = arith.constant 0 : index
    %c0_59 = arith.constant 0 : index
    %206 = vector.load %arg7[%c0_58, %c0_59] : memref<1x32xf32, #tpu.memory_space<vmem>>, vector<1x32xf32>
    %207 = vector.broadcast %206 : vector<1x32xf32> to vector<8x32xf32>
    %208 = arith.addf %205, %207 : vector<8x32xf32>
    %c0_60 = arith.constant 0 : index
    %c0_61 = arith.constant 0 : index
    %c0_62 = arith.constant 0 : index
    %209 = vector.load %arg8[%c0_60, %c0_61, %c0_62] : memref<1x8x32xf32, #tpu.memory_space<vmem>>, vector<1x8x32xf32>
    %210 = vector.shape_cast %209 : vector<1x8x32xf32> to vector<8x32xf32>
    %211 = vector.shape_cast %208 : vector<8x32xf32> to vector<1x8x32xf32>
    tpu.vector_store %arg8[%c0_60, %c0_61, %c0_62], %211 {strides = array<i32>} : memref<1x8x32xf32, #tpu.memory_space<vmem>>, vector<1x8x32xf32>,
    return
  }
  func.func @transform_0(%arg0: i32) -> (i32, i32, i32) {
    %c0_i32 = arith.constant 0 : i32
    %c0_i32_0 = arith.constant 0 : i32
    %c0_i32_1 = arith.constant 0 : i32
    return %arg0, %c0_i32, %c0_i32_0 : i32, i32, i32
  }
  func.func @transform_1(%arg0: i32) -> (i32, i32) {
    %c0_i32 = arith.constant 0 : i32
    %c0_i32_0 = arith.constant 0 : i32
    %c0_i32_1 = arith.constant 0 : i32
    return %c0_i32, %c0_i32_0 : i32, i32
  }
  func.func @transform_2(%arg0: i32) -> (i32, i32) {
    %c0_i32 = arith.constant 0 : i32
    %c0_i32_0 = arith.constant 0 : i32
    %c0_i32_1 = arith.constant 0 : i32
    return %c0_i32, %c0_i32_0 : i32, i32
  }
  func.func @transform_3(%arg0: i32) -> (i32, i32) {
    %c0_i32 = arith.constant 0 : i32
    %c0_i32_0 = arith.constant 0 : i32
    %c0_i32_1 = arith.constant 0 : i32
    return %c0_i32, %c0_i32_0 : i32, i32
  }
  func.func @transform_4(%arg0: i32) -> (i32, i32) {
    %c0_i32 = arith.constant 0 : i32
    %c0_i32_0 = arith.constant 0 : i32
    %c0_i32_1 = arith.constant 0 : i32
    return %c0_i32, %c0_i32_0 : i32, i32
  }
  func.func @transform_5(%arg0: i32) -> (i32, i32) {
    %c0_i32 = arith.constant 0 : i32
    %c0_i32_0 = arith.constant 0 : i32
    %c0_i32_1 = arith.constant 0 : i32
    return %c0_i32, %c0_i32_0 : i32, i32
  }
  func.func @transform_6(%arg0: i32) -> (i32, i32) {
    %c0_i32 = arith.constant 0 : i32
    %c0_i32_0 = arith.constant 0 : i32
    %c0_i32_1 = arith.constant 0 : i32
    return %c0_i32, %c0_i32_0 : i32, i32
  }
  func.func @transform_7(%arg0: i32) -> (i32, i32, i32) {
    %c0_i32 = arith.constant 0 : i32
    %c0_i32_0 = arith.constant 0 : i32
    %c0_i32_1 = arith.constant 0 : i32
    return %arg0, %c0_i32, %c0_i32_0 : i32, i32, i32
  }
}

module attributes {stable_mosaic.version = 11 : i64} {
  func.func @_ffn_block_kernel(%arg0: i32, %arg1: memref<16x32xf32, #tpu.memory_space<vmem>>, %arg2: memref<32x2048xbf16, #tpu.memory_space<vmem>>, %arg3: memref<1x2048xf32, #tpu.memory_space<vmem>>, %arg4: memref<2048x32xbf16, #tpu.memory_space<vmem>>, %arg5: memref<1x32xf32, #tpu.memory_space<vmem>>, %arg6: memref<1x32xf32, #tpu.memory_space<vmem>>, %arg7: memref<1x32xf32, #tpu.memory_space<vmem>>, %arg8: memref<16x32xf32, #tpu.memory_space<vmem>>) attributes {dimension_semantics = [#tpu.dimension_semantics<parallel>], iteration_bounds = array<i64: 1>, scalar_prefetch = 0 : i64, scratch_operands = 0 : i64, tpu.core_type = #tpu.core_type<tc>, window_params = [{transform_indices = @transform_0, window_bounds = array<i64: 16, 32>}, {pipeline_mode = #tpu.pipeline_mode<synchronous>, transform_indices = @transform_1, window_bounds = array<i64: 32, 2048>}, {pipeline_mode = #tpu.pipeline_mode<synchronous>, transform_indices = @transform_2, window_bounds = array<i64: 1, 2048>}, {pipeline_mode = #tpu.pipeline_mode<synchronous>, transform_indices = @transform_3, window_bounds = array<i64: 2048, 32>}, {pipeline_mode = #tpu.pipeline_mode<synchronous>, transform_indices = @transform_4, window_bounds = array<i64: 1, 32>}, {pipeline_mode = #tpu.pipeline_mode<synchronous>, transform_indices = @transform_5, window_bounds = array<i64: 1, 32>}, {pipeline_mode = #tpu.pipeline_mode<synchronous>, transform_indices = @transform_6, window_bounds = array<i64: 1, 32>}, {transform_indices = @transform_7, window_bounds = array<i64: 16, 32>}]} {
    %c0 = arith.constant 0 : index
    %c0_0 = arith.constant 0 : index
    %0 = vector.load %arg1[%c0, %c0_0] : memref<16x32xf32, #tpu.memory_space<vmem>>, vector<16x32xf32>
    %1 = arith.truncf %0 : vector<16x32xf32> to vector<16x32xbf16>
    %c0_1 = arith.constant 0 : index
    %c0_2 = arith.constant 0 : index
    %2 = vector.load %arg2[%c0_1, %c0_2] : memref<32x2048xbf16, #tpu.memory_space<vmem>>, vector<32x2048xbf16>
    %cst = arith.constant dense<0.000000e+00> : vector<16x2048xf32>
    %3 = tpu.matmul %1, %2, %cst {dimension_numbers = #tpu.dot_dimension_numbers<[1], [0], [0], [1], [0, 0, 1, 1], [], []>} : vector<16x32xbf16>, vector<32x2048xbf16>, vector<16x2048xf32> -> vector<16x2048xf32>
    %c0_3 = arith.constant 0 : index
    %c0_4 = arith.constant 0 : index
    %4 = vector.load %arg3[%c0_3, %c0_4] : memref<1x2048xf32, #tpu.memory_space<vmem>>, vector<1x2048xf32>
    %5 = vector.broadcast %4 : vector<1x2048xf32> to vector<16x2048xf32>
    %6 = arith.addf %3, %5 : vector<16x2048xf32>
    %cst_5 = arith.constant 0.000000e+00 : f32
    %7 = vector.broadcast %cst_5 : f32 to vector<16x2048xf32>
    %8 = arith.maximumf %6, %7 : vector<16x2048xf32>
    %9 = arith.truncf %8 : vector<16x2048xf32> to vector<16x2048xbf16>
    %c0_6 = arith.constant 0 : index
    %c0_7 = arith.constant 0 : index
    %10 = vector.load %arg4[%c0_6, %c0_7] : memref<2048x32xbf16, #tpu.memory_space<vmem>>, vector<2048x32xbf16>
    %cst_8 = arith.constant dense<0.000000e+00> : vector<16x32xf32>
    %11 = tpu.matmul %9, %10, %cst_8 {dimension_numbers = #tpu.dot_dimension_numbers<[1], [0], [0], [1], [0, 0, 1, 1], [], []>} : vector<16x2048xbf16>, vector<2048x32xbf16>, vector<16x32xf32> -> vector<16x32xf32>
    %c0_9 = arith.constant 0 : index
    %c0_10 = arith.constant 0 : index
    %12 = vector.load %arg5[%c0_9, %c0_10] : memref<1x32xf32, #tpu.memory_space<vmem>>, vector<1x32xf32>
    %13 = vector.broadcast %12 : vector<1x32xf32> to vector<16x32xf32>
    %14 = arith.addf %11, %13 : vector<16x32xf32>
    %15 = arith.addf %0, %14 : vector<16x32xf32>
    %cst_11 = arith.constant dense<0.000000e+00> : vector<16xf32>
    %16 = vector.multi_reduction <add>, %15, %cst_11 [1] : vector<16x32xf32> to vector<16xf32>
    %17 = vector.shape_cast %16 : vector<16xf32> to vector<16x1xf32>
    %cst_12 = arith.constant 3.200000e+01 : f32
    %18 = vector.broadcast %cst_12 : f32 to vector<16x1xf32>
    %19 = arith.divf %17, %18 : vector<16x1xf32>
    %20 = vector.broadcast %19 : vector<16x1xf32> to vector<16x32xf32>
    %21 = arith.subf %15, %20 : vector<16x32xf32>
    %22 = arith.mulf %21, %21 : vector<16x32xf32>
    %cst_13 = arith.constant dense<0.000000e+00> : vector<16xf32>
    %23 = vector.multi_reduction <add>, %22, %cst_13 [1] : vector<16x32xf32> to vector<16xf32>
    %24 = vector.shape_cast %23 : vector<16xf32> to vector<16x1xf32>
    %cst_14 = arith.constant 3.200000e+01 : f32
    %25 = vector.broadcast %cst_14 : f32 to vector<16x1xf32>
    %26 = arith.divf %24, %25 : vector<16x1xf32>
    %cst_15 = arith.constant 9.99999974E-6 : f32
    %27 = vector.broadcast %cst_15 : f32 to vector<16x1xf32>
    %28 = arith.addf %26, %27 : vector<16x1xf32>
    %29 = math.rsqrt %28 : vector<16x1xf32>
    %30 = vector.broadcast %29 : vector<16x1xf32> to vector<16x32xf32>
    %31 = arith.mulf %21, %30 : vector<16x32xf32>
    %c0_16 = arith.constant 0 : index
    %c0_17 = arith.constant 0 : index
    %32 = vector.load %arg6[%c0_16, %c0_17] : memref<1x32xf32, #tpu.memory_space<vmem>>, vector<1x32xf32>
    %33 = vector.broadcast %32 : vector<1x32xf32> to vector<16x32xf32>
    %34 = arith.mulf %31, %33 : vector<16x32xf32>
    %c0_18 = arith.constant 0 : index
    %c0_19 = arith.constant 0 : index
    %35 = vector.load %arg7[%c0_18, %c0_19] : memref<1x32xf32, #tpu.memory_space<vmem>>, vector<1x32xf32>
    %36 = vector.broadcast %35 : vector<1x32xf32> to vector<16x32xf32>
    %37 = arith.addf %34, %36 : vector<16x32xf32>
    %c0_20 = arith.constant 0 : index
    %c0_21 = arith.constant 0 : index
    %38 = vector.load %arg8[%c0_20, %c0_21] : memref<16x32xf32, #tpu.memory_space<vmem>>, vector<16x32xf32>
    tpu.vector_store %arg8[%c0_20, %c0_21], %37 {strides = array<i32>} : memref<16x32xf32, #tpu.memory_space<vmem>>, vector<16x32xf32>,
    return
  }
  func.func @transform_0(%arg0: i32) -> (i32, i32) {
    %c0_i32 = arith.constant 0 : i32
    %c0_i32_0 = arith.constant 0 : i32
    return %arg0, %c0_i32 : i32, i32
  }
  func.func @transform_1(%arg0: i32) -> (i32, i32) {
    %c0_i32 = arith.constant 0 : i32
    %c0_i32_0 = arith.constant 0 : i32
    %c0_i32_1 = arith.constant 0 : i32
    return %c0_i32, %c0_i32_0 : i32, i32
  }
  func.func @transform_2(%arg0: i32) -> (i32, i32) {
    %c0_i32 = arith.constant 0 : i32
    %c0_i32_0 = arith.constant 0 : i32
    %c0_i32_1 = arith.constant 0 : i32
    return %c0_i32, %c0_i32_0 : i32, i32
  }
  func.func @transform_3(%arg0: i32) -> (i32, i32) {
    %c0_i32 = arith.constant 0 : i32
    %c0_i32_0 = arith.constant 0 : i32
    %c0_i32_1 = arith.constant 0 : i32
    return %c0_i32, %c0_i32_0 : i32, i32
  }
  func.func @transform_4(%arg0: i32) -> (i32, i32) {
    %c0_i32 = arith.constant 0 : i32
    %c0_i32_0 = arith.constant 0 : i32
    %c0_i32_1 = arith.constant 0 : i32
    return %c0_i32, %c0_i32_0 : i32, i32
  }
  func.func @transform_5(%arg0: i32) -> (i32, i32) {
    %c0_i32 = arith.constant 0 : i32
    %c0_i32_0 = arith.constant 0 : i32
    %c0_i32_1 = arith.constant 0 : i32
    return %c0_i32, %c0_i32_0 : i32, i32
  }
  func.func @transform_6(%arg0: i32) -> (i32, i32) {
    %c0_i32 = arith.constant 0 : i32
    %c0_i32_0 = arith.constant 0 : i32
    %c0_i32_1 = arith.constant 0 : i32
    return %c0_i32, %c0_i32_0 : i32, i32
  }
  func.func @transform_7(%arg0: i32) -> (i32, i32) {
    %c0_i32 = arith.constant 0 : i32
    %c0_i32_0 = arith.constant 0 : i32
    return %arg0, %c0_i32 : i32, i32
  }
}

</mosaic_0001>

<llo_original>
// kernel: extractive_transformer_encoder.6
$region0: #{extractive_transformer_encoder.6}
  #allocation0 [shape = 'u32[]', space=smem, size = 0x4, offset = 0x4, fixed_abs, tag = 'smem constant byte address 0x4 - core index']
  #allocation1 [shape = 'u32[144,128]{1,0:T(1,128)}', space=vmem, size = 0x12000, scoped, tag = 'internal scratch']
  %s0 = inlined_call_operand.vmem [shape: f32[2,8,32], index: 0, kind: input, shape index: {}]
  %s1 = inlined_call_operand.vmem [shape: bf16[32,96], index: 1, kind: input, shape index: {}]
  %s2 = inlined_call_operand.vmem [shape: f32[1,96], index: 2, kind: input, shape index: {}]
  %s3 = inlined_call_operand.vmem [shape: bf16[32,32], index: 3, kind: input, shape index: {}]
  %s4 = inlined_call_operand.vmem [shape: f32[1,32], index: 4, kind: input, shape index: {}]
  %s5 = inlined_call_operand.vmem [shape: f32[1,32], index: 5, kind: input, shape index: {}]
  %s6 = inlined_call_operand.vmem [shape: f32[1,32], index: 6, kind: input, shape index: {}]
  %s7 = inlined_call_operand.vmem [shape: f32[2,8,32], index: 7, kind: output, shape index: {}]
  %s8 = sld [smem:[#allocation0]]
  $region61: #{extractive_transformer_encoder.6} parent=0
    _
  %s10 = ssub.s32 1, %s8
  %s11 = scalar_select 0, %s10, %s8
  loop: start=0, step=1, limit=4
  $region2: #{extractive_transformer_encoder.6} parent=0 // loop_pre_header
    _
  $region3: #{extractive_transformer_encoder.6} parent=0 // loop_header
    %s13 = sphi 0, %s17
    %p14 = scmp.ge.s32.totalorder %s13, 4
    %s23 = sphi 0, %s25
    %s26 = sphi 0, %s23
    %s27 = sphi 0, %s26
    %s43 = sphi 0, %s27
    %s47 = sphi 0, %s47
    %s49 = sphi 0, %s47
    %s50 = sphi 0, %s49
    %s64 = sphi 0, %s50
    %s68 = sphi 0, %s68
    %s70 = sphi 0, %s68
    %s71 = sphi 0, %s70
    %s85 = sphi 0, %s71
    %s89 = sphi 0, %s89
    %s91 = sphi 0, %s89
    %s92 = sphi 0, %s91
    %s106 = sphi 0, %s92
    %s110 = sphi 0, %s110
    %s112 = sphi 0, %s110
    %s113 = sphi 0, %s112
    %s127 = sphi 0, %s113
    %s131 = sphi 0, %s131
    %s133 = sphi 0, %s131
    %s134 = sphi 0, %s133
    %s148 = sphi 0, %s134
    %s152 = sphi 0, %s152
    %s154 = sphi 0, %s152
    %s155 = sphi 0, %s154
    %s169 = sphi 0, %s155
    %s175 = sphi 0, %s177
    %s178 = sphi 0, %s175
    %s179 = sphi 0, %s178
    %s195 = sphi 0, %s179
  $region4: #{extractive_transformer_encoder.6} parent=0 // loop_header_branch
    %16 = sbr.rel (%p14) target = $region8
  $region5: #{extractive_transformer_encoder.6} parent=0 // loop_body
    %s18 = ssub.s32 %s13, 1
    %s19 = ssub.s32 %s13, 2
    %s20 = sadd.s32 %s13, 1
    %s21 = ssub.s32 %s13, %s20
    %p22 = scmp.eq.s32.totalorder %s21, 0
    %s24 = sadd.s32 %s23, 1
    %s25 = scalar_select %p22, %s23, %s24
    %p28 = pneg %p22
    %p29 = scmp.eq.s32.totalorder %s13, 1
    %p30 = por %p28, %p29
    %p31 = scmp.ne.s32.totalorder %s23, %s26
    %p32 = scmp.eq.s32.totalorder %s13, 0
    %p33 = por %p31, %p32
    %p34 = scmp.ne.s32.totalorder %s23, %s26
    %p35 = scmp.eq.s32.totalorder %s18, 1
    %p36 = por %p34, %p35
    %p37 = scmp.ne.s32.totalorder %s26, %s27
    %p38 = scmp.eq.s32.totalorder %s18, 0
    %p39 = por %p37, %p38
    %p40 = scmp.ne.s32.totalorder %s26, %s27
    %p41 = scmp.eq.s32.totalorder %s19, 1
    %p42 = por %p40, %p41
    %p44 = scmp.ne.s32.totalorder %s27, %s43
    %p45 = scmp.eq.s32.totalorder %s19, 0
    %p46 = por %p44, %p45
    %s48 = sadd.s32 %s47, 1
    %p51 = scmp.eq.s32.totalorder %s13, 1
    %p52 = scmp.ne.s32.totalorder %s47, %s49
    %p53 = scmp.eq.s32.totalorder %s13, 0
    %p54 = por %p52, %p53
    %p55 = scmp.ne.s32.totalorder %s47, %s49
    %p56 = scmp.eq.s32.totalorder %s18, 1
    %p57 = por %p55, %p56
    %p58 = scmp.ne.s32.totalorder %s49, %s50
    %p59 = scmp.eq.s32.totalorder %s18, 0
    %p60 = por %p58, %p59
    %p61 = scmp.ne.s32.totalorder %s49, %s50
    %p62 = scmp.eq.s32.totalorder %s19, 1
    %p63 = por %p61, %p62
    %p65 = scmp.ne.s32.totalorder %s50, %s64
    %p66 = scmp.eq.s32.totalorder %s19, 0
    %p67 = por %p65, %p66
    %s69 = sadd.s32 %s68, 1
    %p72 = scmp.eq.s32.totalorder %s13, 1
    %p73 = scmp.ne.s32.totalorder %s68, %s70
    %p74 = scmp.eq.s32.totalorder %s13, 0
    %p75 = por %p73, %p74
    %p76 = scmp.ne.s32.totalorder %s68, %s70
    %p77 = scmp.eq.s32.totalorder %s18, 1
    %p78 = por %p76, %p77
    %p79 = scmp.ne.s32.totalorder %s70, %s71
    %p80 = scmp.eq.s32.totalorder %s18, 0
    %p81 = por %p79, %p80
    %p82 = scmp.ne.s32.totalorder %s70, %s71
    %p83 = scmp.eq.s32.totalorder %s19, 1
    %p84 = por %p82, %p83
    %p86 = scmp.ne.s32.totalorder %s71, %s85
    %p87 = scmp.eq.s32.totalorder %s19, 0
    %p88 = por %p86, %p87
    %s90 = sadd.s32 %s89, 1
    %p93 = scmp.eq.s32.totalorder %s13, 1
    %p94 = scmp.ne.s32.totalorder %s89, %s91
    %p95 = scmp.eq.s32.totalorder %s13, 0
    %p96 = por %p94, %p95
    %p97 = scmp.ne.s32.totalorder %s89, %s91
    %p98 = scmp.eq.s32.totalorder %s18, 1
    %p99 = por %p97, %p98
    %p100 = scmp.ne.s32.totalorder %s91, %s92
    %p101 = scmp.eq.s32.totalorder %s18, 0
    %p102 = por %p100, %p101
    %p103 = scmp.ne.s32.totalorder %s91, %s92
    %p104 = scmp.eq.s32.totalorder %s19, 1
    %p105 = por %p103, %p104
    %p107 = scmp.ne.s32.totalorder %s92, %s106
    %p108 = scmp.eq.s32.totalorder %s19, 0
    %p109 = por %p107, %p108
    %s111 = sadd.s32 %s110, 1
    %p114 = scmp.eq.s32.totalorder %s13, 1
    %p115 = scmp.ne.s32.totalorder %s110, %s112
    %p116 = scmp.eq.s32.totalorder %s13, 0
    %p117 = por %p115, %p116
    %p118 = scmp.ne.s32.totalorder %s110, %s112
    %p119 = scmp.eq.s32.totalorder %s18, 1
    %p120 = por %p118, %p119
    %p121 = scmp.ne.s32.totalorder %s112, %s113
    %p122 = scmp.eq.s32.totalorder %s18, 0
    %p123 = por %p121, %p122
    %p124 = scmp.ne.s32.totalorder %s112, %s113
    %p125 = scmp.eq.s32.totalorder %s19, 1
    %p126 = por %p124, %p125
    %p128 = scmp.ne.s32.totalorder %s113, %s127
    %p129 = scmp.eq.s32.totalorder %s19, 0
    %p130 = por %p128, %p129
    %s132 = sadd.s32 %s131, 1
    %p135 = scmp.eq.s32.totalorder %s13, 1
    %p136 = scmp.ne.s32.totalorder %s131, %s133
    %p137 = scmp.eq.s32.totalorder %s13, 0
    %p138 = por %p136, %p137
    %p139 = scmp.ne.s32.totalorder %s131, %s133
    %p140 = scmp.eq.s32.totalorder %s18, 1
    %p141 = por %p139, %p140
    %p142 = scmp.ne.s32.totalorder %s133, %s134
    %p143 = scmp.eq.s32.totalorder %s18, 0
    %p144 = por %p142, %p143
    %p145 = scmp.ne.s32.totalorder %s133, %s134
    %p146 = scmp.eq.s32.totalorder %s19, 1
    %p147 = por %p145, %p146
    %p149 = scmp.ne.s32.totalorder %s134, %s148
    %p150 = scmp.eq.s32.totalorder %s19, 0
    %p151 = por %p149, %p150
    %s153 = sadd.s32 %s152, 1
    %p156 = scmp.eq.s32.totalorder %s13, 1
    %p157 = scmp.ne.s32.totalorder %s152, %s154
    %p158 = scmp.eq.s32.totalorder %s13, 0
    %p159 = por %p157, %p158
    %p160 = scmp.ne.s32.totalorder %s152, %s154
    %p161 = scmp.eq.s32.totalorder %s18, 1
    %p162 = por %p160, %p161
    %p163 = scmp.ne.s32.totalorder %s154, %s155
    %p164 = scmp.eq.s32.totalorder %s18, 0
    %p165 = por %p163, %p164
    %p166 = scmp.ne.s32.totalorder %s154, %s155
    %p167 = scmp.eq.s32.totalorder %s19, 1
    %p168 = por %p166, %p167
    %p170 = scmp.ne.s32.totalorder %s155, %s169
    %p171 = scmp.eq.s32.totalorder %s19, 0
    %p172 = por %p170, %p171
    %s173 = ssub.s32 %s13, %s20
    %p174 = scmp.eq.s32.totalorder %s173, 0
    %s176 = sadd.s32 %s175, 1
    %s177 = scalar_select %p174, %s175, %s176
    %p180 = pneg %p174
    %p181 = scmp.eq.s32.totalorder %s13, 1
    %p182 = por %p180, %p181
    %p183 = scmp.ne.s32.totalorder %s175, %s178
    %p184 = scmp.eq.s32.totalorder %s13, 0
    %p185 = por %p183, %p184
    %p186 = scmp.ne.s32.totalorder %s175, %s178
    %p187 = scmp.eq.s32.totalorder %s18, 1
    %p188 = por %p186, %p187
    %p189 = scmp.ne.s32.totalorder %s178, %s179
    %p190 = scmp.eq.s32.totalorder %s18, 0
    %p191 = por %p189, %p190
    %p192 = scmp.ne.s32.totalorder %s178, %s179
    %p193 = scmp.eq.s32.totalorder %s19, 1
    %p194 = por %p192, %p193
    %p196 = scmp.ne.s32.totalorder %s179, %s195
    %p197 = scmp.eq.s32.totalorder %s19, 0
    %p198 = por %p196, %p197
    %p199 = scmp.le.s32.totalorder 1, %s13
    %p200 = scmp.lt.s32.totalorder %s13, 3
    %p201 = pnand %p199, %p200
    %p202 = pneg %p201
    // Predicated region
    $region9: #{extractive_transformer_encoder.6} parent=5 // pred_check
      _
    $region10: #{extractive_transformer_encoder.6} parent=5 // pred_check_branch
      %204 = sbr.rel (%p201) target = $region12
    $region11: #{extractive_transformer_encoder.6} parent=5 // pred_region
      %s205 = ssub.s32 %s13, 1
      // Predicated region
      $region13: #{extractive_transformer_encoder.6} parent=11 // pred_check
        %p206 = pneg %p60
      $region14: #{extractive_transformer_encoder.6} parent=11 // pred_check_branch
        %208 = sbr.rel (%p206) target = $region16
      $region15: #{extractive_transformer_encoder.6} parent=11 // pred_region
        _
      $region16: #{extractive_transformer_encoder.6} parent=11 // pred_fallthru
        _
      // Predicated region
      $region17: #{extractive_transformer_encoder.6} parent=11 // pred_check
        %p209 = pneg %p81
      $region18: #{extractive_transformer_encoder.6} parent=11 // pred_check_branch
        %211 = sbr.rel (%p209) target = $region20
      $region19: #{extractive_transformer_encoder.6} parent=11 // pred_region
        _
      $region20: #{extractive_transformer_encoder.6} parent=11 // pred_fallthru
        _
      // Predicated region
      $region21: #{extractive_transformer_encoder.6} parent=11 // pred_check
        %p212 = pneg %p102
      $region22: #{extractive_transformer_encoder.6} parent=11 // pred_check_branch
        %214 = sbr.rel (%p212) target = $region24
      $region23: #{extractive_transformer_encoder.6} parent=11 // pred_region
        _
      $region24: #{extractive_transformer_encoder.6} parent=11 // pred_fallthru
        _
      // Predicated region
      $region25: #{extractive_transformer_encoder.6} parent=11 // pred_check
        %p215 = pneg %p123
      $region26: #{extractive_transformer_encoder.6} parent=11 // pred_check_branch
        %217 = sbr.rel (%p215) target = $region28
      $region27: #{extractive_transformer_encoder.6} parent=11 // pred_region
        _
      $region28: #{extractive_transformer_encoder.6} parent=11 // pred_fallthru
        _
      // Predicated region
      $region29: #{extractive_transformer_encoder.6} parent=11 // pred_check
        %p218 = pneg %p144
      $region30: #{extractive_transformer_encoder.6} parent=11 // pred_check_branch
        %220 = sbr.rel (%p218) target = $region32
      $region31: #{extractive_transformer_encoder.6} parent=11 // pred_region
        _
      $region32: #{extractive_transformer_encoder.6} parent=11 // pred_fallthru
        _
      // Predicated region
      $region33: #{extractive_transformer_encoder.6} parent=11 // pred_check
        %p221 = pneg %p165
      $region34: #{extractive_transformer_encoder.6} parent=11 // pred_check_branch
        %223 = sbr.rel (%p221) target = $region36
      $region35: #{extractive_transformer_encoder.6} parent=11 // pred_region
        _
      $region36: #{extractive_transformer_encoder.6} parent=11 // pred_fallthru
        _
    $region12: #{extractive_transformer_encoder.6} parent=5 // pred_fallthru
      _
    %p224 = scmp.lt.s32.totalorder %s13, 2
    // Predicated region
    $region37: #{extractive_transformer_encoder.6} parent=5 // pred_check
      %p225 = pneg %p224
    $region38: #{extractive_transformer_encoder.6} parent=5 // pred_check_branch
      %227 = sbr.rel (%p225) target = $region40
    $region39: #{extractive_transformer_encoder.6} parent=5 // pred_region
      // Predicated region
      $region41: #{extractive_transformer_encoder.6} parent=39 // pred_check
        %p228 = pneg %p33
      $region42: #{extractive_transformer_encoder.6} parent=39 // pred_check_branch
        %230 = sbr.rel (%p228) target = $region44
      $region43: #{extractive_transformer_encoder.6} parent=39 // pred_region
        %p231 = scmp.lt.s32.totalorder %s13, 1
        %s232 = scalar_select %p231, %s13, 1
        %s233 = smul.addr %s232, 8
        %s234 = scalar_lea.vmem %s0, %s233
      $region44: #{extractive_transformer_encoder.6} parent=39 // pred_fallthru
        _
    $region40: #{extractive_transformer_encoder.6} parent=5 // pred_fallthru
      _
    %p235 = scmp.le.s32.totalorder 1, %s13
    %p236 = scmp.lt.s32.totalorder %s13, 3
    %p237 = pnand %p235, %p236
    %p238 = pneg %p237
    // Predicated region
    $region45: #{extractive_transformer_encoder.6} parent=5 // pred_check
      _
    $region46: #{extractive_transformer_encoder.6} parent=5 // pred_check_branch
      %240 = sbr.rel (%p237) target = $region48
    $region47: #{extractive_transformer_encoder.6} parent=5 // pred_region
      %s241 = ssub.s32 %s13, 1
      %p242 = scmp.lt.s32.totalorder %s18, 1
      %s243 = scalar_select %p242, %s18, 1
      %s244 = smul.addr %s243, 8
      %s245 = scalar_lea.vmem %s0, %s244
      %p246 = pneg %p39
      %p247 = pneg %p36
      %p248 = pneg %p60
      %p249 = pneg %p57
      %p250 = pneg %p81
      %p251 = pneg %p78
      %p252 = pneg %p102
      %p253 = pneg %p99
      %p254 = pneg %p123
      %p255 = pneg %p120
      %p256 = pneg %p144
      %p257 = pneg %p141
      %p258 = pneg %p165
      %p259 = pneg %p162
      %p260 = pneg %p191
      %p261 = pneg %p188
      %p262 = scmp.lt.s32.totalorder %s18, 1
      %s263 = scalar_select %p262, %s18, 1
      %s264 = smul.addr %s263, 8
      %s265 = scalar_lea.vmem %s7, %s264
      %p266 = scmp.lt.s32.totalorder %s18, 1
      %s267 = scalar_select %p266, %s18, 1
      %s268 = smul.addr %s267, 8
      %s269 = scalar_lea.vmem %s0, %s268
      %p270 = scmp.lt.s32.totalorder %s18, 1
      %s271 = scalar_select %p270, %s18, 1
      %s272 = smul.addr %s271, 8
      %s273 = scalar_lea.vmem %s7, %s272
      %v275 = vld [vmem:[%s269] sm:$0xff]
      %v276 = vpack.c.bf16 %v275, %v275
      %v277 = vld [vmem:[%s1] sm:$0xf]
      %v278 = vld [vmem:[%s1 + $0x4] sm:$0xf]
      %v279 = vld [vmem:[%s1 + $0x8] sm:$0xf]
      %v280 = vld [vmem:[%s1 + $0xc] sm:$0xf]
      %v281 = vld [vmem:[%s2] sm:$0x1]
      %v283 = vlaneseq
      %v284 = vshrl.u32 %v283, 7
      %v285 = vsub.s32 0, %v284
      %v286 = vrot.slane %v281, %v285
      %v292 = vunpack.c.l.b16 %v277
      %v293 = vunpack.c.l.b16 %v278
      %v294 = vunpack.c.l.b16 %v279
      %v295 = vunpack.c.l.b16 %v280
      %v296 = vpack.c.b16 %v293, %v292
      %v297 = vpack.c.b16 %v295, %v294
      %vm300 = vcmask 261120
      %v302 = vsel %vm300, %v276, 0
      %304 = vmatprep.subr.bf16.mxu0 0
      %305 = vmatpush1.bf16.msra.mxu0 0
      %306 = vmatprep.subr.bf16.mxu0 0
      %307 = vmatpush1.bf16.msra.mxu0 0
      %308 = vmatprep.subr.bf16.mxu0 0
      %309 = vmatpush1.bf16.msra.mxu0 0
      %310 = vmatprep.subr.bf16.mxu0 0
      %311 = vmatpush1.bf16.msra.mxu0 0
      %312 = vmatprep.subr.bf16.mxu0 0
      %313 = vmatpush1.bf16.msra.mxu0 0
      %314 = vmatprep.subr.bf16.mxu0 0
      %315 = vmatpush1.bf16.msra.mxu0 0
      %316 = vmatprep.subr.bf16.mxu0 0
      %317 = vmatpush1.bf16.msra.mxu0 %v297
      %318 = vmatprep.subr.bf16.mxu0 0
      %319 = vmatpush1.bf16.msra.mxu0 %v296
      %320 = vmatprep.subr.bf16.mxu0 0
      %321 = vmatpush2.bf16.msra.mxu0 0
      %322 = vmatprep.subr.bf16.mxu0 0
      %323 = vmatpush2.bf16.msra.mxu0 0
      %324 = vmatprep.subr.bf16.mxu0 0
      %325 = vmatpush2.bf16.msra.mxu0 0
      %326 = vmatprep.subr.bf16.mxu0 0
      %327 = vmatpush2.bf16.msra.mxu0 0
      %328 = vmatprep.subr.bf16.mxu0 0
      %329 = vmatpush2.bf16.msra.mxu0 0
      %330 = vmatprep.subr.bf16.mxu0 0
      %331 = vmatpush2.bf16.msra.mxu0 0
      %332 = vmatprep.subr.bf16.mxu0 0
      %333 = vmatpush2.bf16.msra.mxu0 0
      %334 = vmatprep.subr.bf16.mxu0 0
      %335 = vmatpush2.bf16.msra.mxu0 0
      %336 = vmatprep.mubr.bf16.mxu0 0
      %337 = vmatmul.mubr.bf16.gmra.mxu0 %v302
      %v338 = vpop.f32.mrf.mxu0
      %v339 = vadd.f32 %v286, %v338
      %v340 = vpop.f32.mrf.mxu0
      %v341 = vpop.f32.mrf.mxu0
      %v342 = vpop.f32.mrf.mxu0
      %343 = vdwg.mxu0
      %v344 = vpack.c.bf16 %v339, %v339
      %346 = vrot.lane.b32.xlu0 %v344, 96
      %v347 = vpop.permute.xlu0 %346
      %vm348 = vcmask 31744
      %v350 = vsel %vm348, %v344, 0
      %v353 = vsel %vm348, %v347, 0
      %355 = vmatprep.subr.bf16.mxu0 0
      %356 = vmatpush1.bf16.xpose.msra.mxu0 0
      %357 = vmatprep.subr.bf16.mxu0 0
      %358 = vmatpush1.bf16.xpose.msra.mxu0 0
      %359 = vmatprep.subr.bf16.mxu0 0
      %360 = vmatpush1.bf16.xpose.msra.mxu0 0
      %361 = vmatprep.subr.bf16.mxu0 0
      %362 = vmatpush1.bf16.xpose.msra.mxu0 0
      %363 = vmatprep.subr.bf16.mxu0 0
      %364 = vmatpush1.bf16.xpose.msra.mxu0 0
      %365 = vmatprep.subr.bf16.mxu0 0
      %366 = vmatpush1.bf16.xpose.msra.mxu0 0
      %367 = vmatprep.subr.bf16.mxu0 0
      %368 = vmatpush1.bf16.xpose.msra.mxu0 0
      %369 = vmatprep.subr.bf16.mxu0 0
      %370 = vmatpush1.bf16.xpose.msra.mxu0 %v353
      %371 = vmatprep.subr.bf16.mxu0 0
      %372 = vmatpush2.bf16.xpose.msra.mxu0 0
      %373 = vmatprep.subr.bf16.mxu0 0
      %374 = vmatpush2.bf16.xpose.msra.mxu0 0
      %375 = vmatprep.subr.bf16.mxu0 0
      %376 = vmatpush2.bf16.xpose.msra.mxu0 0
      %377 = vmatprep.subr.bf16.mxu0 0
      %378 = vmatpush2.bf16.xpose.msra.mxu0 0
      %379 = vmatprep.subr.bf16.mxu0 0
      %380 = vmatpush2.bf16.xpose.msra.mxu0 0
      %381 = vmatprep.subr.bf16.mxu0 0
      %382 = vmatpush2.bf16.xpose.msra.mxu0 0
      %383 = vmatprep.subr.bf16.mxu0 0
      %384 = vmatpush2.bf16.xpose.msra.mxu0 0
      %385 = vmatprep.subr.bf16.mxu0 0
      %386 = vmatpush2.bf16.xpose.msra.mxu0 0
      %387 = vmatprep.mubr.bf16.mxu0 0
      %388 = vmatmul.mubr.bf16.gmra.mxu0 %v350
      %v389 = vpop.f32.mrf.mxu0
      %v390 = vadd.f32 0.0, %v389
      %v391 = vpop.f32.mrf.mxu0
      %v392 = vpop.f32.mrf.mxu0
      %v393 = vpop.f32.mrf.mxu0
      %394 = vdwg.mxu0
      %v395 = vmul.f32 %v390, 0.5
      %vm396 = vcmask 64512
      %v397 = vsel %vm396, %v395, -inf
      %398 = vmax.xlane.f32.xlu0 %v397
      %v399 = vpop.xlane.xlu0 %398
      %v400 = vsub.f32 %v395, %v399
      %v401 = vmul.f32 %v400, 1.442695
      %v402 = vpow.pop %v401
      %v403 = vsel %vm396, %v402, 0.0
      %404 = vadd.xlane.f32.xlu0 %v403
      %v405 = vpop.xlane.xlu0 %404
      %v406 = vrcp.pop %v405
      %v407 = vmul.f32 %v402, %v406
      %v408 = vpack.c.bf16 %v407, %v407
      %409 = vrot.lane.b32.xlu0 %v344, 64
      %v410 = vpop.permute.xlu0 %409
      %v412 = vsel %vm396, %v408, 0
      %vm414 = vcmask 1043456
      %v416 = vsel %vm414, %v410, 0
      %418 = vmatprep.subr.bf16.mxu0 0
      %419 = vmatpush1.bf16.msra.mxu0 0
      %420 = vmatprep.subr.bf16.mxu0 0
      %421 = vmatpush1.bf16.msra.mxu0 0
      %422 = vmatprep.subr.bf16.mxu0 0
      %423 = vmatpush1.bf16.msra.mxu0 0
      %424 = vmatprep.subr.bf16.mxu0 0
      %425 = vmatpush1.bf16.msra.mxu0 0
      %426 = vmatprep.subr.bf16.mxu0 0
      %427 = vmatpush1.bf16.msra.mxu0 0
      %428 = vmatprep.subr.bf16.mxu0 0
      %429 = vmatpush1.bf16.msra.mxu0 0
      %430 = vmatprep.subr.bf16.mxu0 0
      %431 = vmatpush1.bf16.msra.mxu0 0
      %432 = vmatprep.subr.bf16.mxu0 0
      %433 = vmatpush1.bf16.msra.mxu0 %v416
      %434 = vmatprep.subr.bf16.mxu0 0
      %435 = vmatpush2.bf16.msra.mxu0 0
      %436 = vmatprep.subr.bf16.mxu0 0
      %437 = vmatpush2.bf16.msra.mxu0 0
      %438 = vmatprep.subr.bf16.mxu0 0
      %439 = vmatpush2.bf16.msra.mxu0 0
      %440 = vmatprep.subr.bf16.mxu0 0
      %441 = vmatpush2.bf16.msra.mxu0 0
      %442 = vmatprep.subr.bf16.mxu0 0
      %443 = vmatpush2.bf16.msra.mxu0 0
      %444 = vmatprep.subr.bf16.mxu0 0
      %445 = vmatpush2.bf16.msra.mxu0 0
      %446 = vmatprep.subr.bf16.mxu0 0
      %447 = vmatpush2.bf16.msra.mxu0 0
      %448 = vmatprep.subr.bf16.mxu0 0
      %449 = vmatpush2.bf16.msra.mxu0 0
      %450 = vmatprep.mubr.bf16.mxu0 0
      %451 = vmatmul.mubr.bf16.gmra.mxu0 %v412
      %v452 = vpop.f32.mrf.mxu0
      %v453 = vadd.f32 0.0, %v452
      %v454 = vpop.f32.mrf.mxu0
      %v455 = vpop.f32.mrf.mxu0
      %v456 = vpop.f32.mrf.mxu0
      %457 = vdwg.mxu0
      %458 = vrot.lane.b32.xlu0 %v344, 124
      %v459 = vpop.permute.xlu0 %458
      %460 = vrot.lane.b32.xlu0 %v344, 92
      %v461 = vpop.permute.xlu0 %460
      %v463 = vsel %vm348, %v459, 0
      %v466 = vsel %vm348, %v461, 0
      %468 = vmatprep.subr.bf16.mxu0 0
      %469 = vmatpush1.bf16.xpose.msra.mxu0 0
      %470 = vmatprep.subr.bf16.mxu0 0
      %471 = vmatpush1.bf16.xpose.msra.mxu0 0
      %472 = vmatprep.subr.bf16.mxu0 0
      %473 = vmatpush1.bf16.xpose.msra.mxu0 0
      %474 = vmatprep.subr.bf16.mxu0 0
      %475 = vmatpush1.bf16.xpose.msra.mxu0 0
      %476 = vmatprep.subr.bf16.mxu0 0
      %477 = vmatpush1.bf16.xpose.msra.mxu0 0
      %478 = vmatprep.subr.bf16.mxu0 0
      %479 = vmatpush1.bf16.xpose.msra.mxu0 0
      %480 = vmatprep.subr.bf16.mxu0 0
      %481 = vmatpush1.bf16.xpose.msra.mxu0 0
      %482 = vmatprep.subr.bf16.mxu0 0
      %483 = vmatpush1.bf16.xpose.msra.mxu0 %v466
      %484 = vmatprep.subr.bf16.mxu0 0
      %485 = vmatpush2.bf16.xpose.msra.mxu0 0
      %486 = vmatprep.subr.bf16.mxu0 0
      %487 = vmatpush2.bf16.xpose.msra.mxu0 0
      %488 = vmatprep.subr.bf16.mxu0 0
      %489 = vmatpush2.bf16.xpose.msra.mxu0 0
      %490 = vmatprep.subr.bf16.mxu0 0
      %491 = vmatpush2.bf16.xpose.msra.mxu0 0
      %492 = vmatprep.subr.bf16.mxu0 0
      %493 = vmatpush2.bf16.xpose.msra.mxu0 0
      %494 = vmatprep.subr.bf16.mxu0 0
      %495 = vmatpush2.bf16.xpose.msra.mxu0 0
      %496 = vmatprep.subr.bf16.mxu0 0
      %497 = vmatpush2.bf16.xpose.msra.mxu0 0
      %498 = vmatprep.subr.bf16.mxu0 0
      %499 = vmatpush2.bf16.xpose.msra.mxu0 0
      %500 = vmatprep.mubr.bf16.mxu0 0
      %501 = vmatmul.mubr.bf16.gmra.mxu0 %v463
      %v502 = vpop.f32.mrf.mxu0
      %v503 = vadd.f32 0.0, %v502
      %v504 = vpop.f32.mrf.mxu0
      %v505 = vpop.f32.mrf.mxu0
      %v506 = vpop.f32.mrf.mxu0
      %507 = vdwg.mxu0
      %v508 = vmul.f32 %v503, 0.5
      %v509 = vsel %vm396, %v508, -inf
      %510 = vmax.xlane.f32.xlu0 %v509
      %v511 = vpop.xlane.xlu0 %510
      %v512 = vsub.f32 %v508, %v511
      %v513 = vmul.f32 %v512, 1.442695
      %v514 = vpow.pop %v513
      %v515 = vsel %vm396, %v514, 0.0
      %516 = vadd.xlane.f32.xlu0 %v515
      %v517 = vpop.xlane.xlu0 %516
      %v518 = vrcp.pop %v517
      %v519 = vmul.f32 %v514, %v518
      %v520 = vpack.c.bf16 %v519, %v519
      %521 = vrot.lane.b32.xlu0 %v344, 60
      %v522 = vpop.permute.xlu0 %521
      %v524 = vsel %vm396, %v520, 0
      %v527 = vsel %vm414, %v522, 0
      %529 = vmatprep.subr.bf16.mxu0 0
      %530 = vmatpush1.bf16.msra.mxu0 0
      %531 = vmatprep.subr.bf16.mxu0 0
      %532 = vmatpush1.bf16.msra.mxu0 0
      %533 = vmatprep.subr.bf16.mxu0 0
      %534 = vmatpush1.bf16.msra.mxu0 0
      %535 = vmatprep.subr.bf16.mxu0 0
      %536 = vmatpush1.bf16.msra.mxu0 0
      %537 = vmatprep.subr.bf16.mxu0 0
      %538 = vmatpush1.bf16.msra.mxu0 0
      %539 = vmatprep.subr.bf16.mxu0 0
      %540 = vmatpush1.bf16.msra.mxu0 0
      %541 = vmatprep.subr.bf16.mxu0 0
      %542 = vmatpush1.bf16.msra.mxu0 0
      %543 = vmatprep.subr.bf16.mxu0 0
      %544 = vmatpush1.bf16.msra.mxu0 %v527
      %545 = vmatprep.subr.bf16.mxu0 0
      %546 = vmatpush2.bf16.msra.mxu0 0
      %547 = vmatprep.subr.bf16.mxu0 0
      %548 = vmatpush2.bf16.msra.mxu0 0
      %549 = vmatprep.subr.bf16.mxu0 0
      %550 = vmatpush2.bf16.msra.mxu0 0
      %551 = vmatprep.subr.bf16.mxu0 0
      %552 = vmatpush2.bf16.msra.mxu0 0
      %553 = vmatprep.subr.bf16.mxu0 0
      %554 = vmatpush2.bf16.msra.mxu0 0
      %555 = vmatprep.subr.bf16.mxu0 0
      %556 = vmatpush2.bf16.msra.mxu0 0
      %557 = vmatprep.subr.bf16.mxu0 0
      %558 = vmatpush2.bf16.msra.mxu0 0
      %559 = vmatprep.subr.bf16.mxu0 0
      %560 = vmatpush2.bf16.msra.mxu0 0
      %561 = vmatprep.mubr.bf16.mxu0 0
      %562 = vmatmul.mubr.bf16.gmra.mxu0 %v524
      %v563 = vpop.f32.mrf.mxu0
      %v564 = vadd.f32 0.0, %v563
      %v565 = vpop.f32.mrf.mxu0
      %v566 = vpop.f32.mrf.mxu0
      %v567 = vpop.f32.mrf.mxu0
      %568 = vdwg.mxu0
      %569 = vrot.lane.b32.xlu0 %v344, 120
      %v570 = vpop.permute.xlu0 %569
      %571 = vrot.lane.b32.xlu0 %v344, 88
      %v572 = vpop.permute.xlu0 %571
      %v574 = vsel %vm348, %v570, 0
      %v577 = vsel %vm348, %v572, 0
      %579 = vmatprep.subr.bf16.mxu0 0
      %580 = vmatpush1.bf16.xpose.msra.mxu0 0
      %581 = vmatprep.subr.bf16.mxu0 0
      %582 = vmatpush1.bf16.xpose.msra.mxu0 0
      %583 = vmatprep.subr.bf16.mxu0 0
      %584 = vmatpush1.bf16.xpose.msra.mxu0 0
      %585 = vmatprep.subr.bf16.mxu0 0
      %586 = vmatpush1.bf16.xpose.msra.mxu0 0
      %587 = vmatprep.subr.bf16.mxu0 0
      %588 = vmatpush1.bf16.xpose.msra.mxu0 0
      %589 = vmatprep.subr.bf16.mxu0 0
      %590 = vmatpush1.bf16.xpose.msra.mxu0 0
      %591 = vmatprep.subr.bf16.mxu0 0
      %592 = vmatpush1.bf16.xpose.msra.mxu0 0
      %593 = vmatprep.subr.bf16.mxu0 0
      %594 = vmatpush1.bf16.xpose.msra.mxu0 %v577
      %595 = vmatprep.subr.bf16.mxu0 0
      %596 = vmatpush2.bf16.xpose.msra.mxu0 0
      %597 = vmatprep.subr.bf16.mxu0 0
      %598 = vmatpush2.bf16.xpose.msra.mxu0 0
      %599 = vmatprep.subr.bf16.mxu0 0
      %600 = vmatpush2.bf16.xpose.msra.mxu0 0
      %601 = vmatprep.subr.bf16.mxu0 0
      %602 = vmatpush2.bf16.xpose.msra.mxu0 0
      %603 = vmatprep.subr.bf16.mxu0 0
      %604 = vmatpush2.bf16.xpose.msra.mxu0 0
      %605 = vmatprep.subr.bf16.mxu0 0
      %606 = vmatpush2.bf16.xpose.msra.mxu0 0
      %607 = vmatprep.subr.bf16.mxu0 0
      %608 = vmatpush2.bf16.xpose.msra.mxu0 0
      %609 = vmatprep.subr.bf16.mxu0 0
      %610 = vmatpush2.bf16.xpose.msra.mxu0 0
      %611 = vmatprep.mubr.bf16.mxu0 0
      %612 = vmatmul.mubr.bf16.gmra.mxu0 %v574
      %v613 = vpop.f32.mrf.mxu0
      %v614 = vadd.f32 0.0, %v613
      %v615 = vpop.f32.mrf.mxu0
      %v616 = vpop.f32.mrf.mxu0
      %v617 = vpop.f32.mrf.mxu0
      %618 = vdwg.mxu0
      %v619 = vmul.f32 %v614, 0.5
      %v620 = vsel %vm396, %v619, -inf
      %621 = vmax.xlane.f32.xlu0 %v620
      %v622 = vpop.xlane.xlu0 %621
      %v623 = vsub.f32 %v619, %v622
      %v624 = vmul.f32 %v623, 1.442695
      %v625 = vpow.pop %v624
      %v626 = vsel %vm396, %v625, 0.0
      %627 = vadd.xlane.f32.xlu0 %v626
      %v628 = vpop.xlane.xlu0 %627
      %v629 = vrcp.pop %v628
      %v630 = vmul.f32 %v625, %v629
      %v631 = vpack.c.bf16 %v630, %v630
      %632 = vrot.lane.b32.xlu0 %v344, 56
      %v633 = vpop.permute.xlu0 %632
      %v635 = vsel %vm396, %v631, 0
      %v638 = vsel %vm414, %v633, 0
      %640 = vmatprep.subr.bf16.mxu0 0
      %641 = vmatpush1.bf16.msra.mxu0 0
      %642 = vmatprep.subr.bf16.mxu0 0
      %643 = vmatpush1.bf16.msra.mxu0 0
      %644 = vmatprep.subr.bf16.mxu0 0
      %645 = vmatpush1.bf16.msra.mxu0 0
      %646 = vmatprep.subr.bf16.mxu0 0
      %647 = vmatpush1.bf16.msra.mxu0 0
      %648 = vmatprep.subr.bf16.mxu0 0
      %649 = vmatpush1.bf16.msra.mxu0 0
      %650 = vmatprep.subr.bf16.mxu0 0
      %651 = vmatpush1.bf16.msra.mxu0 0
      %652 = vmatprep.subr.bf16.mxu0 0
      %653 = vmatpush1.bf16.msra.mxu0 0
      %654 = vmatprep.subr.bf16.mxu0 0
      %655 = vmatpush1.bf16.msra.mxu0 %v638
      %656 = vmatprep.subr.bf16.mxu0 0
      %657 = vmatpush2.bf16.msra.mxu0 0
      %658 = vmatprep.subr.bf16.mxu0 0
      %659 = vmatpush2.bf16.msra.mxu0 0
      %660 = vmatprep.subr.bf16.mxu0 0
      %661 = vmatpush2.bf16.msra.mxu0 0
      %662 = vmatprep.subr.bf16.mxu0 0
      %663 = vmatpush2.bf16.msra.mxu0 0
      %664 = vmatprep.subr.bf16.mxu0 0
      %665 = vmatpush2.bf16.msra.mxu0 0
      %666 = vmatprep.subr.bf16.mxu0 0
      %667 = vmatpush2.bf16.msra.mxu0 0
      %668 = vmatprep.subr.bf16.mxu0 0
      %669 = vmatpush2.bf16.msra.mxu0 0
      %670 = vmatprep.subr.bf16.mxu0 0
      %671 = vmatpush2.bf16.msra.mxu0 0
      %672 = vmatprep.mubr.bf16.mxu0 0
      %673 = vmatmul.mubr.bf16.gmra.mxu0 %v635
      %v674 = vpop.f32.mrf.mxu0
      %v675 = vadd.f32 0.0, %v674
      %v676 = vpop.f32.mrf.mxu0
      %v677 = vpop.f32.mrf.mxu0
      %v678 = vpop.f32.mrf.mxu0
      %679 = vdwg.mxu0
      %680 = vrot.lane.b32.xlu0 %v344, 116
      %v681 = vpop.permute.xlu0 %680
      %682 = vrot.lane.b32.xlu0 %v344, 84
      %v683 = vpop.permute.xlu0 %682
      %v685 = vsel %vm348, %v681, 0
      %v688 = vsel %vm348, %v683, 0
      %690 = vmatprep.subr.bf16.mxu0 0
      %691 = vmatpush1.bf16.xpose.msra.mxu0 0
      %692 = vmatprep.subr.bf16.mxu0 0
      %693 = vmatpush1.bf16.xpose.msra.mxu0 0
      %694 = vmatprep.subr.bf16.mxu0 0
      %695 = vmatpush1.bf16.xpose.msra.mxu0 0
      %696 = vmatprep.subr.bf16.mxu0 0
      %697 = vmatpush1.bf16.xpose.msra.mxu0 0
      %698 = vmatprep.subr.bf16.mxu0 0
      %699 = vmatpush1.bf16.xpose.msra.mxu0 0
      %700 = vmatprep.subr.bf16.mxu0 0
      %701 = vmatpush1.bf16.xpose.msra.mxu0 0
      %702 = vmatprep.subr.bf16.mxu0 0
      %703 = vmatpush1.bf16.xpose.msra.mxu0 0
      %704 = vmatprep.subr.bf16.mxu0 0
      %705 = vmatpush1.bf16.xpose.msra.mxu0 %v688
      %706 = vmatprep.subr.bf16.mxu0 0
      %707 = vmatpush2.bf16.xpose.msra.mxu0 0
      %708 = vmatprep.subr.bf16.mxu0 0
      %709 = vmatpush2.bf16.xpose.msra.mxu0 0
      %710 = vmatprep.subr.bf16.mxu0 0
      %711 = vmatpush2.bf16.xpose.msra.mxu0 0
      %712 = vmatprep.subr.bf16.mxu0 0
      %713 = vmatpush2.bf16.xpose.msra.mxu0 0
      %714 = vmatprep.subr.bf16.mxu0 0
      %715 = vmatpush2.bf16.xpose.msra.mxu0 0
      %716 = vmatprep.subr.bf16.mxu0 0
      %717 = vmatpush2.bf16.xpose.msra.mxu0 0
      %718 = vmatprep.subr.bf16.mxu0 0
      %719 = vmatpush2.bf16.xpose.msra.mxu0 0
      %720 = vmatprep.subr.bf16.mxu0 0
      %721 = vmatpush2.bf16.xpose.msra.mxu0 0
      %722 = vmatprep.mubr.bf16.mxu0 0
      %723 = vmatmul.mubr.bf16.gmra.mxu0 %v685
      %v724 = vpop.f32.mrf.mxu0
      %v725 = vadd.f32 0.0, %v724
      %v726 = vpop.f32.mrf.mxu0
      %v727 = vpop.f32.mrf.mxu0
      %v728 = vpop.f32.mrf.mxu0
      %729 = vdwg.mxu0
      %v730 = vmul.f32 %v725, 0.5
      %v731 = vsel %vm396, %v730, -inf
      %732 = vmax.xlane.f32.xlu0 %v731
      %v733 = vpop.xlane.xlu0 %732
      %v734 = vsub.f32 %v730, %v733
      %v735 = vmul.f32 %v734, 1.442695
      %v736 = vpow.pop %v735
      %v737 = vsel %vm396, %v736, 0.0
      %738 = vadd.xlane.f32.xlu0 %v737
      %v739 = vpop.xlane.xlu0 %738
      %v740 = vrcp.pop %v739
      %v741 = vmul.f32 %v736, %v740
      %v742 = vpack.c.bf16 %v741, %v741
      %743 = vrot.lane.b32.xlu0 %v344, 52
      %v744 = vpop.permute.xlu0 %743
      %v746 = vsel %vm396, %v742, 0
      %v749 = vsel %vm414, %v744, 0
      %751 = vmatprep.subr.bf16.mxu0 0
      %752 = vmatpush1.bf16.msra.mxu0 0
      %753 = vmatprep.subr.bf16.mxu0 0
      %754 = vmatpush1.bf16.msra.mxu0 0
      %755 = vmatprep.subr.bf16.mxu0 0
      %756 = vmatpush1.bf16.msra.mxu0 0
      %757 = vmatprep.subr.bf16.mxu0 0
      %758 = vmatpush1.bf16.msra.mxu0 0
      %759 = vmatprep.subr.bf16.mxu0 0
      %760 = vmatpush1.bf16.msra.mxu0 0
      %761 = vmatprep.subr.bf16.mxu0 0
      %762 = vmatpush1.bf16.msra.mxu0 0
      %763 = vmatprep.subr.bf16.mxu0 0
      %764 = vmatpush1.bf16.msra.mxu0 0
      %765 = vmatprep.subr.bf16.mxu0 0
      %766 = vmatpush1.bf16.msra.mxu0 %v749
      %767 = vmatprep.subr.bf16.mxu0 0
      %768 = vmatpush2.bf16.msra.mxu0 0
      %769 = vmatprep.subr.bf16.mxu0 0
      %770 = vmatpush2.bf16.msra.mxu0 0
      %771 = vmatprep.subr.bf16.mxu0 0
      %772 = vmatpush2.bf16.msra.mxu0 0
      %773 = vmatprep.subr.bf16.mxu0 0
      %774 = vmatpush2.bf16.msra.mxu0 0
      %775 = vmatprep.subr.bf16.mxu0 0
      %776 = vmatpush2.bf16.msra.mxu0 0
      %777 = vmatprep.subr.bf16.mxu0 0
      %778 = vmatpush2.bf16.msra.mxu0 0
      %779 = vmatprep.subr.bf16.mxu0 0
      %780 = vmatpush2.bf16.msra.mxu0 0
      %781 = vmatprep.subr.bf16.mxu0 0
      %782 = vmatpush2.bf16.msra.mxu0 0
      %783 = vmatprep.mubr.bf16.mxu0 0
      %784 = vmatmul.mubr.bf16.gmra.mxu0 %v746
      %v785 = vpop.f32.mrf.mxu0
      %v786 = vadd.f32 0.0, %v785
      %v787 = vpop.f32.mrf.mxu0
      %v788 = vpop.f32.mrf.mxu0
      %v789 = vpop.f32.mrf.mxu0
      %790 = vdwg.mxu0
      %791 = vrot.lane.b32.xlu0 %v344, 112
      %v792 = vpop.permute.xlu0 %791
      %793 = vrot.lane.b32.xlu0 %v344, 80
      %v794 = vpop.permute.xlu0 %793
      %v796 = vsel %vm348, %v792, 0
      %v799 = vsel %vm348, %v794, 0
      %801 = vmatprep.subr.bf16.mxu0 0
      %802 = vmatpush1.bf16.xpose.msra.mxu0 0
      %803 = vmatprep.subr.bf16.mxu0 0
      %804 = vmatpush1.bf16.xpose.msra.mxu0 0
      %805 = vmatprep.subr.bf16.mxu0 0
      %806 = vmatpush1.bf16.xpose.msra.mxu0 0
      %807 = vmatprep.subr.bf16.mxu0 0
      %808 = vmatpush1.bf16.xpose.msra.mxu0 0
      %809 = vmatprep.subr.bf16.mxu0 0
      %810 = vmatpush1.bf16.xpose.msra.mxu0 0
      %811 = vmatprep.subr.bf16.mxu0 0
      %812 = vmatpush1.bf16.xpose.msra.mxu0 0
      %813 = vmatprep.subr.bf16.mxu0 0
      %814 = vmatpush1.bf16.xpose.msra.mxu0 0
      %815 = vmatprep.subr.bf16.mxu0 0
      %816 = vmatpush1.bf16.xpose.msra.mxu0 %v799
      %817 = vmatprep.subr.bf16.mxu0 0
      %818 = vmatpush2.bf16.xpose.msra.mxu0 0
      %819 = vmatprep.subr.bf16.mxu0 0
      %820 = vmatpush2.bf16.xpose.msra.mxu0 0
      %821 = vmatprep.subr.bf16.mxu0 0
      %822 = vmatpush2.bf16.xpose.msra.mxu0 0
      %823 = vmatprep.subr.bf16.mxu0 0
      %824 = vmatpush2.bf16.xpose.msra.mxu0 0
      %825 = vmatprep.subr.bf16.mxu0 0
      %826 = vmatpush2.bf16.xpose.msra.mxu0 0
      %827 = vmatprep.subr.bf16.mxu0 0
      %828 = vmatpush2.bf16.xpose.msra.mxu0 0
      %829 = vmatprep.subr.bf16.mxu0 0
      %830 = vmatpush2.bf16.xpose.msra.mxu0 0
      %831 = vmatprep.subr.bf16.mxu0 0
      %832 = vmatpush2.bf16.xpose.msra.mxu0 0
      %833 = vmatprep.mubr.bf16.mxu0 0
      %834 = vmatmul.mubr.bf16.gmra.mxu0 %v796
      %v835 = vpop.f32.mrf.mxu0
      %v836 = vadd.f32 0.0, %v835
      %v837 = vpop.f32.mrf.mxu0
      %v838 = vpop.f32.mrf.mxu0
      %v839 = vpop.f32.mrf.mxu0
      %840 = vdwg.mxu0
      %v841 = vmul.f32 %v836, 0.5
      %v842 = vsel %vm396, %v841, -inf
      %843 = vmax.xlane.f32.xlu0 %v842
      %v844 = vpop.xlane.xlu0 %843
      %v845 = vsub.f32 %v841, %v844
      %v846 = vmul.f32 %v845, 1.442695
      %v847 = vpow.pop %v846
      %v848 = vsel %vm396, %v847, 0.0
      %849 = vadd.xlane.f32.xlu0 %v848
      %v850 = vpop.xlane.xlu0 %849
      %v851 = vrcp.pop %v850
      %v852 = vmul.f32 %v847, %v851
      %v853 = vpack.c.bf16 %v852, %v852
      %854 = vrot.lane.b32.xlu0 %v344, 48
      %v855 = vpop.permute.xlu0 %854
      %v857 = vsel %vm396, %v853, 0
      %v860 = vsel %vm414, %v855, 0
      %862 = vmatprep.subr.bf16.mxu0 0
      %863 = vmatpush1.bf16.msra.mxu0 0
      %864 = vmatprep.subr.bf16.mxu0 0
      %865 = vmatpush1.bf16.msra.mxu0 0
      %866 = vmatprep.subr.bf16.mxu0 0
      %867 = vmatpush1.bf16.msra.mxu0 0
      %868 = vmatprep.subr.bf16.mxu0 0
      %869 = vmatpush1.bf16.msra.mxu0 0
      %870 = vmatprep.subr.bf16.mxu0 0
      %871 = vmatpush1.bf16.msra.mxu0 0
      %872 = vmatprep.subr.bf16.mxu0 0
      %873 = vmatpush1.bf16.msra.mxu0 0
      %874 = vmatprep.subr.bf16.mxu0 0
      %875 = vmatpush1.bf16.msra.mxu0 0
      %876 = vmatprep.subr.bf16.mxu0 0
      %877 = vmatpush1.bf16.msra.mxu0 %v860
      %878 = vmatprep.subr.bf16.mxu0 0
      %879 = vmatpush2.bf16.msra.mxu0 0
      %880 = vmatprep.subr.bf16.mxu0 0
      %881 = vmatpush2.bf16.msra.mxu0 0
      %882 = vmatprep.subr.bf16.mxu0 0
      %883 = vmatpush2.bf16.msra.mxu0 0
      %884 = vmatprep.subr.bf16.mxu0 0
      %885 = vmatpush2.bf16.msra.mxu0 0
      %886 = vmatprep.subr.bf16.mxu0 0
      %887 = vmatpush2.bf16.msra.mxu0 0
      %888 = vmatprep.subr.bf16.mxu0 0
      %889 = vmatpush2.bf16.msra.mxu0 0
      %890 = vmatprep.subr.bf16.mxu0 0
      %891 = vmatpush2.bf16.msra.mxu0 0
      %892 = vmatprep.subr.bf16.mxu0 0
      %893 = vmatpush2.bf16.msra.mxu0 0
      %894 = vmatprep.mubr.bf16.mxu0 0
      %895 = vmatmul.mubr.bf16.gmra.mxu0 %v857
      %v896 = vpop.f32.mrf.mxu0
      %v897 = vadd.f32 0.0, %v896
      %v898 = vpop.f32.mrf.mxu0
      %v899 = vpop.f32.mrf.mxu0
      %v900 = vpop.f32.mrf.mxu0
      %901 = vdwg.mxu0
      %902 = vrot.lane.b32.xlu0 %v344, 108
      %v903 = vpop.permute.xlu0 %902
      %904 = vrot.lane.b32.xlu0 %v344, 76
      %v905 = vpop.permute.xlu0 %904
      %v907 = vsel %vm348, %v903, 0
      %v910 = vsel %vm348, %v905, 0
      %912 = vmatprep.subr.bf16.mxu0 0
      %913 = vmatpush1.bf16.xpose.msra.mxu0 0
      %914 = vmatprep.subr.bf16.mxu0 0
      %915 = vmatpush1.bf16.xpose.msra.mxu0 0
      %916 = vmatprep.subr.bf16.mxu0 0
      %917 = vmatpush1.bf16.xpose.msra.mxu0 0
      %918 = vmatprep.subr.bf16.mxu0 0
      %919 = vmatpush1.bf16.xpose.msra.mxu0 0
      %920 = vmatprep.subr.bf16.mxu0 0
      %921 = vmatpush1.bf16.xpose.msra.mxu0 0
      %922 = vmatprep.subr.bf16.mxu0 0
      %923 = vmatpush1.bf16.xpose.msra.mxu0 0
      %924 = vmatprep.subr.bf16.mxu0 0
      %925 = vmatpush1.bf16.xpose.msra.mxu0 0
      %926 = vmatprep.subr.bf16.mxu0 0
      %927 = vmatpush1.bf16.xpose.msra.mxu0 %v910
      %928 = vmatprep.subr.bf16.mxu0 0
      %929 = vmatpush2.bf16.xpose.msra.mxu0 0
      %930 = vmatprep.subr.bf16.mxu0 0
      %931 = vmatpush2.bf16.xpose.msra.mxu0 0
      %932 = vmatprep.subr.bf16.mxu0 0
      %933 = vmatpush2.bf16.xpose.msra.mxu0 0
      %934 = vmatprep.subr.bf16.mxu0 0
      %935 = vmatpush2.bf16.xpose.msra.mxu0 0
      %936 = vmatprep.subr.bf16.mxu0 0
      %937 = vmatpush2.bf16.xpose.msra.mxu0 0
      %938 = vmatprep.subr.bf16.mxu0 0
      %939 = vmatpush2.bf16.xpose.msra.mxu0 0
      %940 = vmatprep.subr.bf16.mxu0 0
      %941 = vmatpush2.bf16.xpose.msra.mxu0 0
      %942 = vmatprep.subr.bf16.mxu0 0
      %943 = vmatpush2.bf16.xpose.msra.mxu0 0
      %944 = vmatprep.mubr.bf16.mxu0 0
      %945 = vmatmul.mubr.bf16.gmra.mxu0 %v907
      %v946 = vpop.f32.mrf.mxu0
      %v947 = vadd.f32 0.0, %v946
      %v948 = vpop.f32.mrf.mxu0
      %v949 = vpop.f32.mrf.mxu0
      %v950 = vpop.f32.mrf.mxu0
      %951 = vdwg.mxu0
      %v952 = vmul.f32 %v947, 0.5
      %v953 = vsel %vm396, %v952, -inf
      %954 = vmax.xlane.f32.xlu0 %v953
      %v955 = vpop.xlane.xlu0 %954
      %v956 = vsub.f32 %v952, %v955
      %v957 = vmul.f32 %v956, 1.442695
      %v958 = vpow.pop %v957
      %v959 = vsel %vm396, %v958, 0.0
      %960 = vadd.xlane.f32.xlu0 %v959
      %v961 = vpop.xlane.xlu0 %960
      %v962 = vrcp.pop %v961
      %v963 = vmul.f32 %v958, %v962
      %v964 = vpack.c.bf16 %v963, %v963
      %965 = vrot.lane.b32.xlu0 %v344, 44
      %v966 = vpop.permute.xlu0 %965
      %v968 = vsel %vm396, %v964, 0
      %v971 = vsel %vm414, %v966, 0
      %973 = vmatprep.subr.bf16.mxu0 0
      %974 = vmatpush1.bf16.msra.mxu0 0
      %975 = vmatprep.subr.bf16.mxu0 0
      %976 = vmatpush1.bf16.msra.mxu0 0
      %977 = vmatprep.subr.bf16.mxu0 0
      %978 = vmatpush1.bf16.msra.mxu0 0
      %979 = vmatprep.subr.bf16.mxu0 0
      %980 = vmatpush1.bf16.msra.mxu0 0
      %981 = vmatprep.subr.bf16.mxu0 0
      %982 = vmatpush1.bf16.msra.mxu0 0
      %983 = vmatprep.subr.bf16.mxu0 0
      %984 = vmatpush1.bf16.msra.mxu0 0
      %985 = vmatprep.subr.bf16.mxu0 0
      %986 = vmatpush1.bf16.msra.mxu0 0
      %987 = vmatprep.subr.bf16.mxu0 0
      %988 = vmatpush1.bf16.msra.mxu0 %v971
      %989 = vmatprep.subr.bf16.mxu0 0
      %990 = vmatpush2.bf16.msra.mxu0 0
      %991 = vmatprep.subr.bf16.mxu0 0
      %992 = vmatpush2.bf16.msra.mxu0 0
      %993 = vmatprep.subr.bf16.mxu0 0
      %994 = vmatpush2.bf16.msra.mxu0 0
      %995 = vmatprep.subr.bf16.mxu0 0
      %996 = vmatpush2.bf16.msra.mxu0 0
      %997 = vmatprep.subr.bf16.mxu0 0
      %998 = vmatpush2.bf16.msra.mxu0 0
      %999 = vmatprep.subr.bf16.mxu0 0
      %1000 = vmatpush2.bf16.msra.mxu0 0
      %1001 = vmatprep.subr.bf16.mxu0 0
      %1002 = vmatpush2.bf16.msra.mxu0 0
      %1003 = vmatprep.subr.bf16.mxu0 0
      %1004 = vmatpush2.bf16.msra.mxu0 0
      %1005 = vmatprep.mubr.bf16.mxu0 0
      %1006 = vmatmul.mubr.bf16.gmra.mxu0 %v968
      %v1007 = vpop.f32.mrf.mxu0
      %v1008 = vadd.f32 0.0, %v1007
      %v1009 = vpop.f32.mrf.mxu0
      %v1010 = vpop.f32.mrf.mxu0
      %v1011 = vpop.f32.mrf.mxu0
      %1012 = vdwg.mxu0
      %1013 = vrot.lane.b32.xlu0 %v344, 104
      %v1014 = vpop.permute.xlu0 %1013
      %1015 = vrot.lane.b32.xlu0 %v344, 72
      %v1016 = vpop.permute.xlu0 %1015
      %v1018 = vsel %vm348, %v1014, 0
      %v1021 = vsel %vm348, %v1016, 0
      %1023 = vmatprep.subr.bf16.mxu0 0
      %1024 = vmatpush1.bf16.xpose.msra.mxu0 0
      %1025 = vmatprep.subr.bf16.mxu0 0
      %1026 = vmatpush1.bf16.xpose.msra.mxu0 0
      %1027 = vmatprep.subr.bf16.mxu0 0
      %1028 = vmatpush1.bf16.xpose.msra.mxu0 0
      %1029 = vmatprep.subr.bf16.mxu0 0
      %1030 = vmatpush1.bf16.xpose.msra.mxu0 0
      %1031 = vmatprep.subr.bf16.mxu0 0
      %1032 = vmatpush1.bf16.xpose.msra.mxu0 0
      %1033 = vmatprep.subr.bf16.mxu0 0
      %1034 = vmatpush1.bf16.xpose.msra.mxu0 0
      %1035 = vmatprep.subr.bf16.mxu0 0
      %1036 = vmatpush1.bf16.xpose.msra.mxu0 0
      %1037 = vmatprep.subr.bf16.mxu0 0
      %1038 = vmatpush1.bf16.xpose.msra.mxu0 %v1021
      %1039 = vmatprep.subr.bf16.mxu0 0
      %1040 = vmatpush2.bf16.xpose.msra.mxu0 0
      %1041 = vmatprep.subr.bf16.mxu0 0
      %1042 = vmatpush2.bf16.xpose.msra.mxu0 0
      %1043 = vmatprep.subr.bf16.mxu0 0
      %1044 = vmatpush2.bf16.xpose.msra.mxu0 0
      %1045 = vmatprep.subr.bf16.mxu0 0
      %1046 = vmatpush2.bf16.xpose.msra.mxu0 0
      %1047 = vmatprep.subr.bf16.mxu0 0
      %1048 = vmatpush2.bf16.xpose.msra.mxu0 0
      %1049 = vmatprep.subr.bf16.mxu0 0
      %1050 = vmatpush2.bf16.xpose.msra.mxu0 0
      %1051 = vmatprep.subr.bf16.mxu0 0
      %1052 = vmatpush2.bf16.xpose.msra.mxu0 0
      %1053 = vmatprep.subr.bf16.mxu0 0
      %1054 = vmatpush2.bf16.xpose.msra.mxu0 0
      %1055 = vmatprep.mubr.bf16.mxu0 0
      %1056 = vmatmul.mubr.bf16.gmra.mxu0 %v1018
      %v1057 = vpop.f32.mrf.mxu0
      %v1058 = vadd.f32 0.0, %v1057
      %v1059 = vpop.f32.mrf.mxu0
      %v1060 = vpop.f32.mrf.mxu0
      %v1061 = vpop.f32.mrf.mxu0
      %1062 = vdwg.mxu0
      %v1063 = vmul.f32 %v1058, 0.5
      %v1064 = vsel %vm396, %v1063, -inf
      %1065 = vmax.xlane.f32.xlu0 %v1064
      %v1066 = vpop.xlane.xlu0 %1065
      %v1067 = vsub.f32 %v1063, %v1066
      %v1068 = vmul.f32 %v1067, 1.442695
      %v1069 = vpow.pop %v1068
      %v1070 = vsel %vm396, %v1069, 0.0
      %1071 = vadd.xlane.f32.xlu0 %v1070
      %v1072 = vpop.xlane.xlu0 %1071
      %v1073 = vrcp.pop %v1072
      %v1074 = vmul.f32 %v1069, %v1073
      %v1075 = vpack.c.bf16 %v1074, %v1074
      %1076 = vrot.lane.b32.xlu0 %v344, 40
      %v1077 = vpop.permute.xlu0 %1076
      %v1079 = vsel %vm396, %v1075, 0
      %v1082 = vsel %vm414, %v1077, 0
      %1084 = vmatprep.subr.bf16.mxu0 0
      %1085 = vmatpush1.bf16.msra.mxu0 0
      %1086 = vmatprep.subr.bf16.mxu0 0
      %1087 = vmatpush1.bf16.msra.mxu0 0
      %1088 = vmatprep.subr.bf16.mxu0 0
      %1089 = vmatpush1.bf16.msra.mxu0 0
      %1090 = vmatprep.subr.bf16.mxu0 0
      %1091 = vmatpush1.bf16.msra.mxu0 0
      %1092 = vmatprep.subr.bf16.mxu0 0
      %1093 = vmatpush1.bf16.msra.mxu0 0
      %1094 = vmatprep.subr.bf16.mxu0 0
      %1095 = vmatpush1.bf16.msra.mxu0 0
      %1096 = vmatprep.subr.bf16.mxu0 0
      %1097 = vmatpush1.bf16.msra.mxu0 0
      %1098 = vmatprep.subr.bf16.mxu0 0
      %1099 = vmatpush1.bf16.msra.mxu0 %v1082
      %1100 = vmatprep.subr.bf16.mxu0 0
      %1101 = vmatpush2.bf16.msra.mxu0 0
      %1102 = vmatprep.subr.bf16.mxu0 0
      %1103 = vmatpush2.bf16.msra.mxu0 0
      %1104 = vmatprep.subr.bf16.mxu0 0
      %1105 = vmatpush2.bf16.msra.mxu0 0
      %1106 = vmatprep.subr.bf16.mxu0 0
      %1107 = vmatpush2.bf16.msra.mxu0 0
      %1108 = vmatprep.subr.bf16.mxu0 0
      %1109 = vmatpush2.bf16.msra.mxu0 0
      %1110 = vmatprep.subr.bf16.mxu0 0
      %1111 = vmatpush2.bf16.msra.mxu0 0
      %1112 = vmatprep.subr.bf16.mxu0 0
      %1113 = vmatpush2.bf16.msra.mxu0 0
      %1114 = vmatprep.subr.bf16.mxu0 0
      %1115 = vmatpush2.bf16.msra.mxu0 0
      %1116 = vmatprep.mubr.bf16.mxu0 0
      %1117 = vmatmul.mubr.bf16.gmra.mxu0 %v1079
      %v1118 = vpop.f32.mrf.mxu0
      %v1119 = vadd.f32 0.0, %v1118
      %v1120 = vpop.f32.mrf.mxu0
      %v1121 = vpop.f32.mrf.mxu0
      %v1122 = vpop.f32.mrf.mxu0
      %1123 = vdwg.mxu0
      %1124 = vrot.lane.b32.xlu0 %v344, 100
      %v1125 = vpop.permute.xlu0 %1124
      %1126 = vrot.lane.b32.xlu0 %v344, 68
      %v1127 = vpop.permute.xlu0 %1126
      %v1129 = vsel %vm348, %v1125, 0
      %v1132 = vsel %vm348, %v1127, 0
      %1134 = vmatprep.subr.bf16.mxu0 0
      %1135 = vmatpush1.bf16.xpose.msra.mxu0 0
      %1136 = vmatprep.subr.bf16.mxu0 0
      %1137 = vmatpush1.bf16.xpose.msra.mxu0 0
      %1138 = vmatprep.subr.bf16.mxu0 0
      %1139 = vmatpush1.bf16.xpose.msra.mxu0 0
      %1140 = vmatprep.subr.bf16.mxu0 0
      %1141 = vmatpush1.bf16.xpose.msra.mxu0 0
      %1142 = vmatprep.subr.bf16.mxu0 0
      %1143 = vmatpush1.bf16.xpose.msra.mxu0 0
      %1144 = vmatprep.subr.bf16.mxu0 0
      %1145 = vmatpush1.bf16.xpose.msra.mxu0 0
      %1146 = vmatprep.subr.bf16.mxu0 0
      %1147 = vmatpush1.bf16.xpose.msra.mxu0 0
      %1148 = vmatprep.subr.bf16.mxu0 0
      %1149 = vmatpush1.bf16.xpose.msra.mxu0 %v1132
      %1150 = vmatprep.subr.bf16.mxu0 0
      %1151 = vmatpush2.bf16.xpose.msra.mxu0 0
      %1152 = vmatprep.subr.bf16.mxu0 0
      %1153 = vmatpush2.bf16.xpose.msra.mxu0 0
      %1154 = vmatprep.subr.bf16.mxu0 0
      %1155 = vmatpush2.bf16.xpose.msra.mxu0 0
      %1156 = vmatprep.subr.bf16.mxu0 0
      %1157 = vmatpush2.bf16.xpose.msra.mxu0 0
      %1158 = vmatprep.subr.bf16.mxu0 0
      %1159 = vmatpush2.bf16.xpose.msra.mxu0 0
      %1160 = vmatprep.subr.bf16.mxu0 0
      %1161 = vmatpush2.bf16.xpose.msra.mxu0 0
      %1162 = vmatprep.subr.bf16.mxu0 0
      %1163 = vmatpush2.bf16.xpose.msra.mxu0 0
      %1164 = vmatprep.subr.bf16.mxu0 0
      %1165 = vmatpush2.bf16.xpose.msra.mxu0 0
      %1166 = vmatprep.mubr.bf16.mxu0 0
      %1167 = vmatmul.mubr.bf16.gmra.mxu0 %v1129
      %v1168 = vpop.f32.mrf.mxu0
      %v1169 = vadd.f32 0.0, %v1168
      %v1170 = vpop.f32.mrf.mxu0
      %v1171 = vpop.f32.mrf.mxu0
      %v1172 = vpop.f32.mrf.mxu0
      %1173 = vdwg.mxu0
      %v1174 = vmul.f32 %v1169, 0.5
      %v1175 = vsel %vm396, %v1174, -inf
      %1176 = vmax.xlane.f32.xlu0 %v1175
      %v1177 = vpop.xlane.xlu0 %1176
      %v1178 = vsub.f32 %v1174, %v1177
      %v1179 = vmul.f32 %v1178, 1.442695
      %v1180 = vpow.pop %v1179
      %v1181 = vsel %vm396, %v1180, 0.0
      %1182 = vadd.xlane.f32.xlu0 %v1181
      %v1183 = vpop.xlane.xlu0 %1182
      %v1184 = vrcp.pop %v1183
      %v1185 = vmul.f32 %v1180, %v1184
      %v1186 = vpack.c.bf16 %v1185, %v1185
      %1187 = vrot.lane.b32.xlu0 %v344, 36
      %v1188 = vpop.permute.xlu0 %1187
      %v1190 = vsel %vm396, %v1186, 0
      %v1193 = vsel %vm414, %v1188, 0
      %1195 = vmatprep.subr.bf16.mxu0 0
      %1196 = vmatpush1.bf16.msra.mxu0 0
      %1197 = vmatprep.subr.bf16.mxu0 0
      %1198 = vmatpush1.bf16.msra.mxu0 0
      %1199 = vmatprep.subr.bf16.mxu0 0
      %1200 = vmatpush1.bf16.msra.mxu0 0
      %1201 = vmatprep.subr.bf16.mxu0 0
      %1202 = vmatpush1.bf16.msra.mxu0 0
      %1203 = vmatprep.subr.bf16.mxu0 0
      %1204 = vmatpush1.bf16.msra.mxu0 0
      %1205 = vmatprep.subr.bf16.mxu0 0
      %1206 = vmatpush1.bf16.msra.mxu0 0
      %1207 = vmatprep.subr.bf16.mxu0 0
      %1208 = vmatpush1.bf16.msra.mxu0 0
      %1209 = vmatprep.subr.bf16.mxu0 0
      %1210 = vmatpush1.bf16.msra.mxu0 %v1193
      %1211 = vmatprep.subr.bf16.mxu0 0
      %1212 = vmatpush2.bf16.msra.mxu0 0
      %1213 = vmatprep.subr.bf16.mxu0 0
      %1214 = vmatpush2.bf16.msra.mxu0 0
      %1215 = vmatprep.subr.bf16.mxu0 0
      %1216 = vmatpush2.bf16.msra.mxu0 0
      %1217 = vmatprep.subr.bf16.mxu0 0
      %1218 = vmatpush2.bf16.msra.mxu0 0
      %1219 = vmatprep.subr.bf16.mxu0 0
      %1220 = vmatpush2.bf16.msra.mxu0 0
      %1221 = vmatprep.subr.bf16.mxu0 0
      %1222 = vmatpush2.bf16.msra.mxu0 0
      %1223 = vmatprep.subr.bf16.mxu0 0
      %1224 = vmatpush2.bf16.msra.mxu0 0
      %1225 = vmatprep.subr.bf16.mxu0 0
      %1226 = vmatpush2.bf16.msra.mxu0 0
      %1227 = vmatprep.mubr.bf16.mxu0 0
      %1228 = vmatmul.mubr.bf16.gmra.mxu0 %v1190
      %v1229 = vpop.f32.mrf.mxu0
      %v1230 = vadd.f32 0.0, %v1229
      %v1231 = vpop.f32.mrf.mxu0
      %v1232 = vpop.f32.mrf.mxu0
      %v1233 = vpop.f32.mrf.mxu0
      %1234 = vdwg.mxu0
      %1236 = vrot.lane.b32.xlu0 %v564, 4
      %v1237 = vpop.permute.xlu0 %1236
      %1240 = vrot.lane.b32.xlu0 %v675, 8
      %v1241 = vpop.permute.xlu0 %1240
      %1244 = vrot.lane.b32.xlu0 %v786, 12
      %v1245 = vpop.permute.xlu0 %1244
      %1248 = vrot.lane.b32.xlu0 %v897, 16
      %v1249 = vpop.permute.xlu0 %1248
      %1252 = vrot.lane.b32.xlu0 %v1008, 20
      %v1253 = vpop.permute.xlu0 %1252
      %1256 = vrot.lane.b32.xlu0 %v1119, 24
      %v1257 = vpop.permute.xlu0 %1256
      %1260 = vrot.lane.b32.xlu0 %v1230, 28
      %v1261 = vpop.permute.xlu0 %1260
      %v1263 = vsel %vm348, %v453, %v1237
      %v1264 = vsel %vm396, %v1263, %v1241
      %vm1265 = vcmask 97280
      %v1266 = vsel %vm1265, %v1264, %v1245
      %vm1267 = vcmask 130048
      %v1268 = vsel %vm1267, %v1266, %v1249
      %vm1269 = vcmask 162816
      %v1270 = vsel %vm1269, %v1268, %v1253
      %vm1271 = vcmask 195584
      %v1272 = vsel %vm1271, %v1270, %v1257
      %vm1273 = vcmask 228352
      %v1274 = vsel %vm1273, %v1272, %v1261
      %v1275 = vpack.c.bf16 %v1274, %v1274
      %v1276 = vld [vmem:[%s3] sm:$0xf]
      %v1277 = vld [vmem:[%s3 + $0x4] sm:$0xf]
      %v1278 = vld [vmem:[%s3 + $0x8] sm:$0xf]
      %v1279 = vld [vmem:[%s3 + $0xc] sm:$0xf]
      %v1280 = vld [vmem:[%s4] sm:$0x1]
      %v1282 = vlaneseq
      %v1283 = vshrl.u32 %v1282, 7
      %v1284 = vsub.s32 0, %v1283
      %v1285 = vrot.slane %v1280, %v1284
      %v1291 = vunpack.c.l.b16 %v1276
      %v1292 = vunpack.c.l.b16 %v1277
      %v1293 = vunpack.c.l.b16 %v1278
      %v1294 = vunpack.c.l.b16 %v1279
      %v1295 = vpack.c.b16 %v1292, %v1291
      %v1296 = vpack.c.b16 %v1294, %v1293
      %v1300 = vsel %vm300, %v1275, 0
      %1302 = vmatprep.subr.bf16.mxu0 0
      %1303 = vmatpush1.bf16.msra.mxu0 0
      %1304 = vmatprep.subr.bf16.mxu0 0
      %1305 = vmatpush1.bf16.msra.mxu0 0
      %1306 = vmatprep.subr.bf16.mxu0 0
      %1307 = vmatpush1.bf16.msra.mxu0 0
      %1308 = vmatprep.subr.bf16.mxu0 0
      %1309 = vmatpush1.bf16.msra.mxu0 0
      %1310 = vmatprep.subr.bf16.mxu0 0
      %1311 = vmatpush1.bf16.msra.mxu0 0
      %1312 = vmatprep.subr.bf16.mxu0 0
      %1313 = vmatpush1.bf16.msra.mxu0 0
      %1314 = vmatprep.subr.bf16.mxu0 0
      %1315 = vmatpush1.bf16.msra.mxu0 %v1296
      %1316 = vmatprep.subr.bf16.mxu0 0
      %1317 = vmatpush1.bf16.msra.mxu0 %v1295
      %1318 = vmatprep.subr.bf16.mxu0 0
      %1319 = vmatpush2.bf16.msra.mxu0 0
      %1320 = vmatprep.subr.bf16.mxu0 0
      %1321 = vmatpush2.bf16.msra.mxu0 0
      %1322 = vmatprep.subr.bf16.mxu0 0
      %1323 = vmatpush2.bf16.msra.mxu0 0
      %1324 = vmatprep.subr.bf16.mxu0 0
      %1325 = vmatpush2.bf16.msra.mxu0 0
      %1326 = vmatprep.subr.bf16.mxu0 0
      %1327 = vmatpush2.bf16.msra.mxu0 0
      %1328 = vmatprep.subr.bf16.mxu0 0
      %1329 = vmatpush2.bf16.msra.mxu0 0
      %1330 = vmatprep.subr.bf16.mxu0 0
      %1331 = vmatpush2.bf16.msra.mxu0 0
      %1332 = vmatprep.subr.bf16.mxu0 0
      %1333 = vmatpush2.bf16.msra.mxu0 0
      %1334 = vmatprep.mubr.bf16.mxu0 0
      %1335 = vmatmul.mubr.bf16.gmra.mxu0 %v1300
      %v1336 = vpop.f32.mrf.mxu0
      %v1337 = vadd.f32 %v1285, %v1336
      %v1338 = vpop.f32.mrf.mxu0
      %v1339 = vpop.f32.mrf.mxu0
      %v1340 = vpop.f32.mrf.mxu0
      %1341 = vdwg.mxu0
      %v1342 = vadd.f32 %v275, %v1337
      %v1343 = vsel %vm300, %v1342, 0.0
      %1344 = vadd.xlane.f32.xlu0 %v1343
      %v1345 = vpop.xlane.xlu0 %1344
      %v1346 = vrcp.pop 32.0
      %v1347 = vmul.f32 %v1345, %v1346
      %v1348 = vsub.f32 %v1342, %v1347
      %v1349 = vmul.f32 %v1348, %v1348
      %v1350 = vsel %vm300, %v1349, 0.0
      %1351 = vadd.xlane.f32.xlu0 %v1350
      %v1352 = vpop.xlane.xlu0 %1351
      %v1353 = vmul.f32 %v1352, %v1346
      %v1354 = vadd.f32 %v1353, 1e-05
      %v1355 = vrsqrt.pop %v1354
      %v1356 = vmul.f32 %v1348, %v1355
      %v1357 = vld [vmem:[%s5] sm:$0x1]
      %v1359 = vlaneseq
      %v1360 = vshrl.u32 %v1359, 7
      %v1361 = vsub.s32 0, %v1360
      %v1362 = vrot.slane %v1357, %v1361
      %v1364 = vmul.f32 %v1356, %v1362
      %v1365 = vld [vmem:[%s6] sm:$0x1]
      %v1367 = vlaneseq
      %v1368 = vshrl.u32 %v1367, 7
      %v1369 = vsub.s32 0, %v1368
      %v1370 = vrot.slane %v1365, %v1369
      %v1372 = vadd.f32 %v1364, %v1370
      %1373 = vst.msk [vmem:[%s273] sm:$0xff] %vm300, %v1372
      %p1374 = scmp.lt.s32.totalorder %s18, 1
      %s1375 = scalar_select %p1374, %s18, 1
      %s1376 = smul.addr %s1375, 8
      %s1377 = scalar_lea.vmem %s7, %s1376
      // Predicated region
      $region49: #{extractive_transformer_encoder.6} parent=47 // pred_check
        %p1378 = pneg %p188
      $region50: #{extractive_transformer_encoder.6} parent=47 // pred_check_branch
        %1380 = sbr.rel (%p1378) target = $region52
      $region51: #{extractive_transformer_encoder.6} parent=47 // pred_region
        _
      $region52: #{extractive_transformer_encoder.6} parent=47 // pred_fallthru
        _
    $region48: #{extractive_transformer_encoder.6} parent=5 // pred_fallthru
      _
    %p1381 = scmp.le.s32.totalorder 2, %s13
    // Predicated region
    $region53: #{extractive_transformer_encoder.6} parent=5 // pred_check
      %p1382 = pneg %p1381
    $region54: #{extractive_transformer_encoder.6} parent=5 // pred_check_branch
      %1384 = sbr.rel (%p1382) target = $region56
    $region55: #{extractive_transformer_encoder.6} parent=5 // pred_region
      %s1385 = ssub.s32 %s13, 2
      // Predicated region
      $region57: #{extractive_transformer_encoder.6} parent=55 // pred_check
        %p1386 = pneg %p194
      $region58: #{extractive_transformer_encoder.6} parent=55 // pred_check_branch
        %1388 = sbr.rel (%p1386) target = $region60
      $region59: #{extractive_transformer_encoder.6} parent=55 // pred_region
        %p1389 = scmp.lt.s32.totalorder %s19, 1
        %s1390 = scalar_select %p1389, %s19, 1
        %s1391 = smul.addr %s1390, 8
        %s1392 = scalar_lea.vmem %s7, %s1391
      $region60: #{extractive_transformer_encoder.6} parent=55 // pred_fallthru
        _
    $region56: #{extractive_transformer_encoder.6} parent=5 // pred_fallthru
      _
  $region6: #{extractive_transformer_encoder.6} parent=0 // loop_footer
    %s17 = sadd.s32 1, %s13
  $region7: #{extractive_transformer_encoder.6} parent=0 // loop_footer_branch
    %12 = sbr.rel target = $region3
  $region8: #{extractive_transformer_encoder.6} parent=0 // loop_exit
    _

// kernel: extractive_transformer_encoder.4
$region0: #{extractive_transformer_encoder.4}
  #allocation0 [shape = 'u32[]', space=smem, size = 0x4, offset = 0x4, fixed_abs, tag = 'smem constant byte address 0x4 - core index']
  #allocation1 [shape = 'u32[144,128]{1,0:T(1,128)}', space=vmem, size = 0x12000, scoped, tag = 'internal scratch']
  %s0 = inlined_call_operand.vmem [shape: f32[2,8,32], index: 0, kind: input, shape index: {}]
  %s1 = inlined_call_operand.vmem [shape: f32[1,8,32], index: 1, kind: input, shape index: {}]
  %s2 = inlined_call_operand.vmem [shape: bf16[32,96], index: 2, kind: input, shape index: {}]
  %s3 = inlined_call_operand.vmem [shape: f32[1,96], index: 3, kind: input, shape index: {}]
  %s4 = inlined_call_operand.vmem [shape: bf16[32,32], index: 4, kind: input, shape index: {}]
  %s5 = inlined_call_operand.vmem [shape: f32[1,32], index: 5, kind: input, shape index: {}]
  %s6 = inlined_call_operand.vmem [shape: f32[1,32], index: 6, kind: input, shape index: {}]
  %s7 = inlined_call_operand.vmem [shape: f32[1,32], index: 7, kind: input, shape index: {}]
  %s8 = inlined_call_operand.vmem [shape: f32[2,8,32], index: 8, kind: output, shape index: {}]
  %s9 = sld [smem:[#allocation0]]
  $region65: #{extractive_transformer_encoder.4} parent=0
    _
  %s11 = ssub.s32 1, %s9
  %s12 = scalar_select 0, %s11, %s9
  loop: start=0, step=1, limit=4
  $region2: #{extractive_transformer_encoder.4} parent=0 // loop_pre_header
    _
  $region3: #{extractive_transformer_encoder.4} parent=0 // loop_header
    %s14 = sphi 0, %s18
    %p15 = scmp.ge.s32.totalorder %s14, 4
    %s24 = sphi 0, %s26
    %s27 = sphi 0, %s24
    %s28 = sphi 0, %s27
    %s44 = sphi 0, %s28
    %s48 = sphi 0, %s48
    %s50 = sphi 0, %s48
    %s51 = sphi 0, %s50
    %s65 = sphi 0, %s51
    %s69 = sphi 0, %s69
    %s71 = sphi 0, %s69
    %s72 = sphi 0, %s71
    %s86 = sphi 0, %s72
    %s90 = sphi 0, %s90
    %s92 = sphi 0, %s90
    %s93 = sphi 0, %s92
    %s107 = sphi 0, %s93
    %s111 = sphi 0, %s111
    %s113 = sphi 0, %s111
    %s114 = sphi 0, %s113
    %s128 = sphi 0, %s114
    %s132 = sphi 0, %s132
    %s134 = sphi 0, %s132
    %s135 = sphi 0, %s134
    %s149 = sphi 0, %s135
    %s153 = sphi 0, %s153
    %s155 = sphi 0, %s153
    %s156 = sphi 0, %s155
    %s170 = sphi 0, %s156
    %s174 = sphi 0, %s174
    %s176 = sphi 0, %s174
    %s177 = sphi 0, %s176
    %s191 = sphi 0, %s177
    %s197 = sphi 0, %s199
    %s200 = sphi 0, %s197
    %s201 = sphi 0, %s200
    %s217 = sphi 0, %s201
  $region4: #{extractive_transformer_encoder.4} parent=0 // loop_header_branch
    %17 = sbr.rel (%p15) target = $region8
  $region5: #{extractive_transformer_encoder.4} parent=0 // loop_body
    %s19 = ssub.s32 %s14, 1
    %s20 = ssub.s32 %s14, 2
    %s21 = sadd.s32 %s14, 1
    %s22 = ssub.s32 %s14, %s21
    %p23 = scmp.eq.s32.totalorder %s22, 0
    %s25 = sadd.s32 %s24, 1
    %s26 = scalar_select %p23, %s24, %s25
    %p29 = pneg %p23
    %p30 = scmp.eq.s32.totalorder %s14, 1
    %p31 = por %p29, %p30
    %p32 = scmp.ne.s32.totalorder %s24, %s27
    %p33 = scmp.eq.s32.totalorder %s14, 0
    %p34 = por %p32, %p33
    %p35 = scmp.ne.s32.totalorder %s24, %s27
    %p36 = scmp.eq.s32.totalorder %s19, 1
    %p37 = por %p35, %p36
    %p38 = scmp.ne.s32.totalorder %s27, %s28
    %p39 = scmp.eq.s32.totalorder %s19, 0
    %p40 = por %p38, %p39
    %p41 = scmp.ne.s32.totalorder %s27, %s28
    %p42 = scmp.eq.s32.totalorder %s20, 1
    %p43 = por %p41, %p42
    %p45 = scmp.ne.s32.totalorder %s28, %s44
    %p46 = scmp.eq.s32.totalorder %s20, 0
    %p47 = por %p45, %p46
    %s49 = sadd.s32 %s48, 1
    %p52 = scmp.eq.s32.totalorder %s14, 1
    %p53 = scmp.ne.s32.totalorder %s48, %s50
    %p54 = scmp.eq.s32.totalorder %s14, 0
    %p55 = por %p53, %p54
    %p56 = scmp.ne.s32.totalorder %s48, %s50
    %p57 = scmp.eq.s32.totalorder %s19, 1
    %p58 = por %p56, %p57
    %p59 = scmp.ne.s32.totalorder %s50, %s51
    %p60 = scmp.eq.s32.totalorder %s19, 0
    %p61 = por %p59, %p60
    %p62 = scmp.ne.s32.totalorder %s50, %s51
    %p63 = scmp.eq.s32.totalorder %s20, 1
    %p64 = por %p62, %p63
    %p66 = scmp.ne.s32.totalorder %s51, %s65
    %p67 = scmp.eq.s32.totalorder %s20, 0
    %p68 = por %p66, %p67
    %s70 = sadd.s32 %s69, 1
    %p73 = scmp.eq.s32.totalorder %s14, 1
    %p74 = scmp.ne.s32.totalorder %s69, %s71
    %p75 = scmp.eq.s32.totalorder %s14, 0
    %p76 = por %p74, %p75
    %p77 = scmp.ne.s32.totalorder %s69, %s71
    %p78 = scmp.eq.s32.totalorder %s19, 1
    %p79 = por %p77, %p78
    %p80 = scmp.ne.s32.totalorder %s71, %s72
    %p81 = scmp.eq.s32.totalorder %s19, 0
    %p82 = por %p80, %p81
    %p83 = scmp.ne.s32.totalorder %s71, %s72
    %p84 = scmp.eq.s32.totalorder %s20, 1
    %p85 = por %p83, %p84
    %p87 = scmp.ne.s32.totalorder %s72, %s86
    %p88 = scmp.eq.s32.totalorder %s20, 0
    %p89 = por %p87, %p88
    %s91 = sadd.s32 %s90, 1
    %p94 = scmp.eq.s32.totalorder %s14, 1
    %p95 = scmp.ne.s32.totalorder %s90, %s92
    %p96 = scmp.eq.s32.totalorder %s14, 0
    %p97 = por %p95, %p96
    %p98 = scmp.ne.s32.totalorder %s90, %s92
    %p99 = scmp.eq.s32.totalorder %s19, 1
    %p100 = por %p98, %p99
    %p101 = scmp.ne.s32.totalorder %s92, %s93
    %p102 = scmp.eq.s32.totalorder %s19, 0
    %p103 = por %p101, %p102
    %p104 = scmp.ne.s32.totalorder %s92, %s93
    %p105 = scmp.eq.s32.totalorder %s20, 1
    %p106 = por %p104, %p105
    %p108 = scmp.ne.s32.totalorder %s93, %s107
    %p109 = scmp.eq.s32.totalorder %s20, 0
    %p110 = por %p108, %p109
    %s112 = sadd.s32 %s111, 1
    %p115 = scmp.eq.s32.totalorder %s14, 1
    %p116 = scmp.ne.s32.totalorder %s111, %s113
    %p117 = scmp.eq.s32.totalorder %s14, 0
    %p118 = por %p116, %p117
    %p119 = scmp.ne.s32.totalorder %s111, %s113
    %p120 = scmp.eq.s32.totalorder %s19, 1
    %p121 = por %p119, %p120
    %p122 = scmp.ne.s32.totalorder %s113, %s114
    %p123 = scmp.eq.s32.totalorder %s19, 0
    %p124 = por %p122, %p123
    %p125 = scmp.ne.s32.totalorder %s113, %s114
    %p126 = scmp.eq.s32.totalorder %s20, 1
    %p127 = por %p125, %p126
    %p129 = scmp.ne.s32.totalorder %s114, %s128
    %p130 = scmp.eq.s32.totalorder %s20, 0
    %p131 = por %p129, %p130
    %s133 = sadd.s32 %s132, 1
    %p136 = scmp.eq.s32.totalorder %s14, 1
    %p137 = scmp.ne.s32.totalorder %s132, %s134
    %p138 = scmp.eq.s32.totalorder %s14, 0
    %p139 = por %p137, %p138
    %p140 = scmp.ne.s32.totalorder %s132, %s134
    %p141 = scmp.eq.s32.totalorder %s19, 1
    %p142 = por %p140, %p141
    %p143 = scmp.ne.s32.totalorder %s134, %s135
    %p144 = scmp.eq.s32.totalorder %s19, 0
    %p145 = por %p143, %p144
    %p146 = scmp.ne.s32.totalorder %s134, %s135
    %p147 = scmp.eq.s32.totalorder %s20, 1
    %p148 = por %p146, %p147
    %p150 = scmp.ne.s32.totalorder %s135, %s149
    %p151 = scmp.eq.s32.totalorder %s20, 0
    %p152 = por %p150, %p151
    %s154 = sadd.s32 %s153, 1
    %p157 = scmp.eq.s32.totalorder %s14, 1
    %p158 = scmp.ne.s32.totalorder %s153, %s155
    %p159 = scmp.eq.s32.totalorder %s14, 0
    %p160 = por %p158, %p159
    %p161 = scmp.ne.s32.totalorder %s153, %s155
    %p162 = scmp.eq.s32.totalorder %s19, 1
    %p163 = por %p161, %p162
    %p164 = scmp.ne.s32.totalorder %s155, %s156
    %p165 = scmp.eq.s32.totalorder %s19, 0
    %p166 = por %p164, %p165
    %p167 = scmp.ne.s32.totalorder %s155, %s156
    %p168 = scmp.eq.s32.totalorder %s20, 1
    %p169 = por %p167, %p168
    %p171 = scmp.ne.s32.totalorder %s156, %s170
    %p172 = scmp.eq.s32.totalorder %s20, 0
    %p173 = por %p171, %p172
    %s175 = sadd.s32 %s174, 1
    %p178 = scmp.eq.s32.totalorder %s14, 1
    %p179 = scmp.ne.s32.totalorder %s174, %s176
    %p180 = scmp.eq.s32.totalorder %s14, 0
    %p181 = por %p179, %p180
    %p182 = scmp.ne.s32.totalorder %s174, %s176
    %p183 = scmp.eq.s32.totalorder %s19, 1
    %p184 = por %p182, %p183
    %p185 = scmp.ne.s32.totalorder %s176, %s177
    %p186 = scmp.eq.s32.totalorder %s19, 0
    %p187 = por %p185, %p186
    %p188 = scmp.ne.s32.totalorder %s176, %s177
    %p189 = scmp.eq.s32.totalorder %s20, 1
    %p190 = por %p188, %p189
    %p192 = scmp.ne.s32.totalorder %s177, %s191
    %p193 = scmp.eq.s32.totalorder %s20, 0
    %p194 = por %p192, %p193
    %s195 = ssub.s32 %s14, %s21
    %p196 = scmp.eq.s32.totalorder %s195, 0
    %s198 = sadd.s32 %s197, 1
    %s199 = scalar_select %p196, %s197, %s198
    %p202 = pneg %p196
    %p203 = scmp.eq.s32.totalorder %s14, 1
    %p204 = por %p202, %p203
    %p205 = scmp.ne.s32.totalorder %s197, %s200
    %p206 = scmp.eq.s32.totalorder %s14, 0
    %p207 = por %p205, %p206
    %p208 = scmp.ne.s32.totalorder %s197, %s200
    %p209 = scmp.eq.s32.totalorder %s19, 1
    %p210 = por %p208, %p209
    %p211 = scmp.ne.s32.totalorder %s200, %s201
    %p212 = scmp.eq.s32.totalorder %s19, 0
    %p213 = por %p211, %p212
    %p214 = scmp.ne.s32.totalorder %s200, %s201
    %p215 = scmp.eq.s32.totalorder %s20, 1
    %p216 = por %p214, %p215
    %p218 = scmp.ne.s32.totalorder %s201, %s217
    %p219 = scmp.eq.s32.totalorder %s20, 0
    %p220 = por %p218, %p219
    %p221 = scmp.le.s32.totalorder 1, %s14
    %p222 = scmp.lt.s32.totalorder %s14, 3
    %p223 = pnand %p221, %p222
    %p224 = pneg %p223
    // Predicated region
    $region9: #{extractive_transformer_encoder.4} parent=5 // pred_check
      _
    $region10: #{extractive_transformer_encoder.4} parent=5 // pred_check_branch
      %226 = sbr.rel (%p223) target = $region12
    $region11: #{extractive_transformer_encoder.4} parent=5 // pred_region
      %s227 = ssub.s32 %s14, 1
      // Predicated region
      $region13: #{extractive_transformer_encoder.4} parent=11 // pred_check
        %p228 = pneg %p61
      $region14: #{extractive_transformer_encoder.4} parent=11 // pred_check_branch
        %230 = sbr.rel (%p228) target = $region16
      $region15: #{extractive_transformer_encoder.4} parent=11 // pred_region
        _
      $region16: #{extractive_transformer_encoder.4} parent=11 // pred_fallthru
        _
      // Predicated region
      $region17: #{extractive_transformer_encoder.4} parent=11 // pred_check
        %p231 = pneg %p82
      $region18: #{extractive_transformer_encoder.4} parent=11 // pred_check_branch
        %233 = sbr.rel (%p231) target = $region20
      $region19: #{extractive_transformer_encoder.4} parent=11 // pred_region
        _
      $region20: #{extractive_transformer_encoder.4} parent=11 // pred_fallthru
        _
      // Predicated region
      $region21: #{extractive_transformer_encoder.4} parent=11 // pred_check
        %p234 = pneg %p103
      $region22: #{extractive_transformer_encoder.4} parent=11 // pred_check_branch
        %236 = sbr.rel (%p234) target = $region24
      $region23: #{extractive_transformer_encoder.4} parent=11 // pred_region
        _
      $region24: #{extractive_transformer_encoder.4} parent=11 // pred_fallthru
        _
      // Predicated region
      $region25: #{extractive_transformer_encoder.4} parent=11 // pred_check
        %p237 = pneg %p124
      $region26: #{extractive_transformer_encoder.4} parent=11 // pred_check_branch
        %239 = sbr.rel (%p237) target = $region28
      $region27: #{extractive_transformer_encoder.4} parent=11 // pred_region
        _
      $region28: #{extractive_transformer_encoder.4} parent=11 // pred_fallthru
        _
      // Predicated region
      $region29: #{extractive_transformer_encoder.4} parent=11 // pred_check
        %p240 = pneg %p145
      $region30: #{extractive_transformer_encoder.4} parent=11 // pred_check_branch
        %242 = sbr.rel (%p240) target = $region32
      $region31: #{extractive_transformer_encoder.4} parent=11 // pred_region
        _
      $region32: #{extractive_transformer_encoder.4} parent=11 // pred_fallthru
        _
      // Predicated region
      $region33: #{extractive_transformer_encoder.4} parent=11 // pred_check
        %p243 = pneg %p166
      $region34: #{extractive_transformer_encoder.4} parent=11 // pred_check_branch
        %245 = sbr.rel (%p243) target = $region36
      $region35: #{extractive_transformer_encoder.4} parent=11 // pred_region
        _
      $region36: #{extractive_transformer_encoder.4} parent=11 // pred_fallthru
        _
      // Predicated region
      $region37: #{extractive_transformer_encoder.4} parent=11 // pred_check
        %p246 = pneg %p187
      $region38: #{extractive_transformer_encoder.4} parent=11 // pred_check_branch
        %248 = sbr.rel (%p246) target = $region40
      $region39: #{extractive_transformer_encoder.4} parent=11 // pred_region
        _
      $region40: #{extractive_transformer_encoder.4} parent=11 // pred_fallthru
        _
    $region12: #{extractive_transformer_encoder.4} parent=5 // pred_fallthru
      _
    %p249 = scmp.lt.s32.totalorder %s14, 2
    // Predicated region
    $region41: #{extractive_transformer_encoder.4} parent=5 // pred_check
      %p250 = pneg %p249
    $region42: #{extractive_transformer_encoder.4} parent=5 // pred_check_branch
      %252 = sbr.rel (%p250) target = $region44
    $region43: #{extractive_transformer_encoder.4} parent=5 // pred_region
      // Predicated region
      $region45: #{extractive_transformer_encoder.4} parent=43 // pred_check
        %p253 = pneg %p34
      $region46: #{extractive_transformer_encoder.4} parent=43 // pred_check_branch
        %255 = sbr.rel (%p253) target = $region48
      $region47: #{extractive_transformer_encoder.4} parent=43 // pred_region
        %p256 = scmp.lt.s32.totalorder %s14, 1
        %s257 = scalar_select %p256, %s14, 1
        %s258 = smul.addr %s257, 8
        %s259 = scalar_lea.vmem %s0, %s258
      $region48: #{extractive_transformer_encoder.4} parent=43 // pred_fallthru
        _
    $region44: #{extractive_transformer_encoder.4} parent=5 // pred_fallthru
      _
    %p260 = scmp.le.s32.totalorder 1, %s14
    %p261 = scmp.lt.s32.totalorder %s14, 3
    %p262 = pnand %p260, %p261
    %p263 = pneg %p262
    // Predicated region
    $region49: #{extractive_transformer_encoder.4} parent=5 // pred_check
      _
    $region50: #{extractive_transformer_encoder.4} parent=5 // pred_check_branch
      %265 = sbr.rel (%p262) target = $region52
    $region51: #{extractive_transformer_encoder.4} parent=5 // pred_region
      %s266 = ssub.s32 %s14, 1
      %p267 = scmp.lt.s32.totalorder %s19, 1
      %s268 = scalar_select %p267, %s19, 1
      %s269 = smul.addr %s268, 8
      %s270 = scalar_lea.vmem %s0, %s269
      %p271 = pneg %p40
      %p272 = pneg %p37
      %p273 = pneg %p61
      %p274 = pneg %p58
      %p275 = pneg %p82
      %p276 = pneg %p79
      %p277 = pneg %p103
      %p278 = pneg %p100
      %p279 = pneg %p124
      %p280 = pneg %p121
      %p281 = pneg %p145
      %p282 = pneg %p142
      %p283 = pneg %p166
      %p284 = pneg %p163
      %p285 = pneg %p187
      %p286 = pneg %p184
      %p287 = pneg %p213
      %p288 = pneg %p210
      %p289 = scmp.lt.s32.totalorder %s19, 1
      %s290 = scalar_select %p289, %s19, 1
      %s291 = smul.addr %s290, 8
      %s292 = scalar_lea.vmem %s8, %s291
      %p293 = scmp.lt.s32.totalorder %s19, 1
      %s294 = scalar_select %p293, %s19, 1
      %s295 = smul.addr %s294, 8
      %s296 = scalar_lea.vmem %s0, %s295
      %p297 = scmp.lt.s32.totalorder %s19, 1
      %s298 = scalar_select %p297, %s19, 1
      %s299 = smul.addr %s298, 8
      %s300 = scalar_lea.vmem %s8, %s299
      %v302 = vld [vmem:[%s296] sm:$0xff]
      %v303 = vld [vmem:[%s1] sm:$0xff]
      %v304 = vadd.f32 %v302, %v303
      %v305 = vpack.c.bf16 %v304, %v304
      %v306 = vld [vmem:[%s2] sm:$0xf]
      %v307 = vld [vmem:[%s2 + $0x4] sm:$0xf]
      %v308 = vld [vmem:[%s2 + $0x8] sm:$0xf]
      %v309 = vld [vmem:[%s2 + $0xc] sm:$0xf]
      %v310 = vld [vmem:[%s3] sm:$0x1]
      %v312 = vlaneseq
      %v313 = vshrl.u32 %v312, 7
      %v314 = vsub.s32 0, %v313
      %v315 = vrot.slane %v310, %v314
      %v321 = vunpack.c.l.b16 %v306
      %v322 = vunpack.c.l.b16 %v307
      %v323 = vunpack.c.l.b16 %v308
      %v324 = vunpack.c.l.b16 %v309
      %v325 = vpack.c.b16 %v322, %v321
      %v326 = vpack.c.b16 %v324, %v323
      %vm329 = vcmask 261120
      %v331 = vsel %vm329, %v305, 0
      %333 = vmatprep.subr.bf16.mxu0 0
      %334 = vmatpush1.bf16.msra.mxu0 0
      %335 = vmatprep.subr.bf16.mxu0 0
      %336 = vmatpush1.bf16.msra.mxu0 0
      %337 = vmatprep.subr.bf16.mxu0 0
      %338 = vmatpush1.bf16.msra.mxu0 0
      %339 = vmatprep.subr.bf16.mxu0 0
      %340 = vmatpush1.bf16.msra.mxu0 0
      %341 = vmatprep.subr.bf16.mxu0 0
      %342 = vmatpush1.bf16.msra.mxu0 0
      %343 = vmatprep.subr.bf16.mxu0 0
      %344 = vmatpush1.bf16.msra.mxu0 0
      %345 = vmatprep.subr.bf16.mxu0 0
      %346 = vmatpush1.bf16.msra.mxu0 %v326
      %347 = vmatprep.subr.bf16.mxu0 0
      %348 = vmatpush1.bf16.msra.mxu0 %v325
      %349 = vmatprep.subr.bf16.mxu0 0
      %350 = vmatpush2.bf16.msra.mxu0 0
      %351 = vmatprep.subr.bf16.mxu0 0
      %352 = vmatpush2.bf16.msra.mxu0 0
      %353 = vmatprep.subr.bf16.mxu0 0
      %354 = vmatpush2.bf16.msra.mxu0 0
      %355 = vmatprep.subr.bf16.mxu0 0
      %356 = vmatpush2.bf16.msra.mxu0 0
      %357 = vmatprep.subr.bf16.mxu0 0
      %358 = vmatpush2.bf16.msra.mxu0 0
      %359 = vmatprep.subr.bf16.mxu0 0
      %360 = vmatpush2.bf16.msra.mxu0 0
      %361 = vmatprep.subr.bf16.mxu0 0
      %362 = vmatpush2.bf16.msra.mxu0 0
      %363 = vmatprep.subr.bf16.mxu0 0
      %364 = vmatpush2.bf16.msra.mxu0 0
      %365 = vmatprep.mubr.bf16.mxu0 0
      %366 = vmatmul.mubr.bf16.gmra.mxu0 %v331
      %v367 = vpop.f32.mrf.mxu0
      %v368 = vadd.f32 %v315, %v367
      %v369 = vpop.f32.mrf.mxu0
      %v370 = vpop.f32.mrf.mxu0
      %v371 = vpop.f32.mrf.mxu0
      %372 = vdwg.mxu0
      %v373 = vpack.c.bf16 %v368, %v368
      %375 = vrot.lane.b32.xlu0 %v373, 96
      %v376 = vpop.permute.xlu0 %375
      %vm377 = vcmask 31744
      %v379 = vsel %vm377, %v373, 0
      %v382 = vsel %vm377, %v376, 0
      %384 = vmatprep.subr.bf16.mxu0 0
      %385 = vmatpush1.bf16.xpose.msra.mxu0 0
      %386 = vmatprep.subr.bf16.mxu0 0
      %387 = vmatpush1.bf16.xpose.msra.mxu0 0
      %388 = vmatprep.subr.bf16.mxu0 0
      %389 = vmatpush1.bf16.xpose.msra.mxu0 0
      %390 = vmatprep.subr.bf16.mxu0 0
      %391 = vmatpush1.bf16.xpose.msra.mxu0 0
      %392 = vmatprep.subr.bf16.mxu0 0
      %393 = vmatpush1.bf16.xpose.msra.mxu0 0
      %394 = vmatprep.subr.bf16.mxu0 0
      %395 = vmatpush1.bf16.xpose.msra.mxu0 0
      %396 = vmatprep.subr.bf16.mxu0 0
      %397 = vmatpush1.bf16.xpose.msra.mxu0 0
      %398 = vmatprep.subr.bf16.mxu0 0
      %399 = vmatpush1.bf16.xpose.msra.mxu0 %v382
      %400 = vmatprep.subr.bf16.mxu0 0
      %401 = vmatpush2.bf16.xpose.msra.mxu0 0
      %402 = vmatprep.subr.bf16.mxu0 0
      %403 = vmatpush2.bf16.xpose.msra.mxu0 0
      %404 = vmatprep.subr.bf16.mxu0 0
      %405 = vmatpush2.bf16.xpose.msra.mxu0 0
      %406 = vmatprep.subr.bf16.mxu0 0
      %407 = vmatpush2.bf16.xpose.msra.mxu0 0
      %408 = vmatprep.subr.bf16.mxu0 0
      %409 = vmatpush2.bf16.xpose.msra.mxu0 0
      %410 = vmatprep.subr.bf16.mxu0 0
      %411 = vmatpush2.bf16.xpose.msra.mxu0 0
      %412 = vmatprep.subr.bf16.mxu0 0
      %413 = vmatpush2.bf16.xpose.msra.mxu0 0
      %414 = vmatprep.subr.bf16.mxu0 0
      %415 = vmatpush2.bf16.xpose.msra.mxu0 0
      %416 = vmatprep.mubr.bf16.mxu0 0
      %417 = vmatmul.mubr.bf16.gmra.mxu0 %v379
      %v418 = vpop.f32.mrf.mxu0
      %v419 = vadd.f32 0.0, %v418
      %v420 = vpop.f32.mrf.mxu0
      %v421 = vpop.f32.mrf.mxu0
      %v422 = vpop.f32.mrf.mxu0
      %423 = vdwg.mxu0
      %v424 = vmul.f32 %v419, 0.5
      %vm425 = vcmask 64512
      %v426 = vsel %vm425, %v424, -inf
      %427 = vmax.xlane.f32.xlu0 %v426
      %v428 = vpop.xlane.xlu0 %427
      %v429 = vsub.f32 %v424, %v428
      %v430 = vmul.f32 %v429, 1.442695
      %v431 = vpow.pop %v430
      %v432 = vsel %vm425, %v431, 0.0
      %433 = vadd.xlane.f32.xlu0 %v432
      %v434 = vpop.xlane.xlu0 %433
      %v435 = vrcp.pop %v434
      %v436 = vmul.f32 %v431, %v435
      %v437 = vpack.c.bf16 %v436, %v436
      %438 = vrot.lane.b32.xlu0 %v373, 64
      %v439 = vpop.permute.xlu0 %438
      %v441 = vsel %vm425, %v437, 0
      %vm443 = vcmask 1043456
      %v445 = vsel %vm443, %v439, 0
      %447 = vmatprep.subr.bf16.mxu0 0
      %448 = vmatpush1.bf16.msra.mxu0 0
      %449 = vmatprep.subr.bf16.mxu0 0
      %450 = vmatpush1.bf16.msra.mxu0 0
      %451 = vmatprep.subr.bf16.mxu0 0
      %452 = vmatpush1.bf16.msra.mxu0 0
      %453 = vmatprep.subr.bf16.mxu0 0
      %454 = vmatpush1.bf16.msra.mxu0 0
      %455 = vmatprep.subr.bf16.mxu0 0
      %456 = vmatpush1.bf16.msra.mxu0 0
      %457 = vmatprep.subr.bf16.mxu0 0
      %458 = vmatpush1.bf16.msra.mxu0 0
      %459 = vmatprep.subr.bf16.mxu0 0
      %460 = vmatpush1.bf16.msra.mxu0 0
      %461 = vmatprep.subr.bf16.mxu0 0
      %462 = vmatpush1.bf16.msra.mxu0 %v445
      %463 = vmatprep.subr.bf16.mxu0 0
      %464 = vmatpush2.bf16.msra.mxu0 0
      %465 = vmatprep.subr.bf16.mxu0 0
      %466 = vmatpush2.bf16.msra.mxu0 0
      %467 = vmatprep.subr.bf16.mxu0 0
      %468 = vmatpush2.bf16.msra.mxu0 0
      %469 = vmatprep.subr.bf16.mxu0 0
      %470 = vmatpush2.bf16.msra.mxu0 0
      %471 = vmatprep.subr.bf16.mxu0 0
      %472 = vmatpush2.bf16.msra.mxu0 0
      %473 = vmatprep.subr.bf16.mxu0 0
      %474 = vmatpush2.bf16.msra.mxu0 0
      %475 = vmatprep.subr.bf16.mxu0 0
      %476 = vmatpush2.bf16.msra.mxu0 0
      %477 = vmatprep.subr.bf16.mxu0 0
      %478 = vmatpush2.bf16.msra.mxu0 0
      %479 = vmatprep.mubr.bf16.mxu0 0
      %480 = vmatmul.mubr.bf16.gmra.mxu0 %v441
      %v481 = vpop.f32.mrf.mxu0
      %v482 = vadd.f32 0.0, %v481
      %v483 = vpop.f32.mrf.mxu0
      %v484 = vpop.f32.mrf.mxu0
      %v485 = vpop.f32.mrf.mxu0
      %486 = vdwg.mxu0
      %487 = vrot.lane.b32.xlu0 %v373, 124
      %v488 = vpop.permute.xlu0 %487
      %489 = vrot.lane.b32.xlu0 %v373, 92
      %v490 = vpop.permute.xlu0 %489
      %v492 = vsel %vm377, %v488, 0
      %v495 = vsel %vm377, %v490, 0
      %497 = vmatprep.subr.bf16.mxu0 0
      %498 = vmatpush1.bf16.xpose.msra.mxu0 0
      %499 = vmatprep.subr.bf16.mxu0 0
      %500 = vmatpush1.bf16.xpose.msra.mxu0 0
      %501 = vmatprep.subr.bf16.mxu0 0
      %502 = vmatpush1.bf16.xpose.msra.mxu0 0
      %503 = vmatprep.subr.bf16.mxu0 0
      %504 = vmatpush1.bf16.xpose.msra.mxu0 0
      %505 = vmatprep.subr.bf16.mxu0 0
      %506 = vmatpush1.bf16.xpose.msra.mxu0 0
      %507 = vmatprep.subr.bf16.mxu0 0
      %508 = vmatpush1.bf16.xpose.msra.mxu0 0
      %509 = vmatprep.subr.bf16.mxu0 0
      %510 = vmatpush1.bf16.xpose.msra.mxu0 0
      %511 = vmatprep.subr.bf16.mxu0 0
      %512 = vmatpush1.bf16.xpose.msra.mxu0 %v495
      %513 = vmatprep.subr.bf16.mxu0 0
      %514 = vmatpush2.bf16.xpose.msra.mxu0 0
      %515 = vmatprep.subr.bf16.mxu0 0
      %516 = vmatpush2.bf16.xpose.msra.mxu0 0
      %517 = vmatprep.subr.bf16.mxu0 0
      %518 = vmatpush2.bf16.xpose.msra.mxu0 0
      %519 = vmatprep.subr.bf16.mxu0 0
      %520 = vmatpush2.bf16.xpose.msra.mxu0 0
      %521 = vmatprep.subr.bf16.mxu0 0
      %522 = vmatpush2.bf16.xpose.msra.mxu0 0
      %523 = vmatprep.subr.bf16.mxu0 0
      %524 = vmatpush2.bf16.xpose.msra.mxu0 0
      %525 = vmatprep.subr.bf16.mxu0 0
      %526 = vmatpush2.bf16.xpose.msra.mxu0 0
      %527 = vmatprep.subr.bf16.mxu0 0
      %528 = vmatpush2.bf16.xpose.msra.mxu0 0
      %529 = vmatprep.mubr.bf16.mxu0 0
      %530 = vmatmul.mubr.bf16.gmra.mxu0 %v492
      %v531 = vpop.f32.mrf.mxu0
      %v532 = vadd.f32 0.0, %v531
      %v533 = vpop.f32.mrf.mxu0
      %v534 = vpop.f32.mrf.mxu0
      %v535 = vpop.f32.mrf.mxu0
      %536 = vdwg.mxu0
      %v537 = vmul.f32 %v532, 0.5
      %v538 = vsel %vm425, %v537, -inf
      %539 = vmax.xlane.f32.xlu0 %v538
      %v540 = vpop.xlane.xlu0 %539
      %v541 = vsub.f32 %v537, %v540
      %v542 = vmul.f32 %v541, 1.442695
      %v543 = vpow.pop %v542
      %v544 = vsel %vm425, %v543, 0.0
      %545 = vadd.xlane.f32.xlu0 %v544
      %v546 = vpop.xlane.xlu0 %545
      %v547 = vrcp.pop %v546
      %v548 = vmul.f32 %v543, %v547
      %v549 = vpack.c.bf16 %v548, %v548
      %550 = vrot.lane.b32.xlu0 %v373, 60
      %v551 = vpop.permute.xlu0 %550
      %v553 = vsel %vm425, %v549, 0
      %v556 = vsel %vm443, %v551, 0
      %558 = vmatprep.subr.bf16.mxu0 0
      %559 = vmatpush1.bf16.msra.mxu0 0
      %560 = vmatprep.subr.bf16.mxu0 0
      %561 = vmatpush1.bf16.msra.mxu0 0
      %562 = vmatprep.subr.bf16.mxu0 0
      %563 = vmatpush1.bf16.msra.mxu0 0
      %564 = vmatprep.subr.bf16.mxu0 0
      %565 = vmatpush1.bf16.msra.mxu0 0
      %566 = vmatprep.subr.bf16.mxu0 0
      %567 = vmatpush1.bf16.msra.mxu0 0
      %568 = vmatprep.subr.bf16.mxu0 0
      %569 = vmatpush1.bf16.msra.mxu0 0
      %570 = vmatprep.subr.bf16.mxu0 0
      %571 = vmatpush1.bf16.msra.mxu0 0
      %572 = vmatprep.subr.bf16.mxu0 0
      %573 = vmatpush1.bf16.msra.mxu0 %v556
      %574 = vmatprep.subr.bf16.mxu0 0
      %575 = vmatpush2.bf16.msra.mxu0 0
      %576 = vmatprep.subr.bf16.mxu0 0
      %577 = vmatpush2.bf16.msra.mxu0 0
      %578 = vmatprep.subr.bf16.mxu0 0
      %579 = vmatpush2.bf16.msra.mxu0 0
      %580 = vmatprep.subr.bf16.mxu0 0
      %581 = vmatpush2.bf16.msra.mxu0 0
      %582 = vmatprep.subr.bf16.mxu0 0
      %583 = vmatpush2.bf16.msra.mxu0 0
      %584 = vmatprep.subr.bf16.mxu0 0
      %585 = vmatpush2.bf16.msra.mxu0 0
      %586 = vmatprep.subr.bf16.mxu0 0
      %587 = vmatpush2.bf16.msra.mxu0 0
      %588 = vmatprep.subr.bf16.mxu0 0
      %589 = vmatpush2.bf16.msra.mxu0 0
      %590 = vmatprep.mubr.bf16.mxu0 0
      %591 = vmatmul.mubr.bf16.gmra.mxu0 %v553
      %v592 = vpop.f32.mrf.mxu0
      %v593 = vadd.f32 0.0, %v592
      %v594 = vpop.f32.mrf.mxu0
      %v595 = vpop.f32.mrf.mxu0
      %v596 = vpop.f32.mrf.mxu0
      %597 = vdwg.mxu0
      %598 = vrot.lane.b32.xlu0 %v373, 120
      %v599 = vpop.permute.xlu0 %598
      %600 = vrot.lane.b32.xlu0 %v373, 88
      %v601 = vpop.permute.xlu0 %600
      %v603 = vsel %vm377, %v599, 0
      %v606 = vsel %vm377, %v601, 0
      %608 = vmatprep.subr.bf16.mxu0 0
      %609 = vmatpush1.bf16.xpose.msra.mxu0 0
      %610 = vmatprep.subr.bf16.mxu0 0
      %611 = vmatpush1.bf16.xpose.msra.mxu0 0
      %612 = vmatprep.subr.bf16.mxu0 0
      %613 = vmatpush1.bf16.xpose.msra.mxu0 0
      %614 = vmatprep.subr.bf16.mxu0 0
      %615 = vmatpush1.bf16.xpose.msra.mxu0 0
      %616 = vmatprep.subr.bf16.mxu0 0
      %617 = vmatpush1.bf16.xpose.msra.mxu0 0
      %618 = vmatprep.subr.bf16.mxu0 0
      %619 = vmatpush1.bf16.xpose.msra.mxu0 0
      %620 = vmatprep.subr.bf16.mxu0 0
      %621 = vmatpush1.bf16.xpose.msra.mxu0 0
      %622 = vmatprep.subr.bf16.mxu0 0
      %623 = vmatpush1.bf16.xpose.msra.mxu0 %v606
      %624 = vmatprep.subr.bf16.mxu0 0
      %625 = vmatpush2.bf16.xpose.msra.mxu0 0
      %626 = vmatprep.subr.bf16.mxu0 0
      %627 = vmatpush2.bf16.xpose.msra.mxu0 0
      %628 = vmatprep.subr.bf16.mxu0 0
      %629 = vmatpush2.bf16.xpose.msra.mxu0 0
      %630 = vmatprep.subr.bf16.mxu0 0
      %631 = vmatpush2.bf16.xpose.msra.mxu0 0
      %632 = vmatprep.subr.bf16.mxu0 0
      %633 = vmatpush2.bf16.xpose.msra.mxu0 0
      %634 = vmatprep.subr.bf16.mxu0 0
      %635 = vmatpush2.bf16.xpose.msra.mxu0 0
      %636 = vmatprep.subr.bf16.mxu0 0
      %637 = vmatpush2.bf16.xpose.msra.mxu0 0
      %638 = vmatprep.subr.bf16.mxu0 0
      %639 = vmatpush2.bf16.xpose.msra.mxu0 0
      %640 = vmatprep.mubr.bf16.mxu0 0
      %641 = vmatmul.mubr.bf16.gmra.mxu0 %v603
      %v642 = vpop.f32.mrf.mxu0
      %v643 = vadd.f32 0.0, %v642
      %v644 = vpop.f32.mrf.mxu0
      %v645 = vpop.f32.mrf.mxu0
      %v646 = vpop.f32.mrf.mxu0
      %647 = vdwg.mxu0
      %v648 = vmul.f32 %v643, 0.5
      %v649 = vsel %vm425, %v648, -inf
      %650 = vmax.xlane.f32.xlu0 %v649
      %v651 = vpop.xlane.xlu0 %650
      %v652 = vsub.f32 %v648, %v651
      %v653 = vmul.f32 %v652, 1.442695
      %v654 = vpow.pop %v653
      %v655 = vsel %vm425, %v654, 0.0
      %656 = vadd.xlane.f32.xlu0 %v655
      %v657 = vpop.xlane.xlu0 %656
      %v658 = vrcp.pop %v657
      %v659 = vmul.f32 %v654, %v658
      %v660 = vpack.c.bf16 %v659, %v659
      %661 = vrot.lane.b32.xlu0 %v373, 56
      %v662 = vpop.permute.xlu0 %661
      %v664 = vsel %vm425, %v660, 0
      %v667 = vsel %vm443, %v662, 0
      %669 = vmatprep.subr.bf16.mxu0 0
      %670 = vmatpush1.bf16.msra.mxu0 0
      %671 = vmatprep.subr.bf16.mxu0 0
      %672 = vmatpush1.bf16.msra.mxu0 0
      %673 = vmatprep.subr.bf16.mxu0 0
      %674 = vmatpush1.bf16.msra.mxu0 0
      %675 = vmatprep.subr.bf16.mxu0 0
      %676 = vmatpush1.bf16.msra.mxu0 0
      %677 = vmatprep.subr.bf16.mxu0 0
      %678 = vmatpush1.bf16.msra.mxu0 0
      %679 = vmatprep.subr.bf16.mxu0 0
      %680 = vmatpush1.bf16.msra.mxu0 0
      %681 = vmatprep.subr.bf16.mxu0 0
      %682 = vmatpush1.bf16.msra.mxu0 0
      %683 = vmatprep.subr.bf16.mxu0 0
      %684 = vmatpush1.bf16.msra.mxu0 %v667
      %685 = vmatprep.subr.bf16.mxu0 0
      %686 = vmatpush2.bf16.msra.mxu0 0
      %687 = vmatprep.subr.bf16.mxu0 0
      %688 = vmatpush2.bf16.msra.mxu0 0
      %689 = vmatprep.subr.bf16.mxu0 0
      %690 = vmatpush2.bf16.msra.mxu0 0
      %691 = vmatprep.subr.bf16.mxu0 0
      %692 = vmatpush2.bf16.msra.mxu0 0
      %693 = vmatprep.subr.bf16.mxu0 0
      %694 = vmatpush2.bf16.msra.mxu0 0
      %695 = vmatprep.subr.bf16.mxu0 0
      %696 = vmatpush2.bf16.msra.mxu0 0
      %697 = vmatprep.subr.bf16.mxu0 0
      %698 = vmatpush2.bf16.msra.mxu0 0
      %699 = vmatprep.subr.bf16.mxu0 0
      %700 = vmatpush2.bf16.msra.mxu0 0
      %701 = vmatprep.mubr.bf16.mxu0 0
      %702 = vmatmul.mubr.bf16.gmra.mxu0 %v664
      %v703 = vpop.f32.mrf.mxu0
      %v704 = vadd.f32 0.0, %v703
      %v705 = vpop.f32.mrf.mxu0
      %v706 = vpop.f32.mrf.mxu0
      %v707 = vpop.f32.mrf.mxu0
      %708 = vdwg.mxu0
      %709 = vrot.lane.b32.xlu0 %v373, 116
      %v710 = vpop.permute.xlu0 %709
      %711 = vrot.lane.b32.xlu0 %v373, 84
      %v712 = vpop.permute.xlu0 %711
      %v714 = vsel %vm377, %v710, 0
      %v717 = vsel %vm377, %v712, 0
      %719 = vmatprep.subr.bf16.mxu0 0
      %720 = vmatpush1.bf16.xpose.msra.mxu0 0
      %721 = vmatprep.subr.bf16.mxu0 0
      %722 = vmatpush1.bf16.xpose.msra.mxu0 0
      %723 = vmatprep.subr.bf16.mxu0 0
      %724 = vmatpush1.bf16.xpose.msra.mxu0 0
      %725 = vmatprep.subr.bf16.mxu0 0
      %726 = vmatpush1.bf16.xpose.msra.mxu0 0
      %727 = vmatprep.subr.bf16.mxu0 0
      %728 = vmatpush1.bf16.xpose.msra.mxu0 0
      %729 = vmatprep.subr.bf16.mxu0 0
      %730 = vmatpush1.bf16.xpose.msra.mxu0 0
      %731 = vmatprep.subr.bf16.mxu0 0
      %732 = vmatpush1.bf16.xpose.msra.mxu0 0
      %733 = vmatprep.subr.bf16.mxu0 0
      %734 = vmatpush1.bf16.xpose.msra.mxu0 %v717
      %735 = vmatprep.subr.bf16.mxu0 0
      %736 = vmatpush2.bf16.xpose.msra.mxu0 0
      %737 = vmatprep.subr.bf16.mxu0 0
      %738 = vmatpush2.bf16.xpose.msra.mxu0 0
      %739 = vmatprep.subr.bf16.mxu0 0
      %740 = vmatpush2.bf16.xpose.msra.mxu0 0
      %741 = vmatprep.subr.bf16.mxu0 0
      %742 = vmatpush2.bf16.xpose.msra.mxu0 0
      %743 = vmatprep.subr.bf16.mxu0 0
      %744 = vmatpush2.bf16.xpose.msra.mxu0 0
      %745 = vmatprep.subr.bf16.mxu0 0
      %746 = vmatpush2.bf16.xpose.msra.mxu0 0
      %747 = vmatprep.subr.bf16.mxu0 0
      %748 = vmatpush2.bf16.xpose.msra.mxu0 0
      %749 = vmatprep.subr.bf16.mxu0 0
      %750 = vmatpush2.bf16.xpose.msra.mxu0 0
      %751 = vmatprep.mubr.bf16.mxu0 0
      %752 = vmatmul.mubr.bf16.gmra.mxu0 %v714
      %v753 = vpop.f32.mrf.mxu0
      %v754 = vadd.f32 0.0, %v753
      %v755 = vpop.f32.mrf.mxu0
      %v756 = vpop.f32.mrf.mxu0
      %v757 = vpop.f32.mrf.mxu0
      %758 = vdwg.mxu0
      %v759 = vmul.f32 %v754, 0.5
      %v760 = vsel %vm425, %v759, -inf
      %761 = vmax.xlane.f32.xlu0 %v760
      %v762 = vpop.xlane.xlu0 %761
      %v763 = vsub.f32 %v759, %v762
      %v764 = vmul.f32 %v763, 1.442695
      %v765 = vpow.pop %v764
      %v766 = vsel %vm425, %v765, 0.0
      %767 = vadd.xlane.f32.xlu0 %v766
      %v768 = vpop.xlane.xlu0 %767
      %v769 = vrcp.pop %v768
      %v770 = vmul.f32 %v765, %v769
      %v771 = vpack.c.bf16 %v770, %v770
      %772 = vrot.lane.b32.xlu0 %v373, 52
      %v773 = vpop.permute.xlu0 %772
      %v775 = vsel %vm425, %v771, 0
      %v778 = vsel %vm443, %v773, 0
      %780 = vmatprep.subr.bf16.mxu0 0
      %781 = vmatpush1.bf16.msra.mxu0 0
      %782 = vmatprep.subr.bf16.mxu0 0
      %783 = vmatpush1.bf16.msra.mxu0 0
      %784 = vmatprep.subr.bf16.mxu0 0
      %785 = vmatpush1.bf16.msra.mxu0 0
      %786 = vmatprep.subr.bf16.mxu0 0
      %787 = vmatpush1.bf16.msra.mxu0 0
      %788 = vmatprep.subr.bf16.mxu0 0
      %789 = vmatpush1.bf16.msra.mxu0 0
      %790 = vmatprep.subr.bf16.mxu0 0
      %791 = vmatpush1.bf16.msra.mxu0 0
      %792 = vmatprep.subr.bf16.mxu0 0
      %793 = vmatpush1.bf16.msra.mxu0 0
      %794 = vmatprep.subr.bf16.mxu0 0
      %795 = vmatpush1.bf16.msra.mxu0 %v778
      %796 = vmatprep.subr.bf16.mxu0 0
      %797 = vmatpush2.bf16.msra.mxu0 0
      %798 = vmatprep.subr.bf16.mxu0 0
      %799 = vmatpush2.bf16.msra.mxu0 0
      %800 = vmatprep.subr.bf16.mxu0 0
      %801 = vmatpush2.bf16.msra.mxu0 0
      %802 = vmatprep.subr.bf16.mxu0 0
      %803 = vmatpush2.bf16.msra.mxu0 0
      %804 = vmatprep.subr.bf16.mxu0 0
      %805 = vmatpush2.bf16.msra.mxu0 0
      %806 = vmatprep.subr.bf16.mxu0 0
      %807 = vmatpush2.bf16.msra.mxu0 0
      %808 = vmatprep.subr.bf16.mxu0 0
      %809 = vmatpush2.bf16.msra.mxu0 0
      %810 = vmatprep.subr.bf16.mxu0 0
      %811 = vmatpush2.bf16.msra.mxu0 0
      %812 = vmatprep.mubr.bf16.mxu0 0
      %813 = vmatmul.mubr.bf16.gmra.mxu0 %v775
      %v814 = vpop.f32.mrf.mxu0
      %v815 = vadd.f32 0.0, %v814
      %v816 = vpop.f32.mrf.mxu0
      %v817 = vpop.f32.mrf.mxu0
      %v818 = vpop.f32.mrf.mxu0
      %819 = vdwg.mxu0
      %820 = vrot.lane.b32.xlu0 %v373, 112
      %v821 = vpop.permute.xlu0 %820
      %822 = vrot.lane.b32.xlu0 %v373, 80
      %v823 = vpop.permute.xlu0 %822
      %v825 = vsel %vm377, %v821, 0
      %v828 = vsel %vm377, %v823, 0
      %830 = vmatprep.subr.bf16.mxu0 0
      %831 = vmatpush1.bf16.xpose.msra.mxu0 0
      %832 = vmatprep.subr.bf16.mxu0 0
      %833 = vmatpush1.bf16.xpose.msra.mxu0 0
      %834 = vmatprep.subr.bf16.mxu0 0
      %835 = vmatpush1.bf16.xpose.msra.mxu0 0
      %836 = vmatprep.subr.bf16.mxu0 0
      %837 = vmatpush1.bf16.xpose.msra.mxu0 0
      %838 = vmatprep.subr.bf16.mxu0 0
      %839 = vmatpush1.bf16.xpose.msra.mxu0 0
      %840 = vmatprep.subr.bf16.mxu0 0
      %841 = vmatpush1.bf16.xpose.msra.mxu0 0
      %842 = vmatprep.subr.bf16.mxu0 0
      %843 = vmatpush1.bf16.xpose.msra.mxu0 0
      %844 = vmatprep.subr.bf16.mxu0 0
      %845 = vmatpush1.bf16.xpose.msra.mxu0 %v828
      %846 = vmatprep.subr.bf16.mxu0 0
      %847 = vmatpush2.bf16.xpose.msra.mxu0 0
      %848 = vmatprep.subr.bf16.mxu0 0
      %849 = vmatpush2.bf16.xpose.msra.mxu0 0
      %850 = vmatprep.subr.bf16.mxu0 0
      %851 = vmatpush2.bf16.xpose.msra.mxu0 0
      %852 = vmatprep.subr.bf16.mxu0 0
      %853 = vmatpush2.bf16.xpose.msra.mxu0 0
      %854 = vmatprep.subr.bf16.mxu0 0
      %855 = vmatpush2.bf16.xpose.msra.mxu0 0
      %856 = vmatprep.subr.bf16.mxu0 0
      %857 = vmatpush2.bf16.xpose.msra.mxu0 0
      %858 = vmatprep.subr.bf16.mxu0 0
      %859 = vmatpush2.bf16.xpose.msra.mxu0 0
      %860 = vmatprep.subr.bf16.mxu0 0
      %861 = vmatpush2.bf16.xpose.msra.mxu0 0
      %862 = vmatprep.mubr.bf16.mxu0 0
      %863 = vmatmul.mubr.bf16.gmra.mxu0 %v825
      %v864 = vpop.f32.mrf.mxu0
      %v865 = vadd.f32 0.0, %v864
      %v866 = vpop.f32.mrf.mxu0
      %v867 = vpop.f32.mrf.mxu0
      %v868 = vpop.f32.mrf.mxu0
      %869 = vdwg.mxu0
      %v870 = vmul.f32 %v865, 0.5
      %v871 = vsel %vm425, %v870, -inf
      %872 = vmax.xlane.f32.xlu0 %v871
      %v873 = vpop.xlane.xlu0 %872
      %v874 = vsub.f32 %v870, %v873
      %v875 = vmul.f32 %v874, 1.442695
      %v876 = vpow.pop %v875
      %v877 = vsel %vm425, %v876, 0.0
      %878 = vadd.xlane.f32.xlu0 %v877
      %v879 = vpop.xlane.xlu0 %878
      %v880 = vrcp.pop %v879
      %v881 = vmul.f32 %v876, %v880
      %v882 = vpack.c.bf16 %v881, %v881
      %883 = vrot.lane.b32.xlu0 %v373, 48
      %v884 = vpop.permute.xlu0 %883
      %v886 = vsel %vm425, %v882, 0
      %v889 = vsel %vm443, %v884, 0
      %891 = vmatprep.subr.bf16.mxu0 0
      %892 = vmatpush1.bf16.msra.mxu0 0
      %893 = vmatprep.subr.bf16.mxu0 0
      %894 = vmatpush1.bf16.msra.mxu0 0
      %895 = vmatprep.subr.bf16.mxu0 0
      %896 = vmatpush1.bf16.msra.mxu0 0
      %897 = vmatprep.subr.bf16.mxu0 0
      %898 = vmatpush1.bf16.msra.mxu0 0
      %899 = vmatprep.subr.bf16.mxu0 0
      %900 = vmatpush1.bf16.msra.mxu0 0
      %901 = vmatprep.subr.bf16.mxu0 0
      %902 = vmatpush1.bf16.msra.mxu0 0
      %903 = vmatprep.subr.bf16.mxu0 0
      %904 = vmatpush1.bf16.msra.mxu0 0
      %905 = vmatprep.subr.bf16.mxu0 0
      %906 = vmatpush1.bf16.msra.mxu0 %v889
      %907 = vmatprep.subr.bf16.mxu0 0
      %908 = vmatpush2.bf16.msra.mxu0 0
      %909 = vmatprep.subr.bf16.mxu0 0
      %910 = vmatpush2.bf16.msra.mxu0 0
      %911 = vmatprep.subr.bf16.mxu0 0
      %912 = vmatpush2.bf16.msra.mxu0 0
      %913 = vmatprep.subr.bf16.mxu0 0
      %914 = vmatpush2.bf16.msra.mxu0 0
      %915 = vmatprep.subr.bf16.mxu0 0
      %916 = vmatpush2.bf16.msra.mxu0 0
      %917 = vmatprep.subr.bf16.mxu0 0
      %918 = vmatpush2.bf16.msra.mxu0 0
      %919 = vmatprep.subr.bf16.mxu0 0
      %920 = vmatpush2.bf16.msra.mxu0 0
      %921 = vmatprep.subr.bf16.mxu0 0
      %922 = vmatpush2.bf16.msra.mxu0 0
      %923 = vmatprep.mubr.bf16.mxu0 0
      %924 = vmatmul.mubr.bf16.gmra.mxu0 %v886
      %v925 = vpop.f32.mrf.mxu0
      %v926 = vadd.f32 0.0, %v925
      %v927 = vpop.f32.mrf.mxu0
      %v928 = vpop.f32.mrf.mxu0
      %v929 = vpop.f32.mrf.mxu0
      %930 = vdwg.mxu0
      %931 = vrot.lane.b32.xlu0 %v373, 108
      %v932 = vpop.permute.xlu0 %931
      %933 = vrot.lane.b32.xlu0 %v373, 76
      %v934 = vpop.permute.xlu0 %933
      %v936 = vsel %vm377, %v932, 0
      %v939 = vsel %vm377, %v934, 0
      %941 = vmatprep.subr.bf16.mxu0 0
      %942 = vmatpush1.bf16.xpose.msra.mxu0 0
      %943 = vmatprep.subr.bf16.mxu0 0
      %944 = vmatpush1.bf16.xpose.msra.mxu0 0
      %945 = vmatprep.subr.bf16.mxu0 0
      %946 = vmatpush1.bf16.xpose.msra.mxu0 0
      %947 = vmatprep.subr.bf16.mxu0 0
      %948 = vmatpush1.bf16.xpose.msra.mxu0 0
      %949 = vmatprep.subr.bf16.mxu0 0
      %950 = vmatpush1.bf16.xpose.msra.mxu0 0
      %951 = vmatprep.subr.bf16.mxu0 0
      %952 = vmatpush1.bf16.xpose.msra.mxu0 0
      %953 = vmatprep.subr.bf16.mxu0 0
      %954 = vmatpush1.bf16.xpose.msra.mxu0 0
      %955 = vmatprep.subr.bf16.mxu0 0
      %956 = vmatpush1.bf16.xpose.msra.mxu0 %v939
      %957 = vmatprep.subr.bf16.mxu0 0
      %958 = vmatpush2.bf16.xpose.msra.mxu0 0
      %959 = vmatprep.subr.bf16.mxu0 0
      %960 = vmatpush2.bf16.xpose.msra.mxu0 0
      %961 = vmatprep.subr.bf16.mxu0 0
      %962 = vmatpush2.bf16.xpose.msra.mxu0 0
      %963 = vmatprep.subr.bf16.mxu0 0
      %964 = vmatpush2.bf16.xpose.msra.mxu0 0
      %965 = vmatprep.subr.bf16.mxu0 0
      %966 = vmatpush2.bf16.xpose.msra.mxu0 0
      %967 = vmatprep.subr.bf16.mxu0 0
      %968 = vmatpush2.bf16.xpose.msra.mxu0 0
      %969 = vmatprep.subr.bf16.mxu0 0
      %970 = vmatpush2.bf16.xpose.msra.mxu0 0
      %971 = vmatprep.subr.bf16.mxu0 0
      %972 = vmatpush2.bf16.xpose.msra.mxu0 0
      %973 = vmatprep.mubr.bf16.mxu0 0
      %974 = vmatmul.mubr.bf16.gmra.mxu0 %v936
      %v975 = vpop.f32.mrf.mxu0
      %v976 = vadd.f32 0.0, %v975
      %v977 = vpop.f32.mrf.mxu0
      %v978 = vpop.f32.mrf.mxu0
      %v979 = vpop.f32.mrf.mxu0
      %980 = vdwg.mxu0
      %v981 = vmul.f32 %v976, 0.5
      %v982 = vsel %vm425, %v981, -inf
      %983 = vmax.xlane.f32.xlu0 %v982
      %v984 = vpop.xlane.xlu0 %983
      %v985 = vsub.f32 %v981, %v984
      %v986 = vmul.f32 %v985, 1.442695
      %v987 = vpow.pop %v986
      %v988 = vsel %vm425, %v987, 0.0
      %989 = vadd.xlane.f32.xlu0 %v988
      %v990 = vpop.xlane.xlu0 %989
      %v991 = vrcp.pop %v990
      %v992 = vmul.f32 %v987, %v991
      %v993 = vpack.c.bf16 %v992, %v992
      %994 = vrot.lane.b32.xlu0 %v373, 44
      %v995 = vpop.permute.xlu0 %994
      %v997 = vsel %vm425, %v993, 0
      %v1000 = vsel %vm443, %v995, 0
      %1002 = vmatprep.subr.bf16.mxu0 0
      %1003 = vmatpush1.bf16.msra.mxu0 0
      %1004 = vmatprep.subr.bf16.mxu0 0
      %1005 = vmatpush1.bf16.msra.mxu0 0
      %1006 = vmatprep.subr.bf16.mxu0 0
      %1007 = vmatpush1.bf16.msra.mxu0 0
      %1008 = vmatprep.subr.bf16.mxu0 0
      %1009 = vmatpush1.bf16.msra.mxu0 0
      %1010 = vmatprep.subr.bf16.mxu0 0
      %1011 = vmatpush1.bf16.msra.mxu0 0
      %1012 = vmatprep.subr.bf16.mxu0 0
      %1013 = vmatpush1.bf16.msra.mxu0 0
      %1014 = vmatprep.subr.bf16.mxu0 0
      %1015 = vmatpush1.bf16.msra.mxu0 0
      %1016 = vmatprep.subr.bf16.mxu0 0
      %1017 = vmatpush1.bf16.msra.mxu0 %v1000
      %1018 = vmatprep.subr.bf16.mxu0 0
      %1019 = vmatpush2.bf16.msra.mxu0 0
      %1020 = vmatprep.subr.bf16.mxu0 0
      %1021 = vmatpush2.bf16.msra.mxu0 0
      %1022 = vmatprep.subr.bf16.mxu0 0
      %1023 = vmatpush2.bf16.msra.mxu0 0
      %1024 = vmatprep.subr.bf16.mxu0 0
      %1025 = vmatpush2.bf16.msra.mxu0 0
      %1026 = vmatprep.subr.bf16.mxu0 0
      %1027 = vmatpush2.bf16.msra.mxu0 0
      %1028 = vmatprep.subr.bf16.mxu0 0
      %1029 = vmatpush2.bf16.msra.mxu0 0
      %1030 = vmatprep.subr.bf16.mxu0 0
      %1031 = vmatpush2.bf16.msra.mxu0 0
      %1032 = vmatprep.subr.bf16.mxu0 0
      %1033 = vmatpush2.bf16.msra.mxu0 0
      %1034 = vmatprep.mubr.bf16.mxu0 0
      %1035 = vmatmul.mubr.bf16.gmra.mxu0 %v997
      %v1036 = vpop.f32.mrf.mxu0
      %v1037 = vadd.f32 0.0, %v1036
      %v1038 = vpop.f32.mrf.mxu0
      %v1039 = vpop.f32.mrf.mxu0
      %v1040 = vpop.f32.mrf.mxu0
      %1041 = vdwg.mxu0
      %1042 = vrot.lane.b32.xlu0 %v373, 104
      %v1043 = vpop.permute.xlu0 %1042
      %1044 = vrot.lane.b32.xlu0 %v373, 72
      %v1045 = vpop.permute.xlu0 %1044
      %v1047 = vsel %vm377, %v1043, 0
      %v1050 = vsel %vm377, %v1045, 0
      %1052 = vmatprep.subr.bf16.mxu0 0
      %1053 = vmatpush1.bf16.xpose.msra.mxu0 0
      %1054 = vmatprep.subr.bf16.mxu0 0
      %1055 = vmatpush1.bf16.xpose.msra.mxu0 0
      %1056 = vmatprep.subr.bf16.mxu0 0
      %1057 = vmatpush1.bf16.xpose.msra.mxu0 0
      %1058 = vmatprep.subr.bf16.mxu0 0
      %1059 = vmatpush1.bf16.xpose.msra.mxu0 0
      %1060 = vmatprep.subr.bf16.mxu0 0
      %1061 = vmatpush1.bf16.xpose.msra.mxu0 0
      %1062 = vmatprep.subr.bf16.mxu0 0
      %1063 = vmatpush1.bf16.xpose.msra.mxu0 0
      %1064 = vmatprep.subr.bf16.mxu0 0
      %1065 = vmatpush1.bf16.xpose.msra.mxu0 0
      %1066 = vmatprep.subr.bf16.mxu0 0
      %1067 = vmatpush1.bf16.xpose.msra.mxu0 %v1050
      %1068 = vmatprep.subr.bf16.mxu0 0
      %1069 = vmatpush2.bf16.xpose.msra.mxu0 0
      %1070 = vmatprep.subr.bf16.mxu0 0
      %1071 = vmatpush2.bf16.xpose.msra.mxu0 0
      %1072 = vmatprep.subr.bf16.mxu0 0
      %1073 = vmatpush2.bf16.xpose.msra.mxu0 0
      %1074 = vmatprep.subr.bf16.mxu0 0
      %1075 = vmatpush2.bf16.xpose.msra.mxu0 0
      %1076 = vmatprep.subr.bf16.mxu0 0
      %1077 = vmatpush2.bf16.xpose.msra.mxu0 0
      %1078 = vmatprep.subr.bf16.mxu0 0
      %1079 = vmatpush2.bf16.xpose.msra.mxu0 0
      %1080 = vmatprep.subr.bf16.mxu0 0
      %1081 = vmatpush2.bf16.xpose.msra.mxu0 0
      %1082 = vmatprep.subr.bf16.mxu0 0
      %1083 = vmatpush2.bf16.xpose.msra.mxu0 0
      %1084 = vmatprep.mubr.bf16.mxu0 0
      %1085 = vmatmul.mubr.bf16.gmra.mxu0 %v1047
      %v1086 = vpop.f32.mrf.mxu0
      %v1087 = vadd.f32 0.0, %v1086
      %v1088 = vpop.f32.mrf.mxu0
      %v1089 = vpop.f32.mrf.mxu0
      %v1090 = vpop.f32.mrf.mxu0
      %1091 = vdwg.mxu0
      %v1092 = vmul.f32 %v1087, 0.5
      %v1093 = vsel %vm425, %v1092, -inf
      %1094 = vmax.xlane.f32.xlu0 %v1093
      %v1095 = vpop.xlane.xlu0 %1094
      %v1096 = vsub.f32 %v1092, %v1095
      %v1097 = vmul.f32 %v1096, 1.442695
      %v1098 = vpow.pop %v1097
      %v1099 = vsel %vm425, %v1098, 0.0
      %1100 = vadd.xlane.f32.xlu0 %v1099
      %v1101 = vpop.xlane.xlu0 %1100
      %v1102 = vrcp.pop %v1101
      %v1103 = vmul.f32 %v1098, %v1102
      %v1104 = vpack.c.bf16 %v1103, %v1103
      %1105 = vrot.lane.b32.xlu0 %v373, 40
      %v1106 = vpop.permute.xlu0 %1105
      %v1108 = vsel %vm425, %v1104, 0
      %v1111 = vsel %vm443, %v1106, 0
      %1113 = vmatprep.subr.bf16.mxu0 0
      %1114 = vmatpush1.bf16.msra.mxu0 0
      %1115 = vmatprep.subr.bf16.mxu0 0
      %1116 = vmatpush1.bf16.msra.mxu0 0
      %1117 = vmatprep.subr.bf16.mxu0 0
      %1118 = vmatpush1.bf16.msra.mxu0 0
      %1119 = vmatprep.subr.bf16.mxu0 0
      %1120 = vmatpush1.bf16.msra.mxu0 0
      %1121 = vmatprep.subr.bf16.mxu0 0
      %1122 = vmatpush1.bf16.msra.mxu0 0
      %1123 = vmatprep.subr.bf16.mxu0 0
      %1124 = vmatpush1.bf16.msra.mxu0 0
      %1125 = vmatprep.subr.bf16.mxu0 0
      %1126 = vmatpush1.bf16.msra.mxu0 0
      %1127 = vmatprep.subr.bf16.mxu0 0
      %1128 = vmatpush1.bf16.msra.mxu0 %v1111
      %1129 = vmatprep.subr.bf16.mxu0 0
      %1130 = vmatpush2.bf16.msra.mxu0 0
      %1131 = vmatprep.subr.bf16.mxu0 0
      %1132 = vmatpush2.bf16.msra.mxu0 0
      %1133 = vmatprep.subr.bf16.mxu0 0
      %1134 = vmatpush2.bf16.msra.mxu0 0
      %1135 = vmatprep.subr.bf16.mxu0 0
      %1136 = vmatpush2.bf16.msra.mxu0 0
      %1137 = vmatprep.subr.bf16.mxu0 0
      %1138 = vmatpush2.bf16.msra.mxu0 0
      %1139 = vmatprep.subr.bf16.mxu0 0
      %1140 = vmatpush2.bf16.msra.mxu0 0
      %1141 = vmatprep.subr.bf16.mxu0 0
      %1142 = vmatpush2.bf16.msra.mxu0 0
      %1143 = vmatprep.subr.bf16.mxu0 0
      %1144 = vmatpush2.bf16.msra.mxu0 0
      %1145 = vmatprep.mubr.bf16.mxu0 0
      %1146 = vmatmul.mubr.bf16.gmra.mxu0 %v1108
      %v1147 = vpop.f32.mrf.mxu0
      %v1148 = vadd.f32 0.0, %v1147
      %v1149 = vpop.f32.mrf.mxu0
      %v1150 = vpop.f32.mrf.mxu0
      %v1151 = vpop.f32.mrf.mxu0
      %1152 = vdwg.mxu0
      %1153 = vrot.lane.b32.xlu0 %v373, 100
      %v1154 = vpop.permute.xlu0 %1153
      %1155 = vrot.lane.b32.xlu0 %v373, 68
      %v1156 = vpop.permute.xlu0 %1155
      %v1158 = vsel %vm377, %v1154, 0
      %v1161 = vsel %vm377, %v1156, 0
      %1163 = vmatprep.subr.bf16.mxu0 0
      %1164 = vmatpush1.bf16.xpose.msra.mxu0 0
      %1165 = vmatprep.subr.bf16.mxu0 0
      %1166 = vmatpush1.bf16.xpose.msra.mxu0 0
      %1167 = vmatprep.subr.bf16.mxu0 0
      %1168 = vmatpush1.bf16.xpose.msra.mxu0 0
      %1169 = vmatprep.subr.bf16.mxu0 0
      %1170 = vmatpush1.bf16.xpose.msra.mxu0 0
      %1171 = vmatprep.subr.bf16.mxu0 0
      %1172 = vmatpush1.bf16.xpose.msra.mxu0 0
      %1173 = vmatprep.subr.bf16.mxu0 0
      %1174 = vmatpush1.bf16.xpose.msra.mxu0 0
      %1175 = vmatprep.subr.bf16.mxu0 0
      %1176 = vmatpush1.bf16.xpose.msra.mxu0 0
      %1177 = vmatprep.subr.bf16.mxu0 0
      %1178 = vmatpush1.bf16.xpose.msra.mxu0 %v1161
      %1179 = vmatprep.subr.bf16.mxu0 0
      %1180 = vmatpush2.bf16.xpose.msra.mxu0 0
      %1181 = vmatprep.subr.bf16.mxu0 0
      %1182 = vmatpush2.bf16.xpose.msra.mxu0 0
      %1183 = vmatprep.subr.bf16.mxu0 0
      %1184 = vmatpush2.bf16.xpose.msra.mxu0 0
      %1185 = vmatprep.subr.bf16.mxu0 0
      %1186 = vmatpush2.bf16.xpose.msra.mxu0 0
      %1187 = vmatprep.subr.bf16.mxu0 0
      %1188 = vmatpush2.bf16.xpose.msra.mxu0 0
      %1189 = vmatprep.subr.bf16.mxu0 0
      %1190 = vmatpush2.bf16.xpose.msra.mxu0 0
      %1191 = vmatprep.subr.bf16.mxu0 0
      %1192 = vmatpush2.bf16.xpose.msra.mxu0 0
      %1193 = vmatprep.subr.bf16.mxu0 0
      %1194 = vmatpush2.bf16.xpose.msra.mxu0 0
      %1195 = vmatprep.mubr.bf16.mxu0 0
      %1196 = vmatmul.mubr.bf16.gmra.mxu0 %v1158
      %v1197 = vpop.f32.mrf.mxu0
      %v1198 = vadd.f32 0.0, %v1197
      %v1199 = vpop.f32.mrf.mxu0
      %v1200 = vpop.f32.mrf.mxu0
      %v1201 = vpop.f32.mrf.mxu0
      %1202 = vdwg.mxu0
      %v1203 = vmul.f32 %v1198, 0.5
      %v1204 = vsel %vm425, %v1203, -inf
      %1205 = vmax.xlane.f32.xlu0 %v1204
      %v1206 = vpop.xlane.xlu0 %1205
      %v1207 = vsub.f32 %v1203, %v1206
      %v1208 = vmul.f32 %v1207, 1.442695
      %v1209 = vpow.pop %v1208
      %v1210 = vsel %vm425, %v1209, 0.0
      %1211 = vadd.xlane.f32.xlu0 %v1210
      %v1212 = vpop.xlane.xlu0 %1211
      %v1213 = vrcp.pop %v1212
      %v1214 = vmul.f32 %v1209, %v1213
      %v1215 = vpack.c.bf16 %v1214, %v1214
      %1216 = vrot.lane.b32.xlu0 %v373, 36
      %v1217 = vpop.permute.xlu0 %1216
      %v1219 = vsel %vm425, %v1215, 0
      %v1222 = vsel %vm443, %v1217, 0
      %1224 = vmatprep.subr.bf16.mxu0 0
      %1225 = vmatpush1.bf16.msra.mxu0 0
      %1226 = vmatprep.subr.bf16.mxu0 0
      %1227 = vmatpush1.bf16.msra.mxu0 0
      %1228 = vmatprep.subr.bf16.mxu0 0
      %1229 = vmatpush1.bf16.msra.mxu0 0
      %1230 = vmatprep.subr.bf16.mxu0 0
      %1231 = vmatpush1.bf16.msra.mxu0 0
      %1232 = vmatprep.subr.bf16.mxu0 0
      %1233 = vmatpush1.bf16.msra.mxu0 0
      %1234 = vmatprep.subr.bf16.mxu0 0
      %1235 = vmatpush1.bf16.msra.mxu0 0
      %1236 = vmatprep.subr.bf16.mxu0 0
      %1237 = vmatpush1.bf16.msra.mxu0 0
      %1238 = vmatprep.subr.bf16.mxu0 0
      %1239 = vmatpush1.bf16.msra.mxu0 %v1222
      %1240 = vmatprep.subr.bf16.mxu0 0
      %1241 = vmatpush2.bf16.msra.mxu0 0
      %1242 = vmatprep.subr.bf16.mxu0 0
      %1243 = vmatpush2.bf16.msra.mxu0 0
      %1244 = vmatprep.subr.bf16.mxu0 0
      %1245 = vmatpush2.bf16.msra.mxu0 0
      %1246 = vmatprep.subr.bf16.mxu0 0
      %1247 = vmatpush2.bf16.msra.mxu0 0
      %1248 = vmatprep.subr.bf16.mxu0 0
      %1249 = vmatpush2.bf16.msra.mxu0 0
      %1250 = vmatprep.subr.bf16.mxu0 0
      %1251 = vmatpush2.bf16.msra.mxu0 0
      %1252 = vmatprep.subr.bf16.mxu0 0
      %1253 = vmatpush2.bf16.msra.mxu0 0
      %1254 = vmatprep.subr.bf16.mxu0 0
      %1255 = vmatpush2.bf16.msra.mxu0 0
      %1256 = vmatprep.mubr.bf16.mxu0 0
      %1257 = vmatmul.mubr.bf16.gmra.mxu0 %v1219
      %v1258 = vpop.f32.mrf.mxu0
      %v1259 = vadd.f32 0.0, %v1258
      %v1260 = vpop.f32.mrf.mxu0
      %v1261 = vpop.f32.mrf.mxu0
      %v1262 = vpop.f32.mrf.mxu0
      %1263 = vdwg.mxu0
      %1265 = vrot.lane.b32.xlu0 %v593, 4
      %v1266 = vpop.permute.xlu0 %1265
      %1269 = vrot.lane.b32.xlu0 %v704, 8
      %v1270 = vpop.permute.xlu0 %1269
      %1273 = vrot.lane.b32.xlu0 %v815, 12
      %v1274 = vpop.permute.xlu0 %1273
      %1277 = vrot.lane.b32.xlu0 %v926, 16
      %v1278 = vpop.permute.xlu0 %1277
      %1281 = vrot.lane.b32.xlu0 %v1037, 20
      %v1282 = vpop.permute.xlu0 %1281
      %1285 = vrot.lane.b32.xlu0 %v1148, 24
      %v1286 = vpop.permute.xlu0 %1285
      %1289 = vrot.lane.b32.xlu0 %v1259, 28
      %v1290 = vpop.permute.xlu0 %1289
      %v1292 = vsel %vm377, %v482, %v1266
      %v1293 = vsel %vm425, %v1292, %v1270
      %vm1294 = vcmask 97280
      %v1295 = vsel %vm1294, %v1293, %v1274
      %vm1296 = vcmask 130048
      %v1297 = vsel %vm1296, %v1295, %v1278
      %vm1298 = vcmask 162816
      %v1299 = vsel %vm1298, %v1297, %v1282
      %vm1300 = vcmask 195584
      %v1301 = vsel %vm1300, %v1299, %v1286
      %vm1302 = vcmask 228352
      %v1303 = vsel %vm1302, %v1301, %v1290
      %v1304 = vpack.c.bf16 %v1303, %v1303
      %v1305 = vld [vmem:[%s4] sm:$0xf]
      %v1306 = vld [vmem:[%s4 + $0x4] sm:$0xf]
      %v1307 = vld [vmem:[%s4 + $0x8] sm:$0xf]
      %v1308 = vld [vmem:[%s4 + $0xc] sm:$0xf]
      %v1309 = vld [vmem:[%s5] sm:$0x1]
      %v1311 = vlaneseq
      %v1312 = vshrl.u32 %v1311, 7
      %v1313 = vsub.s32 0, %v1312
      %v1314 = vrot.slane %v1309, %v1313
      %v1320 = vunpack.c.l.b16 %v1305
      %v1321 = vunpack.c.l.b16 %v1306
      %v1322 = vunpack.c.l.b16 %v1307
      %v1323 = vunpack.c.l.b16 %v1308
      %v1324 = vpack.c.b16 %v1321, %v1320
      %v1325 = vpack.c.b16 %v1323, %v1322
      %v1329 = vsel %vm329, %v1304, 0
      %1331 = vmatprep.subr.bf16.mxu0 0
      %1332 = vmatpush1.bf16.msra.mxu0 0
      %1333 = vmatprep.subr.bf16.mxu0 0
      %1334 = vmatpush1.bf16.msra.mxu0 0
      %1335 = vmatprep.subr.bf16.mxu0 0
      %1336 = vmatpush1.bf16.msra.mxu0 0
      %1337 = vmatprep.subr.bf16.mxu0 0
      %1338 = vmatpush1.bf16.msra.mxu0 0
      %1339 = vmatprep.subr.bf16.mxu0 0
      %1340 = vmatpush1.bf16.msra.mxu0 0
      %1341 = vmatprep.subr.bf16.mxu0 0
      %1342 = vmatpush1.bf16.msra.mxu0 0
      %1343 = vmatprep.subr.bf16.mxu0 0
      %1344 = vmatpush1.bf16.msra.mxu0 %v1325
      %1345 = vmatprep.subr.bf16.mxu0 0
      %1346 = vmatpush1.bf16.msra.mxu0 %v1324
      %1347 = vmatprep.subr.bf16.mxu0 0
      %1348 = vmatpush2.bf16.msra.mxu0 0
      %1349 = vmatprep.subr.bf16.mxu0 0
      %1350 = vmatpush2.bf16.msra.mxu0 0
      %1351 = vmatprep.subr.bf16.mxu0 0
      %1352 = vmatpush2.bf16.msra.mxu0 0
      %1353 = vmatprep.subr.bf16.mxu0 0
      %1354 = vmatpush2.bf16.msra.mxu0 0
      %1355 = vmatprep.subr.bf16.mxu0 0
      %1356 = vmatpush2.bf16.msra.mxu0 0
      %1357 = vmatprep.subr.bf16.mxu0 0
      %1358 = vmatpush2.bf16.msra.mxu0 0
      %1359 = vmatprep.subr.bf16.mxu0 0
      %1360 = vmatpush2.bf16.msra.mxu0 0
      %1361 = vmatprep.subr.bf16.mxu0 0
      %1362 = vmatpush2.bf16.msra.mxu0 0
      %1363 = vmatprep.mubr.bf16.mxu0 0
      %1364 = vmatmul.mubr.bf16.gmra.mxu0 %v1329
      %v1365 = vpop.f32.mrf.mxu0
      %v1366 = vadd.f32 %v1314, %v1365
      %v1367 = vpop.f32.mrf.mxu0
      %v1368 = vpop.f32.mrf.mxu0
      %v1369 = vpop.f32.mrf.mxu0
      %1370 = vdwg.mxu0
      %v1371 = vadd.f32 %v304, %v1366
      %v1372 = vsel %vm329, %v1371, 0.0
      %1373 = vadd.xlane.f32.xlu0 %v1372
      %v1374 = vpop.xlane.xlu0 %1373
      %v1375 = vrcp.pop 32.0
      %v1376 = vmul.f32 %v1374, %v1375
      %v1377 = vsub.f32 %v1371, %v1376
      %v1378 = vmul.f32 %v1377, %v1377
      %v1379 = vsel %vm329, %v1378, 0.0
      %1380 = vadd.xlane.f32.xlu0 %v1379
      %v1381 = vpop.xlane.xlu0 %1380
      %v1382 = vmul.f32 %v1381, %v1375
      %v1383 = vadd.f32 %v1382, 1e-05
      %v1384 = vrsqrt.pop %v1383
      %v1385 = vmul.f32 %v1377, %v1384
      %v1386 = vld [vmem:[%s6] sm:$0x1]
      %v1388 = vlaneseq
      %v1389 = vshrl.u32 %v1388, 7
      %v1390 = vsub.s32 0, %v1389
      %v1391 = vrot.slane %v1386, %v1390
      %v1393 = vmul.f32 %v1385, %v1391
      %v1394 = vld [vmem:[%s7] sm:$0x1]
      %v1396 = vlaneseq
      %v1397 = vshrl.u32 %v1396, 7
      %v1398 = vsub.s32 0, %v1397
      %v1399 = vrot.slane %v1394, %v1398
      %v1401 = vadd.f32 %v1393, %v1399
      %1402 = vst.msk [vmem:[%s300] sm:$0xff] %vm329, %v1401
      %p1403 = scmp.lt.s32.totalorder %s19, 1
      %s1404 = scalar_select %p1403, %s19, 1
      %s1405 = smul.addr %s1404, 8
      %s1406 = scalar_lea.vmem %s8, %s1405
      // Predicated region
      $region53: #{extractive_transformer_encoder.4} parent=51 // pred_check
        %p1407 = pneg %p210
      $region54: #{extractive_transformer_encoder.4} parent=51 // pred_check_branch
        %1409 = sbr.rel (%p1407) target = $region56
      $region55: #{extractive_transformer_encoder.4} parent=51 // pred_region
        _
      $region56: #{extractive_transformer_encoder.4} parent=51 // pred_fallthru
        _
    $region52: #{extractive_transformer_encoder.4} parent=5 // pred_fallthru
      _
    %p1410 = scmp.le.s32.totalorder 2, %s14
    // Predicated region
    $region57: #{extractive_transformer_encoder.4} parent=5 // pred_check
      %p1411 = pneg %p1410
    $region58: #{extractive_transformer_encoder.4} parent=5 // pred_check_branch
      %1413 = sbr.rel (%p1411) target = $region60
    $region59: #{extractive_transformer_encoder.4} parent=5 // pred_region
      %s1414 = ssub.s32 %s14, 2
      // Predicated region
      $region61: #{extractive_transformer_encoder.4} parent=59 // pred_check
        %p1415 = pneg %p216
      $region62: #{extractive_transformer_encoder.4} parent=59 // pred_check_branch
        %1417 = sbr.rel (%p1415) target = $region64
      $region63: #{extractive_transformer_encoder.4} parent=59 // pred_region
        %p1418 = scmp.lt.s32.totalorder %s20, 1
        %s1419 = scalar_select %p1418, %s20, 1
        %s1420 = smul.addr %s1419, 8
        %s1421 = scalar_lea.vmem %s8, %s1420
      $region64: #{extractive_transformer_encoder.4} parent=59 // pred_fallthru
        _
    $region60: #{extractive_transformer_encoder.4} parent=5 // pred_fallthru
      _
  $region6: #{extractive_transformer_encoder.4} parent=0 // loop_footer
    %s18 = sadd.s32 1, %s14
  $region7: #{extractive_transformer_encoder.4} parent=0 // loop_footer_branch
    %13 = sbr.rel target = $region3
  $region8: #{extractive_transformer_encoder.4} parent=0 // loop_exit
    _

// kernel: extractive_transformer_encoder.5
$region0: #{extractive_transformer_encoder.5}
  #allocation0 [shape = 'u32[]', space=smem, size = 0x4, offset = 0x4, fixed_abs, tag = 'smem constant byte address 0x4 - core index']
  #allocation1 [shape = 'u32[144,128]{1,0:T(1,128)}', space=vmem, size = 0x12000, scoped, tag = 'internal scratch']
  %s0 = inlined_call_operand.vmem [shape: f32[16,32], index: 0, kind: input, shape index: {}]
  %s1 = inlined_call_operand.vmem [shape: bf16[32,2048], index: 1, kind: input, shape index: {}]
  %s2 = inlined_call_operand.vmem [shape: f32[1,2048], index: 2, kind: input, shape index: {}]
  %s3 = inlined_call_operand.vmem [shape: bf16[2048,32], index: 3, kind: input, shape index: {}]
  %s4 = inlined_call_operand.vmem [shape: f32[1,32], index: 4, kind: input, shape index: {}]
  %s5 = inlined_call_operand.vmem [shape: f32[1,32], index: 5, kind: input, shape index: {}]
  %s6 = inlined_call_operand.vmem [shape: f32[1,32], index: 6, kind: input, shape index: {}]
  %s7 = inlined_call_operand.vmem [shape: f32[16,32], index: 7, kind: output, shape index: {}]
  %s8 = sld [smem:[#allocation0]]
  $region38: #{extractive_transformer_encoder.5} parent=0
    _
  %s10 = ssub.s32 1, %s8
  %s11 = scalar_select 0, %s10, %s8
  // Predicated region
  $region2: #{extractive_transformer_encoder.5} parent=0 // pred_check
    _
  $region3: #{extractive_transformer_encoder.5} parent=0 // pred_check_branch
    %13 = sbr.rel (0) target = $region5
  $region4: #{extractive_transformer_encoder.5} parent=0 // pred_region
    _
  $region5: #{extractive_transformer_encoder.5} parent=0 // pred_fallthru
    _
  // Predicated region
  $region6: #{extractive_transformer_encoder.5} parent=0 // pred_check
    _
  $region7: #{extractive_transformer_encoder.5} parent=0 // pred_check_branch
    %15 = sbr.rel (0) target = $region9
  $region8: #{extractive_transformer_encoder.5} parent=0 // pred_region
    _
  $region9: #{extractive_transformer_encoder.5} parent=0 // pred_fallthru
    _
  // Predicated region
  $region10: #{extractive_transformer_encoder.5} parent=0 // pred_check
    _
  $region11: #{extractive_transformer_encoder.5} parent=0 // pred_check_branch
    %17 = sbr.rel (0) target = $region13
  $region12: #{extractive_transformer_encoder.5} parent=0 // pred_region
    _
  $region13: #{extractive_transformer_encoder.5} parent=0 // pred_fallthru
    _
  // Predicated region
  $region14: #{extractive_transformer_encoder.5} parent=0 // pred_check
    _
  $region15: #{extractive_transformer_encoder.5} parent=0 // pred_check_branch
    %19 = sbr.rel (0) target = $region17
  $region16: #{extractive_transformer_encoder.5} parent=0 // pred_region
    _
  $region17: #{extractive_transformer_encoder.5} parent=0 // pred_fallthru
    _
  // Predicated region
  $region18: #{extractive_transformer_encoder.5} parent=0 // pred_check
    _
  $region19: #{extractive_transformer_encoder.5} parent=0 // pred_check_branch
    %21 = sbr.rel (0) target = $region21
  $region20: #{extractive_transformer_encoder.5} parent=0 // pred_region
    _
  $region21: #{extractive_transformer_encoder.5} parent=0 // pred_fallthru
    _
  // Predicated region
  $region22: #{extractive_transformer_encoder.5} parent=0 // pred_check
    _
  $region23: #{extractive_transformer_encoder.5} parent=0 // pred_check_branch
    %23 = sbr.rel (0) target = $region25
  $region24: #{extractive_transformer_encoder.5} parent=0 // pred_region
    _
  $region25: #{extractive_transformer_encoder.5} parent=0 // pred_fallthru
    _
  // Predicated region
  $region26: #{extractive_transformer_encoder.5} parent=0 // pred_check
    _
  $region27: #{extractive_transformer_encoder.5} parent=0 // pred_check_branch
    %25 = sbr.rel (0) target = $region29
  $region28: #{extractive_transformer_encoder.5} parent=0 // pred_region
    _
  $region29: #{extractive_transformer_encoder.5} parent=0 // pred_fallthru
    _
  %v27 = vld [vmem:[%s0] sm:$0xff]
  %v28 = vld [vmem:[%s0 + $0x8] sm:$0xff]
  %v29 = vpack.c.bf16 %v28, %v27
  %v30 = vld [vmem:[%s1] sm:$0xff]
  %v31 = vld [vmem:[%s1 + $0x8] sm:$0xff]
  %v32 = vld [vmem:[%s1 + $0x10] sm:$0xff]
  %v33 = vld [vmem:[%s1 + $0x18] sm:$0xff]
  %v34 = vld [vmem:[%s1 + $0x20] sm:$0xff]
  %v35 = vld [vmem:[%s1 + $0x28] sm:$0xff]
  %v36 = vld [vmem:[%s1 + $0x30] sm:$0xff]
  %v37 = vld [vmem:[%s1 + $0x38] sm:$0xff]
  %v38 = vld [vmem:[%s1 + $0x40] sm:$0xff]
  %v39 = vld [vmem:[%s1 + $0x48] sm:$0xff]
  %v40 = vld [vmem:[%s1 + $0x50] sm:$0xff]
  %v41 = vld [vmem:[%s1 + $0x58] sm:$0xff]
  %v42 = vld [vmem:[%s1 + $0x60] sm:$0xff]
  %v43 = vld [vmem:[%s1 + $0x68] sm:$0xff]
  %v44 = vld [vmem:[%s1 + $0x70] sm:$0xff]
  %v45 = vld [vmem:[%s1 + $0x78] sm:$0xff]
  %v46 = vld [vmem:[%s1 + $0x80] sm:$0xff]
  %v47 = vld [vmem:[%s1 + $0x88] sm:$0xff]
  %v48 = vld [vmem:[%s1 + $0x90] sm:$0xff]
  %v49 = vld [vmem:[%s1 + $0x98] sm:$0xff]
  %v50 = vld [vmem:[%s1 + $0xa0] sm:$0xff]
  %v51 = vld [vmem:[%s1 + $0xa8] sm:$0xff]
  %v52 = vld [vmem:[%s1 + $0xb0] sm:$0xff]
  %v53 = vld [vmem:[%s1 + $0xb8] sm:$0xff]
  %v54 = vld [vmem:[%s1 + $0xc0] sm:$0xff]
  %v55 = vld [vmem:[%s1 + $0xc8] sm:$0xff]
  %v56 = vld [vmem:[%s1 + $0xd0] sm:$0xff]
  %v57 = vld [vmem:[%s1 + $0xd8] sm:$0xff]
  %v58 = vld [vmem:[%s1 + $0xe0] sm:$0xff]
  %v59 = vld [vmem:[%s1 + $0xe8] sm:$0xff]
  %v60 = vld [vmem:[%s1 + $0xf0] sm:$0xff]
  %v61 = vld [vmem:[%s1 + $0xf8] sm:$0xff]
  %v62 = vld [vmem:[%s2] sm:$0xff]
  %v63 = vld [vmem:[%s2 + $0x8] sm:$0xff]
  %v66 = vlaneseq
  %v67 = vshrl.u32 %v66, 7
  %v68 = vsub.s32 0, %v67
  %v69 = vrot.slane %v62, %v68
  %v70 = vlaneseq
  %v71 = vshrl.u32 %v70, 7
  %v72 = vsub.s32 1, %v71
  %v73 = vrot.slane %v62, %v72
  %v74 = vlaneseq
  %v75 = vshrl.u32 %v74, 7
  %v76 = vsub.s32 2, %v75
  %v77 = vrot.slane %v62, %v76
  %v78 = vlaneseq
  %v79 = vshrl.u32 %v78, 7
  %v80 = vsub.s32 3, %v79
  %v81 = vrot.slane %v62, %v80
  %v82 = vlaneseq
  %v83 = vshrl.u32 %v82, 7
  %v84 = vsub.s32 4, %v83
  %v85 = vrot.slane %v62, %v84
  %v86 = vlaneseq
  %v87 = vshrl.u32 %v86, 7
  %v88 = vsub.s32 5, %v87
  %v89 = vrot.slane %v62, %v88
  %v90 = vlaneseq
  %v91 = vshrl.u32 %v90, 7
  %v92 = vsub.s32 6, %v91
  %v93 = vrot.slane %v62, %v92
  %v94 = vlaneseq
  %v95 = vshrl.u32 %v94, 7
  %v96 = vsub.s32 7, %v95
  %v97 = vrot.slane %v62, %v96
  %v98 = vlaneseq
  %v99 = vshrl.u32 %v98, 7
  %v100 = vsub.s32 0, %v99
  %v101 = vrot.slane %v63, %v100
  %v102 = vlaneseq
  %v103 = vshrl.u32 %v102, 7
  %v104 = vsub.s32 1, %v103
  %v105 = vrot.slane %v63, %v104
  %v106 = vlaneseq
  %v107 = vshrl.u32 %v106, 7
  %v108 = vsub.s32 2, %v107
  %v109 = vrot.slane %v63, %v108
  %v110 = vlaneseq
  %v111 = vshrl.u32 %v110, 7
  %v112 = vsub.s32 3, %v111
  %v113 = vrot.slane %v63, %v112
  %v114 = vlaneseq
  %v115 = vshrl.u32 %v114, 7
  %v116 = vsub.s32 4, %v115
  %v117 = vrot.slane %v63, %v116
  %v118 = vlaneseq
  %v119 = vshrl.u32 %v118, 7
  %v120 = vsub.s32 5, %v119
  %v121 = vrot.slane %v63, %v120
  %v122 = vlaneseq
  %v123 = vshrl.u32 %v122, 7
  %v124 = vsub.s32 6, %v123
  %v125 = vrot.slane %v63, %v124
  %v126 = vlaneseq
  %v127 = vshrl.u32 %v126, 7
  %v128 = vsub.s32 7, %v127
  %v129 = vrot.slane %v63, %v128
  %v178 = vunpack.c.l.b16 %v30
  %v179 = vunpack.c.h.b16 %v30
  %v180 = vunpack.c.l.b16 %v31
  %v181 = vunpack.c.h.b16 %v31
  %v182 = vunpack.c.l.b16 %v32
  %v183 = vunpack.c.h.b16 %v32
  %v184 = vunpack.c.l.b16 %v33
  %v185 = vunpack.c.h.b16 %v33
  %v186 = vunpack.c.l.b16 %v34
  %v187 = vunpack.c.h.b16 %v34
  %v188 = vunpack.c.l.b16 %v35
  %v189 = vunpack.c.h.b16 %v35
  %v190 = vunpack.c.l.b16 %v36
  %v191 = vunpack.c.h.b16 %v36
  %v192 = vunpack.c.l.b16 %v37
  %v193 = vunpack.c.h.b16 %v37
  %v194 = vunpack.c.l.b16 %v38
  %v195 = vunpack.c.h.b16 %v38
  %v196 = vunpack.c.l.b16 %v39
  %v197 = vunpack.c.h.b16 %v39
  %v198 = vunpack.c.l.b16 %v40
  %v199 = vunpack.c.h.b16 %v40
  %v200 = vunpack.c.l.b16 %v41
  %v201 = vunpack.c.h.b16 %v41
  %v202 = vunpack.c.l.b16 %v42
  %v203 = vunpack.c.h.b16 %v42
  %v204 = vunpack.c.l.b16 %v43
  %v205 = vunpack.c.h.b16 %v43
  %v206 = vunpack.c.l.b16 %v44
  %v207 = vunpack.c.h.b16 %v44
  %v208 = vunpack.c.l.b16 %v45
  %v209 = vunpack.c.h.b16 %v45
  %v210 = vunpack.c.l.b16 %v46
  %v211 = vunpack.c.h.b16 %v46
  %v212 = vunpack.c.l.b16 %v47
  %v213 = vunpack.c.h.b16 %v47
  %v214 = vunpack.c.l.b16 %v48
  %v215 = vunpack.c.h.b16 %v48
  %v216 = vunpack.c.l.b16 %v49
  %v217 = vunpack.c.h.b16 %v49
  %v218 = vunpack.c.l.b16 %v50
  %v219 = vunpack.c.h.b16 %v50
  %v220 = vunpack.c.l.b16 %v51
  %v221 = vunpack.c.h.b16 %v51
  %v222 = vunpack.c.l.b16 %v52
  %v223 = vunpack.c.h.b16 %v52
  %v224 = vunpack.c.l.b16 %v53
  %v225 = vunpack.c.h.b16 %v53
  %v226 = vunpack.c.l.b16 %v54
  %v227 = vunpack.c.h.b16 %v54
  %v228 = vunpack.c.l.b16 %v55
  %v229 = vunpack.c.h.b16 %v55
  %v230 = vunpack.c.l.b16 %v56
  %v231 = vunpack.c.h.b16 %v56
  %v232 = vunpack.c.l.b16 %v57
  %v233 = vunpack.c.h.b16 %v57
  %v234 = vunpack.c.l.b16 %v58
  %v235 = vunpack.c.h.b16 %v58
  %v236 = vunpack.c.l.b16 %v59
  %v237 = vunpack.c.h.b16 %v59
  %v238 = vunpack.c.l.b16 %v60
  %v239 = vunpack.c.h.b16 %v60
  %v240 = vunpack.c.l.b16 %v61
  %v241 = vunpack.c.h.b16 %v61
  %v242 = vpack.c.b16 %v194, %v178
  %v243 = vpack.c.b16 %v195, %v179
  %v244 = vpack.c.b16 %v196, %v180
  %v245 = vpack.c.b16 %v197, %v181
  %v246 = vpack.c.b16 %v198, %v182
  %v247 = vpack.c.b16 %v199, %v183
  %v248 = vpack.c.b16 %v200, %v184
  %v249 = vpack.c.b16 %v201, %v185
  %v250 = vpack.c.b16 %v202, %v186
  %v251 = vpack.c.b16 %v203, %v187
  %v252 = vpack.c.b16 %v204, %v188
  %v253 = vpack.c.b16 %v205, %v189
  %v254 = vpack.c.b16 %v206, %v190
  %v255 = vpack.c.b16 %v207, %v191
  %v256 = vpack.c.b16 %v208, %v192
  %v257 = vpack.c.b16 %v209, %v193
  %v258 = vpack.c.b16 %v226, %v210
  %v259 = vpack.c.b16 %v227, %v211
  %v260 = vpack.c.b16 %v228, %v212
  %v261 = vpack.c.b16 %v229, %v213
  %v262 = vpack.c.b16 %v230, %v214
  %v263 = vpack.c.b16 %v231, %v215
  %v264 = vpack.c.b16 %v232, %v216
  %v265 = vpack.c.b16 %v233, %v217
  %v266 = vpack.c.b16 %v234, %v218
  %v267 = vpack.c.b16 %v235, %v219
  %v268 = vpack.c.b16 %v236, %v220
  %v269 = vpack.c.b16 %v237, %v221
  %v270 = vpack.c.b16 %v238, %v222
  %v271 = vpack.c.b16 %v239, %v223
  %v272 = vpack.c.b16 %v240, %v224
  %v273 = vpack.c.b16 %v241, %v225
  %vm306 = vcmask 261120
  %v308 = vsel %vm306, %v29, 0
  %310 = vmatprep.subr.bf16.mxu0 0
  %311 = vmatpush1.bf16.msra.mxu0 0
  %312 = vmatprep.subr.bf16.mxu0 0
  %313 = vmatpush1.bf16.msra.mxu0 0
  %314 = vmatprep.subr.bf16.mxu0 0
  %315 = vmatpush1.bf16.msra.mxu0 0
  %316 = vmatprep.subr.bf16.mxu0 0
  %317 = vmatpush1.bf16.msra.mxu0 0
  %318 = vmatprep.subr.bf16.mxu0 0
  %319 = vmatpush1.bf16.msra.mxu0 0
  %320 = vmatprep.subr.bf16.mxu0 0
  %321 = vmatpush1.bf16.msra.mxu0 0
  %322 = vmatprep.subr.bf16.mxu0 %v259
  %323 = vmatpush1.bf16.msra.mxu0 %v258
  %324 = vmatprep.subr.bf16.mxu0 %v243
  %325 = vmatpush1.bf16.msra.mxu0 %v242
  %326 = vmatprep.subr.bf16.mxu0 0
  %327 = vmatpush2.bf16.msra.mxu0 0
  %328 = vmatprep.subr.bf16.mxu0 0
  %329 = vmatpush2.bf16.msra.mxu0 0
  %330 = vmatprep.subr.bf16.mxu0 0
  %331 = vmatpush2.bf16.msra.mxu0 0
  %332 = vmatprep.subr.bf16.mxu0 0
  %333 = vmatpush2.bf16.msra.mxu0 0
  %334 = vmatprep.subr.bf16.mxu0 0
  %335 = vmatpush2.bf16.msra.mxu0 0
  %336 = vmatprep.subr.bf16.mxu0 0
  %337 = vmatpush2.bf16.msra.mxu0 0
  %338 = vmatprep.subr.bf16.mxu0 0
  %339 = vmatpush2.bf16.msra.mxu0 0
  %340 = vmatprep.subr.bf16.mxu0 0
  %341 = vmatpush2.bf16.msra.mxu0 0
  %342 = vmatprep.mubr.bf16.mxu0 0
  %343 = vmatmul.mubr.bf16.gmra.mxu0 %v308
  %v344 = vpop.f32.mrf.mxu0
  %v345 = vadd.f32 %v69, %v344
  %v346 = vpop.f32.mrf.mxu0
  %v347 = vadd.f32 %v73, %v346
  %v348 = vpop.f32.mrf.mxu0
  %v349 = vadd.f32 %v69, %v348
  %v350 = vpop.f32.mrf.mxu0
  %v351 = vadd.f32 %v73, %v350
  %352 = vdwg.mxu0
  %353 = vmatprep.subr.bf16.mxu0 0
  %354 = vmatpush1.bf16.msra.mxu0 0
  %355 = vmatprep.subr.bf16.mxu0 0
  %356 = vmatpush1.bf16.msra.mxu0 0
  %357 = vmatprep.subr.bf16.mxu0 0
  %358 = vmatpush1.bf16.msra.mxu0 0
  %359 = vmatprep.subr.bf16.mxu0 0
  %360 = vmatpush1.bf16.msra.mxu0 0
  %361 = vmatprep.subr.bf16.mxu0 0
  %362 = vmatpush1.bf16.msra.mxu0 0
  %363 = vmatprep.subr.bf16.mxu0 0
  %364 = vmatpush1.bf16.msra.mxu0 0
  %365 = vmatprep.subr.bf16.mxu0 %v261
  %366 = vmatpush1.bf16.msra.mxu0 %v260
  %367 = vmatprep.subr.bf16.mxu0 %v245
  %368 = vmatpush1.bf16.msra.mxu0 %v244
  %369 = vmatprep.subr.bf16.mxu0 0
  %370 = vmatpush2.bf16.msra.mxu0 0
  %371 = vmatprep.subr.bf16.mxu0 0
  %372 = vmatpush2.bf16.msra.mxu0 0
  %373 = vmatprep.subr.bf16.mxu0 0
  %374 = vmatpush2.bf16.msra.mxu0 0
  %375 = vmatprep.subr.bf16.mxu0 0
  %376 = vmatpush2.bf16.msra.mxu0 0
  %377 = vmatprep.subr.bf16.mxu0 0
  %378 = vmatpush2.bf16.msra.mxu0 0
  %379 = vmatprep.subr.bf16.mxu0 0
  %380 = vmatpush2.bf16.msra.mxu0 0
  %381 = vmatprep.subr.bf16.mxu0 0
  %382 = vmatpush2.bf16.msra.mxu0 0
  %383 = vmatprep.subr.bf16.mxu0 0
  %384 = vmatpush2.bf16.msra.mxu0 0
  %385 = vmatprep.mubr.bf16.mxu0 0
  %386 = vmatmul.mubr.bf16.gmra.mxu0 %v308
  %v387 = vpop.f32.mrf.mxu0
  %v388 = vadd.f32 %v77, %v387
  %v389 = vpop.f32.mrf.mxu0
  %v390 = vadd.f32 %v81, %v389
  %v391 = vpop.f32.mrf.mxu0
  %v392 = vadd.f32 %v77, %v391
  %v393 = vpop.f32.mrf.mxu0
  %v394 = vadd.f32 %v81, %v393
  %395 = vdwg.mxu0
  %396 = vmatprep.subr.bf16.mxu0 0
  %397 = vmatpush1.bf16.msra.mxu0 0
  %398 = vmatprep.subr.bf16.mxu0 0
  %399 = vmatpush1.bf16.msra.mxu0 0
  %400 = vmatprep.subr.bf16.mxu0 0
  %401 = vmatpush1.bf16.msra.mxu0 0
  %402 = vmatprep.subr.bf16.mxu0 0
  %403 = vmatpush1.bf16.msra.mxu0 0
  %404 = vmatprep.subr.bf16.mxu0 0
  %405 = vmatpush1.bf16.msra.mxu0 0
  %406 = vmatprep.subr.bf16.mxu0 0
  %407 = vmatpush1.bf16.msra.mxu0 0
  %408 = vmatprep.subr.bf16.mxu0 %v263
  %409 = vmatpush1.bf16.msra.mxu0 %v262
  %410 = vmatprep.subr.bf16.mxu0 %v247
  %411 = vmatpush1.bf16.msra.mxu0 %v246
  %412 = vmatprep.subr.bf16.mxu0 0
  %413 = vmatpush2.bf16.msra.mxu0 0
  %414 = vmatprep.subr.bf16.mxu0 0
  %415 = vmatpush2.bf16.msra.mxu0 0
  %416 = vmatprep.subr.bf16.mxu0 0
  %417 = vmatpush2.bf16.msra.mxu0 0
  %418 = vmatprep.subr.bf16.mxu0 0
  %419 = vmatpush2.bf16.msra.mxu0 0
  %420 = vmatprep.subr.bf16.mxu0 0
  %421 = vmatpush2.bf16.msra.mxu0 0
  %422 = vmatprep.subr.bf16.mxu0 0
  %423 = vmatpush2.bf16.msra.mxu0 0
  %424 = vmatprep.subr.bf16.mxu0 0
  %425 = vmatpush2.bf16.msra.mxu0 0
  %426 = vmatprep.subr.bf16.mxu0 0
  %427 = vmatpush2.bf16.msra.mxu0 0
  %428 = vmatprep.mubr.bf16.mxu0 0
  %429 = vmatmul.mubr.bf16.gmra.mxu0 %v308
  %v430 = vpop.f32.mrf.mxu0
  %v431 = vadd.f32 %v85, %v430
  %v432 = vpop.f32.mrf.mxu0
  %v433 = vadd.f32 %v89, %v432
  %v434 = vpop.f32.mrf.mxu0
  %v435 = vadd.f32 %v85, %v434
  %v436 = vpop.f32.mrf.mxu0
  %v437 = vadd.f32 %v89, %v436
  %438 = vdwg.mxu0
  %439 = vmatprep.subr.bf16.mxu0 0
  %440 = vmatpush1.bf16.msra.mxu0 0
  %441 = vmatprep.subr.bf16.mxu0 0
  %442 = vmatpush1.bf16.msra.mxu0 0
  %443 = vmatprep.subr.bf16.mxu0 0
  %444 = vmatpush1.bf16.msra.mxu0 0
  %445 = vmatprep.subr.bf16.mxu0 0
  %446 = vmatpush1.bf16.msra.mxu0 0
  %447 = vmatprep.subr.bf16.mxu0 0
  %448 = vmatpush1.bf16.msra.mxu0 0
  %449 = vmatprep.subr.bf16.mxu0 0
  %450 = vmatpush1.bf16.msra.mxu0 0
  %451 = vmatprep.subr.bf16.mxu0 %v265
  %452 = vmatpush1.bf16.msra.mxu0 %v264
  %453 = vmatprep.subr.bf16.mxu0 %v249
  %454 = vmatpush1.bf16.msra.mxu0 %v248
  %455 = vmatprep.subr.bf16.mxu0 0
  %456 = vmatpush2.bf16.msra.mxu0 0
  %457 = vmatprep.subr.bf16.mxu0 0
  %458 = vmatpush2.bf16.msra.mxu0 0
  %459 = vmatprep.subr.bf16.mxu0 0
  %460 = vmatpush2.bf16.msra.mxu0 0
  %461 = vmatprep.subr.bf16.mxu0 0
  %462 = vmatpush2.bf16.msra.mxu0 0
  %463 = vmatprep.subr.bf16.mxu0 0
  %464 = vmatpush2.bf16.msra.mxu0 0
  %465 = vmatprep.subr.bf16.mxu0 0
  %466 = vmatpush2.bf16.msra.mxu0 0
  %467 = vmatprep.subr.bf16.mxu0 0
  %468 = vmatpush2.bf16.msra.mxu0 0
  %469 = vmatprep.subr.bf16.mxu0 0
  %470 = vmatpush2.bf16.msra.mxu0 0
  %471 = vmatprep.mubr.bf16.mxu0 0
  %472 = vmatmul.mubr.bf16.gmra.mxu0 %v308
  %v473 = vpop.f32.mrf.mxu0
  %v474 = vadd.f32 %v93, %v473
  %v475 = vpop.f32.mrf.mxu0
  %v476 = vadd.f32 %v97, %v475
  %v477 = vpop.f32.mrf.mxu0
  %v478 = vadd.f32 %v93, %v477
  %v479 = vpop.f32.mrf.mxu0
  %v480 = vadd.f32 %v97, %v479
  %481 = vdwg.mxu0
  %482 = vmatprep.subr.bf16.mxu0 0
  %483 = vmatpush1.bf16.msra.mxu0 0
  %484 = vmatprep.subr.bf16.mxu0 0
  %485 = vmatpush1.bf16.msra.mxu0 0
  %486 = vmatprep.subr.bf16.mxu0 0
  %487 = vmatpush1.bf16.msra.mxu0 0
  %488 = vmatprep.subr.bf16.mxu0 0
  %489 = vmatpush1.bf16.msra.mxu0 0
  %490 = vmatprep.subr.bf16.mxu0 0
  %491 = vmatpush1.bf16.msra.mxu0 0
  %492 = vmatprep.subr.bf16.mxu0 0
  %493 = vmatpush1.bf16.msra.mxu0 0
  %494 = vmatprep.subr.bf16.mxu0 %v267
  %495 = vmatpush1.bf16.msra.mxu0 %v266
  %496 = vmatprep.subr.bf16.mxu0 %v251
  %497 = vmatpush1.bf16.msra.mxu0 %v250
  %498 = vmatprep.subr.bf16.mxu0 0
  %499 = vmatpush2.bf16.msra.mxu0 0
  %500 = vmatprep.subr.bf16.mxu0 0
  %501 = vmatpush2.bf16.msra.mxu0 0
  %502 = vmatprep.subr.bf16.mxu0 0
  %503 = vmatpush2.bf16.msra.mxu0 0
  %504 = vmatprep.subr.bf16.mxu0 0
  %505 = vmatpush2.bf16.msra.mxu0 0
  %506 = vmatprep.subr.bf16.mxu0 0
  %507 = vmatpush2.bf16.msra.mxu0 0
  %508 = vmatprep.subr.bf16.mxu0 0
  %509 = vmatpush2.bf16.msra.mxu0 0
  %510 = vmatprep.subr.bf16.mxu0 0
  %511 = vmatpush2.bf16.msra.mxu0 0
  %512 = vmatprep.subr.bf16.mxu0 0
  %513 = vmatpush2.bf16.msra.mxu0 0
  %514 = vmatprep.mubr.bf16.mxu0 0
  %515 = vmatmul.mubr.bf16.gmra.mxu0 %v308
  %v516 = vpop.f32.mrf.mxu0
  %v517 = vadd.f32 %v101, %v516
  %v518 = vpop.f32.mrf.mxu0
  %v519 = vadd.f32 %v105, %v518
  %v520 = vpop.f32.mrf.mxu0
  %v521 = vadd.f32 %v101, %v520
  %v522 = vpop.f32.mrf.mxu0
  %v523 = vadd.f32 %v105, %v522
  %524 = vdwg.mxu0
  %525 = vmatprep.subr.bf16.mxu0 0
  %526 = vmatpush1.bf16.msra.mxu0 0
  %527 = vmatprep.subr.bf16.mxu0 0
  %528 = vmatpush1.bf16.msra.mxu0 0
  %529 = vmatprep.subr.bf16.mxu0 0
  %530 = vmatpush1.bf16.msra.mxu0 0
  %531 = vmatprep.subr.bf16.mxu0 0
  %532 = vmatpush1.bf16.msra.mxu0 0
  %533 = vmatprep.subr.bf16.mxu0 0
  %534 = vmatpush1.bf16.msra.mxu0 0
  %535 = vmatprep.subr.bf16.mxu0 0
  %536 = vmatpush1.bf16.msra.mxu0 0
  %537 = vmatprep.subr.bf16.mxu0 %v269
  %538 = vmatpush1.bf16.msra.mxu0 %v268
  %539 = vmatprep.subr.bf16.mxu0 %v253
  %540 = vmatpush1.bf16.msra.mxu0 %v252
  %541 = vmatprep.subr.bf16.mxu0 0
  %542 = vmatpush2.bf16.msra.mxu0 0
  %543 = vmatprep.subr.bf16.mxu0 0
  %544 = vmatpush2.bf16.msra.mxu0 0
  %545 = vmatprep.subr.bf16.mxu0 0
  %546 = vmatpush2.bf16.msra.mxu0 0
  %547 = vmatprep.subr.bf16.mxu0 0
  %548 = vmatpush2.bf16.msra.mxu0 0
  %549 = vmatprep.subr.bf16.mxu0 0
  %550 = vmatpush2.bf16.msra.mxu0 0
  %551 = vmatprep.subr.bf16.mxu0 0
  %552 = vmatpush2.bf16.msra.mxu0 0
  %553 = vmatprep.subr.bf16.mxu0 0
  %554 = vmatpush2.bf16.msra.mxu0 0
  %555 = vmatprep.subr.bf16.mxu0 0
  %556 = vmatpush2.bf16.msra.mxu0 0
  %557 = vmatprep.mubr.bf16.mxu0 0
  %558 = vmatmul.mubr.bf16.gmra.mxu0 %v308
  %v559 = vpop.f32.mrf.mxu0
  %v560 = vadd.f32 %v109, %v559
  %v561 = vpop.f32.mrf.mxu0
  %v562 = vadd.f32 %v113, %v561
  %v563 = vpop.f32.mrf.mxu0
  %v564 = vadd.f32 %v109, %v563
  %v565 = vpop.f32.mrf.mxu0
  %v566 = vadd.f32 %v113, %v565
  %567 = vdwg.mxu0
  %568 = vmatprep.subr.bf16.mxu0 0
  %569 = vmatpush1.bf16.msra.mxu0 0
  %570 = vmatprep.subr.bf16.mxu0 0
  %571 = vmatpush1.bf16.msra.mxu0 0
  %572 = vmatprep.subr.bf16.mxu0 0
  %573 = vmatpush1.bf16.msra.mxu0 0
  %574 = vmatprep.subr.bf16.mxu0 0
  %575 = vmatpush1.bf16.msra.mxu0 0
  %576 = vmatprep.subr.bf16.mxu0 0
  %577 = vmatpush1.bf16.msra.mxu0 0
  %578 = vmatprep.subr.bf16.mxu0 0
  %579 = vmatpush1.bf16.msra.mxu0 0
  %580 = vmatprep.subr.bf16.mxu0 %v271
  %581 = vmatpush1.bf16.msra.mxu0 %v270
  %582 = vmatprep.subr.bf16.mxu0 %v255
  %583 = vmatpush1.bf16.msra.mxu0 %v254
  %584 = vmatprep.subr.bf16.mxu0 0
  %585 = vmatpush2.bf16.msra.mxu0 0
  %586 = vmatprep.subr.bf16.mxu0 0
  %587 = vmatpush2.bf16.msra.mxu0 0
  %588 = vmatprep.subr.bf16.mxu0 0
  %589 = vmatpush2.bf16.msra.mxu0 0
  %590 = vmatprep.subr.bf16.mxu0 0
  %591 = vmatpush2.bf16.msra.mxu0 0
  %592 = vmatprep.subr.bf16.mxu0 0
  %593 = vmatpush2.bf16.msra.mxu0 0
  %594 = vmatprep.subr.bf16.mxu0 0
  %595 = vmatpush2.bf16.msra.mxu0 0
  %596 = vmatprep.subr.bf16.mxu0 0
  %597 = vmatpush2.bf16.msra.mxu0 0
  %598 = vmatprep.subr.bf16.mxu0 0
  %599 = vmatpush2.bf16.msra.mxu0 0
  %600 = vmatprep.mubr.bf16.mxu0 0
  %601 = vmatmul.mubr.bf16.gmra.mxu0 %v308
  %v602 = vpop.f32.mrf.mxu0
  %v603 = vadd.f32 %v117, %v602
  %v604 = vpop.f32.mrf.mxu0
  %v605 = vadd.f32 %v121, %v604
  %v606 = vpop.f32.mrf.mxu0
  %v607 = vadd.f32 %v117, %v606
  %v608 = vpop.f32.mrf.mxu0
  %v609 = vadd.f32 %v121, %v608
  %610 = vdwg.mxu0
  %611 = vmatprep.subr.bf16.mxu0 0
  %612 = vmatpush1.bf16.msra.mxu0 0
  %613 = vmatprep.subr.bf16.mxu0 0
  %614 = vmatpush1.bf16.msra.mxu0 0
  %615 = vmatprep.subr.bf16.mxu0 0
  %616 = vmatpush1.bf16.msra.mxu0 0
  %617 = vmatprep.subr.bf16.mxu0 0
  %618 = vmatpush1.bf16.msra.mxu0 0
  %619 = vmatprep.subr.bf16.mxu0 0
  %620 = vmatpush1.bf16.msra.mxu0 0
  %621 = vmatprep.subr.bf16.mxu0 0
  %622 = vmatpush1.bf16.msra.mxu0 0
  %623 = vmatprep.subr.bf16.mxu0 %v273
  %624 = vmatpush1.bf16.msra.mxu0 %v272
  %625 = vmatprep.subr.bf16.mxu0 %v257
  %626 = vmatpush1.bf16.msra.mxu0 %v256
  %627 = vmatprep.subr.bf16.mxu0 0
  %628 = vmatpush2.bf16.msra.mxu0 0
  %629 = vmatprep.subr.bf16.mxu0 0
  %630 = vmatpush2.bf16.msra.mxu0 0
  %631 = vmatprep.subr.bf16.mxu0 0
  %632 = vmatpush2.bf16.msra.mxu0 0
  %633 = vmatprep.subr.bf16.mxu0 0
  %634 = vmatpush2.bf16.msra.mxu0 0
  %635 = vmatprep.subr.bf16.mxu0 0
  %636 = vmatpush2.bf16.msra.mxu0 0
  %637 = vmatprep.subr.bf16.mxu0 0
  %638 = vmatpush2.bf16.msra.mxu0 0
  %639 = vmatprep.subr.bf16.mxu0 0
  %640 = vmatpush2.bf16.msra.mxu0 0
  %641 = vmatprep.subr.bf16.mxu0 0
  %642 = vmatpush2.bf16.msra.mxu0 0
  %643 = vmatprep.mubr.bf16.mxu0 0
  %644 = vmatmul.mubr.bf16.gmra.mxu0 %v308
  %v645 = vpop.f32.mrf.mxu0
  %v646 = vadd.f32 %v125, %v645
  %v647 = vpop.f32.mrf.mxu0
  %v648 = vadd.f32 %v129, %v647
  %v649 = vpop.f32.mrf.mxu0
  %v650 = vadd.f32 %v125, %v649
  %v651 = vpop.f32.mrf.mxu0
  %v652 = vadd.f32 %v129, %v651
  %653 = vdwg.mxu0
  %v654 = vmax.f32 %v345, 0.0
  %v655 = vmax.f32 %v347, 0.0
  %v656 = vmax.f32 %v388, 0.0
  %v657 = vmax.f32 %v390, 0.0
  %v658 = vmax.f32 %v431, 0.0
  %v659 = vmax.f32 %v433, 0.0
  %v660 = vmax.f32 %v474, 0.0
  %v661 = vmax.f32 %v476, 0.0
  %v662 = vmax.f32 %v517, 0.0
  %v663 = vmax.f32 %v519, 0.0
  %v664 = vmax.f32 %v560, 0.0
  %v665 = vmax.f32 %v562, 0.0
  %v666 = vmax.f32 %v603, 0.0
  %v667 = vmax.f32 %v605, 0.0
  %v668 = vmax.f32 %v646, 0.0
  %v669 = vmax.f32 %v648, 0.0
  %v670 = vmax.f32 %v349, 0.0
  %v671 = vmax.f32 %v351, 0.0
  %v672 = vmax.f32 %v392, 0.0
  %v673 = vmax.f32 %v394, 0.0
  %v674 = vmax.f32 %v435, 0.0
  %v675 = vmax.f32 %v437, 0.0
  %v676 = vmax.f32 %v478, 0.0
  %v677 = vmax.f32 %v480, 0.0
  %v678 = vmax.f32 %v521, 0.0
  %v679 = vmax.f32 %v523, 0.0
  %v680 = vmax.f32 %v564, 0.0
  %v681 = vmax.f32 %v566, 0.0
  %v682 = vmax.f32 %v607, 0.0
  %v683 = vmax.f32 %v609, 0.0
  %v684 = vmax.f32 %v650, 0.0
  %v685 = vmax.f32 %v652, 0.0
  %v686 = vpack.c.bf16 %v670, %v654
  %v687 = vpack.c.bf16 %v671, %v655
  %v688 = vpack.c.bf16 %v672, %v656
  %v689 = vpack.c.bf16 %v673, %v657
  %v690 = vpack.c.bf16 %v674, %v658
  %v691 = vpack.c.bf16 %v675, %v659
  %v692 = vpack.c.bf16 %v676, %v660
  %v693 = vpack.c.bf16 %v677, %v661
  %v694 = vpack.c.bf16 %v678, %v662
  %v695 = vpack.c.bf16 %v679, %v663
  %v696 = vpack.c.bf16 %v680, %v664
  %v697 = vpack.c.bf16 %v681, %v665
  %v698 = vpack.c.bf16 %v682, %v666
  %v699 = vpack.c.bf16 %v683, %v667
  %v700 = vpack.c.bf16 %v684, %v668
  %v701 = vpack.c.bf16 %v685, %v669
  %v702 = vld [vmem:[%s3] sm:$0xf]
  %v703 = vld [vmem:[%s3 + $0x4] sm:$0xf]
  %v704 = vld [vmem:[%s3 + $0x8] sm:$0xf]
  %v705 = vld [vmem:[%s3 + $0xc] sm:$0xf]
  %v706 = vld [vmem:[%s3 + $0x10] sm:$0xf]
  %v707 = vld [vmem:[%s3 + $0x14] sm:$0xf]
  %v708 = vld [vmem:[%s3 + $0x18] sm:$0xf]
  %v709 = vld [vmem:[%s3 + $0x1c] sm:$0xf]
  %v710 = vld [vmem:[%s3 + $0x20] sm:$0xf]
  %v711 = vld [vmem:[%s3 + $0x24] sm:$0xf]
  %v712 = vld [vmem:[%s3 + $0x28] sm:$0xf]
  %v713 = vld [vmem:[%s3 + $0x2c] sm:$0xf]
  %v714 = vld [vmem:[%s3 + $0x30] sm:$0xf]
  %v715 = vld [vmem:[%s3 + $0x34] sm:$0xf]
  %v716 = vld [vmem:[%s3 + $0x38] sm:$0xf]
  %v717 = vld [vmem:[%s3 + $0x3c] sm:$0xf]
  %v718 = vld [vmem:[%s3 + $0x40] sm:$0xf]
  %v719 = vld [vmem:[%s3 + $0x44] sm:$0xf]
  %v720 = vld [vmem:[%s3 + $0x48] sm:$0xf]
  %v721 = vld [vmem:[%s3 + $0x4c] sm:$0xf]
  %v722 = vld [vmem:[%s3 + $0x50] sm:$0xf]
  %v723 = vld [vmem:[%s3 + $0x54] sm:$0xf]
  %v724 = vld [vmem:[%s3 + $0x58] sm:$0xf]
  %v725 = vld [vmem:[%s3 + $0x5c] sm:$0xf]
  %v726 = vld [vmem:[%s3 + $0x60] sm:$0xf]
  %v727 = vld [vmem:[%s3 + $0x64] sm:$0xf]
  %v728 = vld [vmem:[%s3 + $0x68] sm:$0xf]
  %v729 = vld [vmem:[%s3 + $0x6c] sm:$0xf]
  %v730 = vld [vmem:[%s3 + $0x70] sm:$0xf]
  %v731 = vld [vmem:[%s3 + $0x74] sm:$0xf]
  %v732 = vld [vmem:[%s3 + $0x78] sm:$0xf]
  %v733 = vld [vmem:[%s3 + $0x7c] sm:$0xf]
  %v734 = vld [vmem:[%s3 + $0x80] sm:$0xf]
  %v735 = vld [vmem:[%s3 + $0x84] sm:$0xf]
  %v736 = vld [vmem:[%s3 + $0x88] sm:$0xf]
  %v737 = vld [vmem:[%s3 + $0x8c] sm:$0xf]
  %v738 = vld [vmem:[%s3 + $0x90] sm:$0xf]
  %v739 = vld [vmem:[%s3 + $0x94] sm:$0xf]
  %v740 = vld [vmem:[%s3 + $0x98] sm:$0xf]
  %v741 = vld [vmem:[%s3 + $0x9c] sm:$0xf]
  %v742 = vld [vmem:[%s3 + $0xa0] sm:$0xf]
  %v743 = vld [vmem:[%s3 + $0xa4] sm:$0xf]
  %v744 = vld [vmem:[%s3 + $0xa8] sm:$0xf]
  %v745 = vld [vmem:[%s3 + $0xac] sm:$0xf]
  %v746 = vld [vmem:[%s3 + $0xb0] sm:$0xf]
  %v747 = vld [vmem:[%s3 + $0xb4] sm:$0xf]
  %v748 = vld [vmem:[%s3 + $0xb8] sm:$0xf]
  %v749 = vld [vmem:[%s3 + $0xbc] sm:$0xf]
  %v750 = vld [vmem:[%s3 + $0xc0] sm:$0xf]
  %v751 = vld [vmem:[%s3 + $0xc4] sm:$0xf]
  %v752 = vld [vmem:[%s3 + $0xc8] sm:$0xf]
  %v753 = vld [vmem:[%s3 + $0xcc] sm:$0xf]
  %v754 = vld [vmem:[%s3 + $0xd0] sm:$0xf]
  %v755 = vld [vmem:[%s3 + $0xd4] sm:$0xf]
  %v756 = vld [vmem:[%s3 + $0xd8] sm:$0xf]
  %v757 = vld [vmem:[%s3 + $0xdc] sm:$0xf]
  %v758 = vld [vmem:[%s3 + $0xe0] sm:$0xf]
  %v759 = vld [vmem:[%s3 + $0xe4] sm:$0xf]
  %v760 = vld [vmem:[%s3 + $0xe8] sm:$0xf]
  %v761 = vld [vmem:[%s3 + $0xec] sm:$0xf]
  %v762 = vld [vmem:[%s3 + $0xf0] sm:$0xf]
  %v763 = vld [vmem:[%s3 + $0xf4] sm:$0xf]
  %v764 = vld [vmem:[%s3 + $0xf8] sm:$0xf]
  %v765 = vld [vmem:[%s3 + $0xfc] sm:$0xf]
  %v766 = vld [vmem:[%s3 + $0x100] sm:$0xf]
  %v767 = vld [vmem:[%s3 + $0x104] sm:$0xf]
  %v768 = vld [vmem:[%s3 + $0x108] sm:$0xf]
  %v769 = vld [vmem:[%s3 + $0x10c] sm:$0xf]
  %v770 = vld [vmem:[%s3 + $0x110] sm:$0xf]
  %v771 = vld [vmem:[%s3 + $0x114] sm:$0xf]
  %v772 = vld [vmem:[%s3 + $0x118] sm:$0xf]
  %v773 = vld [vmem:[%s3 + $0x11c] sm:$0xf]
  %v774 = vld [vmem:[%s3 + $0x120] sm:$0xf]
  %v775 = vld [vmem:[%s3 + $0x124] sm:$0xf]
  %v776 = vld [vmem:[%s3 + $0x128] sm:$0xf]
  %v777 = vld [vmem:[%s3 + $0x12c] sm:$0xf]
  %v778 = vld [vmem:[%s3 + $0x130] sm:$0xf]
  %v779 = vld [vmem:[%s3 + $0x134] sm:$0xf]
  %v780 = vld [vmem:[%s3 + $0x138] sm:$0xf]
  %v781 = vld [vmem:[%s3 + $0x13c] sm:$0xf]
  %v782 = vld [vmem:[%s3 + $0x140] sm:$0xf]
  %v783 = vld [vmem:[%s3 + $0x144] sm:$0xf]
  %v784 = vld [vmem:[%s3 + $0x148] sm:$0xf]
  %v785 = vld [vmem:[%s3 + $0x14c] sm:$0xf]
  %v786 = vld [vmem:[%s3 + $0x150] sm:$0xf]
  %v787 = vld [vmem:[%s3 + $0x154] sm:$0xf]
  %v788 = vld [vmem:[%s3 + $0x158] sm:$0xf]
  %v789 = vld [vmem:[%s3 + $0x15c] sm:$0xf]
  %v790 = vld [vmem:[%s3 + $0x160] sm:$0xf]
  %v791 = vld [vmem:[%s3 + $0x164] sm:$0xf]
  %v792 = vld [vmem:[%s3 + $0x168] sm:$0xf]
  %v793 = vld [vmem:[%s3 + $0x16c] sm:$0xf]
  %v794 = vld [vmem:[%s3 + $0x170] sm:$0xf]
  %v795 = vld [vmem:[%s3 + $0x174] sm:$0xf]
  %v796 = vld [vmem:[%s3 + $0x178] sm:$0xf]
  %v797 = vld [vmem:[%s3 + $0x17c] sm:$0xf]
  %v798 = vld [vmem:[%s3 + $0x180] sm:$0xf]
  %v799 = vld [vmem:[%s3 + $0x184] sm:$0xf]
  %v800 = vld [vmem:[%s3 + $0x188] sm:$0xf]
  %v801 = vld [vmem:[%s3 + $0x18c] sm:$0xf]
  %v802 = vld [vmem:[%s3 + $0x190] sm:$0xf]
  %v803 = vld [vmem:[%s3 + $0x194] sm:$0xf]
  %v804 = vld [vmem:[%s3 + $0x198] sm:$0xf]
  %v805 = vld [vmem:[%s3 + $0x19c] sm:$0xf]
  %v806 = vld [vmem:[%s3 + $0x1a0] sm:$0xf]
  %v807 = vld [vmem:[%s3 + $0x1a4] sm:$0xf]
  %v808 = vld [vmem:[%s3 + $0x1a8] sm:$0xf]
  %v809 = vld [vmem:[%s3 + $0x1ac] sm:$0xf]
  %v810 = vld [vmem:[%s3 + $0x1b0] sm:$0xf]
  %v811 = vld [vmem:[%s3 + $0x1b4] sm:$0xf]
  %v812 = vld [vmem:[%s3 + $0x1b8] sm:$0xf]
  %v813 = vld [vmem:[%s3 + $0x1bc] sm:$0xf]
  %v814 = vld [vmem:[%s3 + $0x1c0] sm:$0xf]
  %v815 = vld [vmem:[%s3 + $0x1c4] sm:$0xf]
  %v816 = vld [vmem:[%s3 + $0x1c8] sm:$0xf]
  %v817 = vld [vmem:[%s3 + $0x1cc] sm:$0xf]
  %v818 = vld [vmem:[%s3 + $0x1d0] sm:$0xf]
  %v819 = vld [vmem:[%s3 + $0x1d4] sm:$0xf]
  %v820 = vld [vmem:[%s3 + $0x1d8] sm:$0xf]
  %v821 = vld [vmem:[%s3 + $0x1dc] sm:$0xf]
  %v822 = vld [vmem:[%s3 + $0x1e0] sm:$0xf]
  %v823 = vld [vmem:[%s3 + $0x1e4] sm:$0xf]
  %v824 = vld [vmem:[%s3 + $0x1e8] sm:$0xf]
  %v825 = vld [vmem:[%s3 + $0x1ec] sm:$0xf]
  %v826 = vld [vmem:[%s3 + $0x1f0] sm:$0xf]
  %v827 = vld [vmem:[%s3 + $0x1f4] sm:$0xf]
  %v828 = vld [vmem:[%s3 + $0x1f8] sm:$0xf]
  %v829 = vld [vmem:[%s3 + $0x1fc] sm:$0xf]
  %v830 = vld [vmem:[%s3 + $0x200] sm:$0xf]
  %v831 = vld [vmem:[%s3 + $0x204] sm:$0xf]
  %v832 = vld [vmem:[%s3 + $0x208] sm:$0xf]
  %v833 = vld [vmem:[%s3 + $0x20c] sm:$0xf]
  %v834 = vld [vmem:[%s3 + $0x210] sm:$0xf]
  %v835 = vld [vmem:[%s3 + $0x214] sm:$0xf]
  %v836 = vld [vmem:[%s3 + $0x218] sm:$0xf]
  %v837 = vld [vmem:[%s3 + $0x21c] sm:$0xf]
  %v838 = vld [vmem:[%s3 + $0x220] sm:$0xf]
  %v839 = vld [vmem:[%s3 + $0x224] sm:$0xf]
  %v840 = vld [vmem:[%s3 + $0x228] sm:$0xf]
  %v841 = vld [vmem:[%s3 + $0x22c] sm:$0xf]
  %v842 = vld [vmem:[%s3 + $0x230] sm:$0xf]
  %v843 = vld [vmem:[%s3 + $0x234] sm:$0xf]
  %v844 = vld [vmem:[%s3 + $0x238] sm:$0xf]
  %v845 = vld [vmem:[%s3 + $0x23c] sm:$0xf]
  %v846 = vld [vmem:[%s3 + $0x240] sm:$0xf]
  %v847 = vld [vmem:[%s3 + $0x244] sm:$0xf]
  %v848 = vld [vmem:[%s3 + $0x248] sm:$0xf]
  %v849 = vld [vmem:[%s3 + $0x24c] sm:$0xf]
  %v850 = vld [vmem:[%s3 + $0x250] sm:$0xf]
  %v851 = vld [vmem:[%s3 + $0x254] sm:$0xf]
  %v852 = vld [vmem:[%s3 + $0x258] sm:$0xf]
  %v853 = vld [vmem:[%s3 + $0x25c] sm:$0xf]
  %v854 = vld [vmem:[%s3 + $0x260] sm:$0xf]
  %v855 = vld [vmem:[%s3 + $0x264] sm:$0xf]
  %v856 = vld [vmem:[%s3 + $0x268] sm:$0xf]
  %v857 = vld [vmem:[%s3 + $0x26c] sm:$0xf]
  %v858 = vld [vmem:[%s3 + $0x270] sm:$0xf]
  %v859 = vld [vmem:[%s3 + $0x274] sm:$0xf]
  %v860 = vld [vmem:[%s3 + $0x278] sm:$0xf]
  %v861 = vld [vmem:[%s3 + $0x27c] sm:$0xf]
  %v862 = vld [vmem:[%s3 + $0x280] sm:$0xf]
  %v863 = vld [vmem:[%s3 + $0x284] sm:$0xf]
  %v864 = vld [vmem:[%s3 + $0x288] sm:$0xf]
  %v865 = vld [vmem:[%s3 + $0x28c] sm:$0xf]
  %v866 = vld [vmem:[%s3 + $0x290] sm:$0xf]
  %v867 = vld [vmem:[%s3 + $0x294] sm:$0xf]
  %v868 = vld [vmem:[%s3 + $0x298] sm:$0xf]
  %v869 = vld [vmem:[%s3 + $0x29c] sm:$0xf]
  %v870 = vld [vmem:[%s3 + $0x2a0] sm:$0xf]
  %v871 = vld [vmem:[%s3 + $0x2a4] sm:$0xf]
  %v872 = vld [vmem:[%s3 + $0x2a8] sm:$0xf]
  %v873 = vld [vmem:[%s3 + $0x2ac] sm:$0xf]
  %v874 = vld [vmem:[%s3 + $0x2b0] sm:$0xf]
  %v875 = vld [vmem:[%s3 + $0x2b4] sm:$0xf]
  %v876 = vld [vmem:[%s3 + $0x2b8] sm:$0xf]
  %v877 = vld [vmem:[%s3 + $0x2bc] sm:$0xf]
  %v878 = vld [vmem:[%s3 + $0x2c0] sm:$0xf]
  %v879 = vld [vmem:[%s3 + $0x2c4] sm:$0xf]
  %v880 = vld [vmem:[%s3 + $0x2c8] sm:$0xf]
  %v881 = vld [vmem:[%s3 + $0x2cc] sm:$0xf]
  %v882 = vld [vmem:[%s3 + $0x2d0] sm:$0xf]
  %v883 = vld [vmem:[%s3 + $0x2d4] sm:$0xf]
  %v884 = vld [vmem:[%s3 + $0x2d8] sm:$0xf]
  %v885 = vld [vmem:[%s3 + $0x2dc] sm:$0xf]
  %v886 = vld [vmem:[%s3 + $0x2e0] sm:$0xf]
  %v887 = vld [vmem:[%s3 + $0x2e4] sm:$0xf]
  %v888 = vld [vmem:[%s3 + $0x2e8] sm:$0xf]
  %v889 = vld [vmem:[%s3 + $0x2ec] sm:$0xf]
  %v890 = vld [vmem:[%s3 + $0x2f0] sm:$0xf]
  %v891 = vld [vmem:[%s3 + $0x2f4] sm:$0xf]
  %v892 = vld [vmem:[%s3 + $0x2f8] sm:$0xf]
  %v893 = vld [vmem:[%s3 + $0x2fc] sm:$0xf]
  %v894 = vld [vmem:[%s3 + $0x300] sm:$0xf]
  %v895 = vld [vmem:[%s3 + $0x304] sm:$0xf]
  %v896 = vld [vmem:[%s3 + $0x308] sm:$0xf]
  %v897 = vld [vmem:[%s3 + $0x30c] sm:$0xf]
  %v898 = vld [vmem:[%s3 + $0x310] sm:$0xf]
  %v899 = vld [vmem:[%s3 + $0x314] sm:$0xf]
  %v900 = vld [vmem:[%s3 + $0x318] sm:$0xf]
  %v901 = vld [vmem:[%s3 + $0x31c] sm:$0xf]
  %v902 = vld [vmem:[%s3 + $0x320] sm:$0xf]
  %v903 = vld [vmem:[%s3 + $0x324] sm:$0xf]
  %v904 = vld [vmem:[%s3 + $0x328] sm:$0xf]
  %v905 = vld [vmem:[%s3 + $0x32c] sm:$0xf]
  %v906 = vld [vmem:[%s3 + $0x330] sm:$0xf]
  %v907 = vld [vmem:[%s3 + $0x334] sm:$0xf]
  %v908 = vld [vmem:[%s3 + $0x338] sm:$0xf]
  %v909 = vld [vmem:[%s3 + $0x33c] sm:$0xf]
  %v910 = vld [vmem:[%s3 + $0x340] sm:$0xf]
  %v911 = vld [vmem:[%s3 + $0x344] sm:$0xf]
  %v912 = vld [vmem:[%s3 + $0x348] sm:$0xf]
  %v913 = vld [vmem:[%s3 + $0x34c] sm:$0xf]
  %v914 = vld [vmem:[%s3 + $0x350] sm:$0xf]
  %v915 = vld [vmem:[%s3 + $0x354] sm:$0xf]
  %v916 = vld [vmem:[%s3 + $0x358] sm:$0xf]
  %v917 = vld [vmem:[%s3 + $0x35c] sm:$0xf]
  %v918 = vld [vmem:[%s3 + $0x360] sm:$0xf]
  %v919 = vld [vmem:[%s3 + $0x364] sm:$0xf]
  %v920 = vld [vmem:[%s3 + $0x368] sm:$0xf]
  %v921 = vld [vmem:[%s3 + $0x36c] sm:$0xf]
  %v922 = vld [vmem:[%s3 + $0x370] sm:$0xf]
  %v923 = vld [vmem:[%s3 + $0x374] sm:$0xf]
  %v924 = vld [vmem:[%s3 + $0x378] sm:$0xf]
  %v925 = vld [vmem:[%s3 + $0x37c] sm:$0xf]
  %v926 = vld [vmem:[%s3 + $0x380] sm:$0xf]
  %v927 = vld [vmem:[%s3 + $0x384] sm:$0xf]
  %v928 = vld [vmem:[%s3 + $0x388] sm:$0xf]
  %v929 = vld [vmem:[%s3 + $0x38c] sm:$0xf]
  %v930 = vld [vmem:[%s3 + $0x390] sm:$0xf]
  %v931 = vld [vmem:[%s3 + $0x394] sm:$0xf]
  %v932 = vld [vmem:[%s3 + $0x398] sm:$0xf]
  %v933 = vld [vmem:[%s3 + $0x39c] sm:$0xf]
  %v934 = vld [vmem:[%s3 + $0x3a0] sm:$0xf]
  %v935 = vld [vmem:[%s3 + $0x3a4] sm:$0xf]
  %v936 = vld [vmem:[%s3 + $0x3a8] sm:$0xf]
  %v937 = vld [vmem:[%s3 + $0x3ac] sm:$0xf]
  %v938 = vld [vmem:[%s3 + $0x3b0] sm:$0xf]
  %v939 = vld [vmem:[%s3 + $0x3b4] sm:$0xf]
  %v940 = vld [vmem:[%s3 + $0x3b8] sm:$0xf]
  %v941 = vld [vmem:[%s3 + $0x3bc] sm:$0xf]
  %v942 = vld [vmem:[%s3 + $0x3c0] sm:$0xf]
  %v943 = vld [vmem:[%s3 + $0x3c4] sm:$0xf]
  %v944 = vld [vmem:[%s3 + $0x3c8] sm:$0xf]
  %v945 = vld [vmem:[%s3 + $0x3cc] sm:$0xf]
  %v946 = vld [vmem:[%s3 + $0x3d0] sm:$0xf]
  %v947 = vld [vmem:[%s3 + $0x3d4] sm:$0xf]
  %v948 = vld [vmem:[%s3 + $0x3d8] sm:$0xf]
  %v949 = vld [vmem:[%s3 + $0x3dc] sm:$0xf]
  %v950 = vld [vmem:[%s3 + $0x3e0] sm:$0xf]
  %v951 = vld [vmem:[%s3 + $0x3e4] sm:$0xf]
  %v952 = vld [vmem:[%s3 + $0x3e8] sm:$0xf]
  %v953 = vld [vmem:[%s3 + $0x3ec] sm:$0xf]
  %v954 = vld [vmem:[%s3 + $0x3f0] sm:$0xf]
  %v955 = vld [vmem:[%s3 + $0x3f4] sm:$0xf]
  %v956 = vld [vmem:[%s3 + $0x3f8] sm:$0xf]
  %v957 = vld [vmem:[%s3 + $0x3fc] sm:$0xf]
  %v958 = vld [vmem:[%s4] sm:$0x1]
  %v960 = vlaneseq
  %v961 = vshrl.u32 %v960, 7
  %v962 = vsub.s32 0, %v961
  %v963 = vrot.slane %v958, %v962
  %v1221 = vunpack.c.l.b16 %v702
  %v1222 = vunpack.c.l.b16 %v703
  %v1223 = vunpack.c.l.b16 %v704
  %v1224 = vunpack.c.l.b16 %v705
  %v1225 = vunpack.c.l.b16 %v706
  %v1226 = vunpack.c.l.b16 %v707
  %v1227 = vunpack.c.l.b16 %v708
  %v1228 = vunpack.c.l.b16 %v709
  %v1229 = vunpack.c.l.b16 %v710
  %v1230 = vunpack.c.l.b16 %v711
  %v1231 = vunpack.c.l.b16 %v712
  %v1232 = vunpack.c.l.b16 %v713
  %v1233 = vunpack.c.l.b16 %v714
  %v1234 = vunpack.c.l.b16 %v715
  %v1235 = vunpack.c.l.b16 %v716
  %v1236 = vunpack.c.l.b16 %v717
  %v1237 = vunpack.c.l.b16 %v718
  %v1238 = vunpack.c.l.b16 %v719
  %v1239 = vunpack.c.l.b16 %v720
  %v1240 = vunpack.c.l.b16 %v721
  %v1241 = vunpack.c.l.b16 %v722
  %v1242 = vunpack.c.l.b16 %v723
  %v1243 = vunpack.c.l.b16 %v724
  %v1244 = vunpack.c.l.b16 %v725
  %v1245 = vunpack.c.l.b16 %v726
  %v1246 = vunpack.c.l.b16 %v727
  %v1247 = vunpack.c.l.b16 %v728
  %v1248 = vunpack.c.l.b16 %v729
  %v1249 = vunpack.c.l.b16 %v730
  %v1250 = vunpack.c.l.b16 %v731
  %v1251 = vunpack.c.l.b16 %v732
  %v1252 = vunpack.c.l.b16 %v733
  %v1253 = vunpack.c.l.b16 %v734
  %v1254 = vunpack.c.l.b16 %v735
  %v1255 = vunpack.c.l.b16 %v736
  %v1256 = vunpack.c.l.b16 %v737
  %v1257 = vunpack.c.l.b16 %v738
  %v1258 = vunpack.c.l.b16 %v739
  %v1259 = vunpack.c.l.b16 %v740
  %v1260 = vunpack.c.l.b16 %v741
  %v1261 = vunpack.c.l.b16 %v742
  %v1262 = vunpack.c.l.b16 %v743
  %v1263 = vunpack.c.l.b16 %v744
  %v1264 = vunpack.c.l.b16 %v745
  %v1265 = vunpack.c.l.b16 %v746
  %v1266 = vunpack.c.l.b16 %v747
  %v1267 = vunpack.c.l.b16 %v748
  %v1268 = vunpack.c.l.b16 %v749
  %v1269 = vunpack.c.l.b16 %v750
  %v1270 = vunpack.c.l.b16 %v751
  %v1271 = vunpack.c.l.b16 %v752
  %v1272 = vunpack.c.l.b16 %v753
  %v1273 = vunpack.c.l.b16 %v754
  %v1274 = vunpack.c.l.b16 %v755
  %v1275 = vunpack.c.l.b16 %v756
  %v1276 = vunpack.c.l.b16 %v757
  %v1277 = vunpack.c.l.b16 %v758
  %v1278 = vunpack.c.l.b16 %v759
  %v1279 = vunpack.c.l.b16 %v760
  %v1280 = vunpack.c.l.b16 %v761
  %v1281 = vunpack.c.l.b16 %v762
  %v1282 = vunpack.c.l.b16 %v763
  %v1283 = vunpack.c.l.b16 %v764
  %v1284 = vunpack.c.l.b16 %v765
  %v1285 = vunpack.c.l.b16 %v766
  %v1286 = vunpack.c.l.b16 %v767
  %v1287 = vunpack.c.l.b16 %v768
  %v1288 = vunpack.c.l.b16 %v769
  %v1289 = vunpack.c.l.b16 %v770
  %v1290 = vunpack.c.l.b16 %v771
  %v1291 = vunpack.c.l.b16 %v772
  %v1292 = vunpack.c.l.b16 %v773
  %v1293 = vunpack.c.l.b16 %v774
  %v1294 = vunpack.c.l.b16 %v775
  %v1295 = vunpack.c.l.b16 %v776
  %v1296 = vunpack.c.l.b16 %v777
  %v1297 = vunpack.c.l.b16 %v778
  %v1298 = vunpack.c.l.b16 %v779
  %v1299 = vunpack.c.l.b16 %v780
  %v1300 = vunpack.c.l.b16 %v781
  %v1301 = vunpack.c.l.b16 %v782
  %v1302 = vunpack.c.l.b16 %v783
  %v1303 = vunpack.c.l.b16 %v784
  %v1304 = vunpack.c.l.b16 %v785
  %v1305 = vunpack.c.l.b16 %v786
  %v1306 = vunpack.c.l.b16 %v787
  %v1307 = vunpack.c.l.b16 %v788
  %v1308 = vunpack.c.l.b16 %v789
  %v1309 = vunpack.c.l.b16 %v790
  %v1310 = vunpack.c.l.b16 %v791
  %v1311 = vunpack.c.l.b16 %v792
  %v1312 = vunpack.c.l.b16 %v793
  %v1313 = vunpack.c.l.b16 %v794
  %v1314 = vunpack.c.l.b16 %v795
  %v1315 = vunpack.c.l.b16 %v796
  %v1316 = vunpack.c.l.b16 %v797
  %v1317 = vunpack.c.l.b16 %v798
  %v1318 = vunpack.c.l.b16 %v799
  %v1319 = vunpack.c.l.b16 %v800
  %v1320 = vunpack.c.l.b16 %v801
  %v1321 = vunpack.c.l.b16 %v802
  %v1322 = vunpack.c.l.b16 %v803
  %v1323 = vunpack.c.l.b16 %v804
  %v1324 = vunpack.c.l.b16 %v805
  %v1325 = vunpack.c.l.b16 %v806
  %v1326 = vunpack.c.l.b16 %v807
  %v1327 = vunpack.c.l.b16 %v808
  %v1328 = vunpack.c.l.b16 %v809
  %v1329 = vunpack.c.l.b16 %v810
  %v1330 = vunpack.c.l.b16 %v811
  %v1331 = vunpack.c.l.b16 %v812
  %v1332 = vunpack.c.l.b16 %v813
  %v1333 = vunpack.c.l.b16 %v814
  %v1334 = vunpack.c.l.b16 %v815
  %v1335 = vunpack.c.l.b16 %v816
  %v1336 = vunpack.c.l.b16 %v817
  %v1337 = vunpack.c.l.b16 %v818
  %v1338 = vunpack.c.l.b16 %v819
  %v1339 = vunpack.c.l.b16 %v820
  %v1340 = vunpack.c.l.b16 %v821
  %v1341 = vunpack.c.l.b16 %v822
  %v1342 = vunpack.c.l.b16 %v823
  %v1343 = vunpack.c.l.b16 %v824
  %v1344 = vunpack.c.l.b16 %v825
  %v1345 = vunpack.c.l.b16 %v826
  %v1346 = vunpack.c.l.b16 %v827
  %v1347 = vunpack.c.l.b16 %v828
  %v1348 = vunpack.c.l.b16 %v829
  %v1349 = vunpack.c.l.b16 %v830
  %v1350 = vunpack.c.l.b16 %v831
  %v1351 = vunpack.c.l.b16 %v832
  %v1352 = vunpack.c.l.b16 %v833
  %v1353 = vunpack.c.l.b16 %v834
  %v1354 = vunpack.c.l.b16 %v835
  %v1355 = vunpack.c.l.b16 %v836
  %v1356 = vunpack.c.l.b16 %v837
  %v1357 = vunpack.c.l.b16 %v838
  %v1358 = vunpack.c.l.b16 %v839
  %v1359 = vunpack.c.l.b16 %v840
  %v1360 = vunpack.c.l.b16 %v841
  %v1361 = vunpack.c.l.b16 %v842
  %v1362 = vunpack.c.l.b16 %v843
  %v1363 = vunpack.c.l.b16 %v844
  %v1364 = vunpack.c.l.b16 %v845
  %v1365 = vunpack.c.l.b16 %v846
  %v1366 = vunpack.c.l.b16 %v847
  %v1367 = vunpack.c.l.b16 %v848
  %v1368 = vunpack.c.l.b16 %v849
  %v1369 = vunpack.c.l.b16 %v850
  %v1370 = vunpack.c.l.b16 %v851
  %v1371 = vunpack.c.l.b16 %v852
  %v1372 = vunpack.c.l.b16 %v853
  %v1373 = vunpack.c.l.b16 %v854
  %v1374 = vunpack.c.l.b16 %v855
  %v1375 = vunpack.c.l.b16 %v856
  %v1376 = vunpack.c.l.b16 %v857
  %v1377 = vunpack.c.l.b16 %v858
  %v1378 = vunpack.c.l.b16 %v859
  %v1379 = vunpack.c.l.b16 %v860
  %v1380 = vunpack.c.l.b16 %v861
  %v1381 = vunpack.c.l.b16 %v862
  %v1382 = vunpack.c.l.b16 %v863
  %v1383 = vunpack.c.l.b16 %v864
  %v1384 = vunpack.c.l.b16 %v865
  %v1385 = vunpack.c.l.b16 %v866
  %v1386 = vunpack.c.l.b16 %v867
  %v1387 = vunpack.c.l.b16 %v868
  %v1388 = vunpack.c.l.b16 %v869
  %v1389 = vunpack.c.l.b16 %v870
  %v1390 = vunpack.c.l.b16 %v871
  %v1391 = vunpack.c.l.b16 %v872
  %v1392 = vunpack.c.l.b16 %v873
  %v1393 = vunpack.c.l.b16 %v874
  %v1394 = vunpack.c.l.b16 %v875
  %v1395 = vunpack.c.l.b16 %v876
  %v1396 = vunpack.c.l.b16 %v877
  %v1397 = vunpack.c.l.b16 %v878
  %v1398 = vunpack.c.l.b16 %v879
  %v1399 = vunpack.c.l.b16 %v880
  %v1400 = vunpack.c.l.b16 %v881
  %v1401 = vunpack.c.l.b16 %v882
  %v1402 = vunpack.c.l.b16 %v883
  %v1403 = vunpack.c.l.b16 %v884
  %v1404 = vunpack.c.l.b16 %v885
  %v1405 = vunpack.c.l.b16 %v886
  %v1406 = vunpack.c.l.b16 %v887
  %v1407 = vunpack.c.l.b16 %v888
  %v1408 = vunpack.c.l.b16 %v889
  %v1409 = vunpack.c.l.b16 %v890
  %v1410 = vunpack.c.l.b16 %v891
  %v1411 = vunpack.c.l.b16 %v892
  %v1412 = vunpack.c.l.b16 %v893
  %v1413 = vunpack.c.l.b16 %v894
  %v1414 = vunpack.c.l.b16 %v895
  %v1415 = vunpack.c.l.b16 %v896
  %v1416 = vunpack.c.l.b16 %v897
  %v1417 = vunpack.c.l.b16 %v898
  %v1418 = vunpack.c.l.b16 %v899
  %v1419 = vunpack.c.l.b16 %v900
  %v1420 = vunpack.c.l.b16 %v901
  %v1421 = vunpack.c.l.b16 %v902
  %v1422 = vunpack.c.l.b16 %v903
  %v1423 = vunpack.c.l.b16 %v904
  %v1424 = vunpack.c.l.b16 %v905
  %v1425 = vunpack.c.l.b16 %v906
  %v1426 = vunpack.c.l.b16 %v907
  %v1427 = vunpack.c.l.b16 %v908
  %v1428 = vunpack.c.l.b16 %v909
  %v1429 = vunpack.c.l.b16 %v910
  %v1430 = vunpack.c.l.b16 %v911
  %v1431 = vunpack.c.l.b16 %v912
  %v1432 = vunpack.c.l.b16 %v913
  %v1433 = vunpack.c.l.b16 %v914
  %v1434 = vunpack.c.l.b16 %v915
  %v1435 = vunpack.c.l.b16 %v916
  %v1436 = vunpack.c.l.b16 %v917
  %v1437 = vunpack.c.l.b16 %v918
  %v1438 = vunpack.c.l.b16 %v919
  %v1439 = vunpack.c.l.b16 %v920
  %v1440 = vunpack.c.l.b16 %v921
  %v1441 = vunpack.c.l.b16 %v922
  %v1442 = vunpack.c.l.b16 %v923
  %v1443 = vunpack.c.l.b16 %v924
  %v1444 = vunpack.c.l.b16 %v925
  %v1445 = vunpack.c.l.b16 %v926
  %v1446 = vunpack.c.l.b16 %v927
  %v1447 = vunpack.c.l.b16 %v928
  %v1448 = vunpack.c.l.b16 %v929
  %v1449 = vunpack.c.l.b16 %v930
  %v1450 = vunpack.c.l.b16 %v931
  %v1451 = vunpack.c.l.b16 %v932
  %v1452 = vunpack.c.l.b16 %v933
  %v1453 = vunpack.c.l.b16 %v934
  %v1454 = vunpack.c.l.b16 %v935
  %v1455 = vunpack.c.l.b16 %v936
  %v1456 = vunpack.c.l.b16 %v937
  %v1457 = vunpack.c.l.b16 %v938
  %v1458 = vunpack.c.l.b16 %v939
  %v1459 = vunpack.c.l.b16 %v940
  %v1460 = vunpack.c.l.b16 %v941
  %v1461 = vunpack.c.l.b16 %v942
  %v1462 = vunpack.c.l.b16 %v943
  %v1463 = vunpack.c.l.b16 %v944
  %v1464 = vunpack.c.l.b16 %v945
  %v1465 = vunpack.c.l.b16 %v946
  %v1466 = vunpack.c.l.b16 %v947
  %v1467 = vunpack.c.l.b16 %v948
  %v1468 = vunpack.c.l.b16 %v949
  %v1469 = vunpack.c.l.b16 %v950
  %v1470 = vunpack.c.l.b16 %v951
  %v1471 = vunpack.c.l.b16 %v952
  %v1472 = vunpack.c.l.b16 %v953
  %v1473 = vunpack.c.l.b16 %v954
  %v1474 = vunpack.c.l.b16 %v955
  %v1475 = vunpack.c.l.b16 %v956
  %v1476 = vunpack.c.l.b16 %v957
  %v1477 = vpack.c.b16 %v1222, %v1221
  %v1478 = vpack.c.b16 %v1224, %v1223
  %v1479 = vpack.c.b16 %v1226, %v1225
  %v1480 = vpack.c.b16 %v1228, %v1227
  %v1481 = vpack.c.b16 %v1230, %v1229
  %v1482 = vpack.c.b16 %v1232, %v1231
  %v1483 = vpack.c.b16 %v1234, %v1233
  %v1484 = vpack.c.b16 %v1236, %v1235
  %v1485 = vpack.c.b16 %v1238, %v1237
  %v1486 = vpack.c.b16 %v1240, %v1239
  %v1487 = vpack.c.b16 %v1242, %v1241
  %v1488 = vpack.c.b16 %v1244, %v1243
  %v1489 = vpack.c.b16 %v1246, %v1245
  %v1490 = vpack.c.b16 %v1248, %v1247
  %v1491 = vpack.c.b16 %v1250, %v1249
  %v1492 = vpack.c.b16 %v1252, %v1251
  %v1493 = vpack.c.b16 %v1254, %v1253
  %v1494 = vpack.c.b16 %v1256, %v1255
  %v1495 = vpack.c.b16 %v1258, %v1257
  %v1496 = vpack.c.b16 %v1260, %v1259
  %v1497 = vpack.c.b16 %v1262, %v1261
  %v1498 = vpack.c.b16 %v1264, %v1263
  %v1499 = vpack.c.b16 %v1266, %v1265
  %v1500 = vpack.c.b16 %v1268, %v1267
  %v1501 = vpack.c.b16 %v1270, %v1269
  %v1502 = vpack.c.b16 %v1272, %v1271
  %v1503 = vpack.c.b16 %v1274, %v1273
  %v1504 = vpack.c.b16 %v1276, %v1275
  %v1505 = vpack.c.b16 %v1278, %v1277
  %v1506 = vpack.c.b16 %v1280, %v1279
  %v1507 = vpack.c.b16 %v1282, %v1281
  %v1508 = vpack.c.b16 %v1284, %v1283
  %v1509 = vpack.c.b16 %v1286, %v1285
  %v1510 = vpack.c.b16 %v1288, %v1287
  %v1511 = vpack.c.b16 %v1290, %v1289
  %v1512 = vpack.c.b16 %v1292, %v1291
  %v1513 = vpack.c.b16 %v1294, %v1293
  %v1514 = vpack.c.b16 %v1296, %v1295
  %v1515 = vpack.c.b16 %v1298, %v1297
  %v1516 = vpack.c.b16 %v1300, %v1299
  %v1517 = vpack.c.b16 %v1302, %v1301
  %v1518 = vpack.c.b16 %v1304, %v1303
  %v1519 = vpack.c.b16 %v1306, %v1305
  %v1520 = vpack.c.b16 %v1308, %v1307
  %v1521 = vpack.c.b16 %v1310, %v1309
  %v1522 = vpack.c.b16 %v1312, %v1311
  %v1523 = vpack.c.b16 %v1314, %v1313
  %v1524 = vpack.c.b16 %v1316, %v1315
  %v1525 = vpack.c.b16 %v1318, %v1317
  %v1526 = vpack.c.b16 %v1320, %v1319
  %v1527 = vpack.c.b16 %v1322, %v1321
  %v1528 = vpack.c.b16 %v1324, %v1323
  %v1529 = vpack.c.b16 %v1326, %v1325
  %v1530 = vpack.c.b16 %v1328, %v1327
  %v1531 = vpack.c.b16 %v1330, %v1329
  %v1532 = vpack.c.b16 %v1332, %v1331
  %v1533 = vpack.c.b16 %v1334, %v1333
  %v1534 = vpack.c.b16 %v1336, %v1335
  %v1535 = vpack.c.b16 %v1338, %v1337
  %v1536 = vpack.c.b16 %v1340, %v1339
  %v1537 = vpack.c.b16 %v1342, %v1341
  %v1538 = vpack.c.b16 %v1344, %v1343
  %v1539 = vpack.c.b16 %v1346, %v1345
  %v1540 = vpack.c.b16 %v1348, %v1347
  %v1541 = vpack.c.b16 %v1350, %v1349
  %v1542 = vpack.c.b16 %v1352, %v1351
  %v1543 = vpack.c.b16 %v1354, %v1353
  %v1544 = vpack.c.b16 %v1356, %v1355
  %v1545 = vpack.c.b16 %v1358, %v1357
  %v1546 = vpack.c.b16 %v1360, %v1359
  %v1547 = vpack.c.b16 %v1362, %v1361
  %v1548 = vpack.c.b16 %v1364, %v1363
  %v1549 = vpack.c.b16 %v1366, %v1365
  %v1550 = vpack.c.b16 %v1368, %v1367
  %v1551 = vpack.c.b16 %v1370, %v1369
  %v1552 = vpack.c.b16 %v1372, %v1371
  %v1553 = vpack.c.b16 %v1374, %v1373
  %v1554 = vpack.c.b16 %v1376, %v1375
  %v1555 = vpack.c.b16 %v1378, %v1377
  %v1556 = vpack.c.b16 %v1380, %v1379
  %v1557 = vpack.c.b16 %v1382, %v1381
  %v1558 = vpack.c.b16 %v1384, %v1383
  %v1559 = vpack.c.b16 %v1386, %v1385
  %v1560 = vpack.c.b16 %v1388, %v1387
  %v1561 = vpack.c.b16 %v1390, %v1389
  %v1562 = vpack.c.b16 %v1392, %v1391
  %v1563 = vpack.c.b16 %v1394, %v1393
  %v1564 = vpack.c.b16 %v1396, %v1395
  %v1565 = vpack.c.b16 %v1398, %v1397
  %v1566 = vpack.c.b16 %v1400, %v1399
  %v1567 = vpack.c.b16 %v1402, %v1401
  %v1568 = vpack.c.b16 %v1404, %v1403
  %v1569 = vpack.c.b16 %v1406, %v1405
  %v1570 = vpack.c.b16 %v1408, %v1407
  %v1571 = vpack.c.b16 %v1410, %v1409
  %v1572 = vpack.c.b16 %v1412, %v1411
  %v1573 = vpack.c.b16 %v1414, %v1413
  %v1574 = vpack.c.b16 %v1416, %v1415
  %v1575 = vpack.c.b16 %v1418, %v1417
  %v1576 = vpack.c.b16 %v1420, %v1419
  %v1577 = vpack.c.b16 %v1422, %v1421
  %v1578 = vpack.c.b16 %v1424, %v1423
  %v1579 = vpack.c.b16 %v1426, %v1425
  %v1580 = vpack.c.b16 %v1428, %v1427
  %v1581 = vpack.c.b16 %v1430, %v1429
  %v1582 = vpack.c.b16 %v1432, %v1431
  %v1583 = vpack.c.b16 %v1434, %v1433
  %v1584 = vpack.c.b16 %v1436, %v1435
  %v1585 = vpack.c.b16 %v1438, %v1437
  %v1586 = vpack.c.b16 %v1440, %v1439
  %v1587 = vpack.c.b16 %v1442, %v1441
  %v1588 = vpack.c.b16 %v1444, %v1443
  %v1589 = vpack.c.b16 %v1446, %v1445
  %v1590 = vpack.c.b16 %v1448, %v1447
  %v1591 = vpack.c.b16 %v1450, %v1449
  %v1592 = vpack.c.b16 %v1452, %v1451
  %v1593 = vpack.c.b16 %v1454, %v1453
  %v1594 = vpack.c.b16 %v1456, %v1455
  %v1595 = vpack.c.b16 %v1458, %v1457
  %v1596 = vpack.c.b16 %v1460, %v1459
  %v1597 = vpack.c.b16 %v1462, %v1461
  %v1598 = vpack.c.b16 %v1464, %v1463
  %v1599 = vpack.c.b16 %v1466, %v1465
  %v1600 = vpack.c.b16 %v1468, %v1467
  %v1601 = vpack.c.b16 %v1470, %v1469
  %v1602 = vpack.c.b16 %v1472, %v1471
  %v1603 = vpack.c.b16 %v1474, %v1473
  %v1604 = vpack.c.b16 %v1476, %v1475
  %1733 = vmatprep.subr.bf16.mxu0 0
  %1734 = vmatpush1.bf16.msra.mxu0 %v1484
  %1735 = vmatprep.subr.bf16.mxu0 0
  %1736 = vmatpush1.bf16.msra.mxu0 %v1483
  %1737 = vmatprep.subr.bf16.mxu0 0
  %1738 = vmatpush1.bf16.msra.mxu0 %v1482
  %1739 = vmatprep.subr.bf16.mxu0 0
  %1740 = vmatpush1.bf16.msra.mxu0 %v1481
  %1741 = vmatprep.subr.bf16.mxu0 0
  %1742 = vmatpush1.bf16.msra.mxu0 %v1480
  %1743 = vmatprep.subr.bf16.mxu0 0
  %1744 = vmatpush1.bf16.msra.mxu0 %v1479
  %1745 = vmatprep.subr.bf16.mxu0 0
  %1746 = vmatpush1.bf16.msra.mxu0 %v1478
  %1747 = vmatprep.subr.bf16.mxu0 0
  %1748 = vmatpush1.bf16.msra.mxu0 %v1477
  %1749 = vmatprep.subr.bf16.mxu0 0
  %1750 = vmatpush2.bf16.msra.mxu0 %v1492
  %1751 = vmatprep.subr.bf16.mxu0 0
  %1752 = vmatpush2.bf16.msra.mxu0 %v1491
  %1753 = vmatprep.subr.bf16.mxu0 0
  %1754 = vmatpush2.bf16.msra.mxu0 %v1490
  %1755 = vmatprep.subr.bf16.mxu0 0
  %1756 = vmatpush2.bf16.msra.mxu0 %v1489
  %1757 = vmatprep.subr.bf16.mxu0 0
  %1758 = vmatpush2.bf16.msra.mxu0 %v1488
  %1759 = vmatprep.subr.bf16.mxu0 0
  %1760 = vmatpush2.bf16.msra.mxu0 %v1487
  %1761 = vmatprep.subr.bf16.mxu0 0
  %1762 = vmatpush2.bf16.msra.mxu0 %v1486
  %1763 = vmatprep.subr.bf16.mxu0 0
  %1764 = vmatpush2.bf16.msra.mxu0 %v1485
  %1765 = vmatprep.mubr.bf16.mxu0 %v687
  %1766 = vmatmul.mubr.bf16.gmra.mxu0 %v686
  %v1767 = vpop.f32.mrf.mxu0
  %v1768 = vadd.f32 %v963, %v1767
  %v1769 = vpop.f32.mrf.mxu0
  %v1770 = vpop.f32.mrf.mxu0
  %v1771 = vadd.f32 %v963, %v1770
  %v1772 = vpop.f32.mrf.mxu0
  %1773 = vdwg.mxu0
  %1774 = vmatprep.subr.bf16.mxu0 0
  %1775 = vmatpush1.bf16.msra.mxu0 %v1500
  %1776 = vmatprep.subr.bf16.mxu0 0
  %1777 = vmatpush1.bf16.msra.mxu0 %v1499
  %1778 = vmatprep.subr.bf16.mxu0 0
  %1779 = vmatpush1.bf16.msra.mxu0 %v1498
  %1780 = vmatprep.subr.bf16.mxu0 0
  %1781 = vmatpush1.bf16.msra.mxu0 %v1497
  %1782 = vmatprep.subr.bf16.mxu0 0
  %1783 = vmatpush1.bf16.msra.mxu0 %v1496
  %1784 = vmatprep.subr.bf16.mxu0 0
  %1785 = vmatpush1.bf16.msra.mxu0 %v1495
  %1786 = vmatprep.subr.bf16.mxu0 0
  %1787 = vmatpush1.bf16.msra.mxu0 %v1494
  %1788 = vmatprep.subr.bf16.mxu0 0
  %1789 = vmatpush1.bf16.msra.mxu0 %v1493
  %1790 = vmatprep.subr.bf16.mxu0 0
  %1791 = vmatpush2.bf16.msra.mxu0 %v1508
  %1792 = vmatprep.subr.bf16.mxu0 0
  %1793 = vmatpush2.bf16.msra.mxu0 %v1507
  %1794 = vmatprep.subr.bf16.mxu0 0
  %1795 = vmatpush2.bf16.msra.mxu0 %v1506
  %1796 = vmatprep.subr.bf16.mxu0 0
  %1797 = vmatpush2.bf16.msra.mxu0 %v1505
  %1798 = vmatprep.subr.bf16.mxu0 0
  %1799 = vmatpush2.bf16.msra.mxu0 %v1504
  %1800 = vmatprep.subr.bf16.mxu0 0
  %1801 = vmatpush2.bf16.msra.mxu0 %v1503
  %1802 = vmatprep.subr.bf16.mxu0 0
  %1803 = vmatpush2.bf16.msra.mxu0 %v1502
  %1804 = vmatprep.subr.bf16.mxu0 0
  %1805 = vmatpush2.bf16.msra.mxu0 %v1501
  %1806 = vmatprep.mubr.bf16.mxu0 %v689
  %1807 = vmatmul.mubr.bf16.gmra.mxu0 %v688
  %v1808 = vpop.f32.mrf.mxu0
  %v1809 = vadd.f32 %v1768, %v1808
  %v1810 = vpop.f32.mrf.mxu0
  %v1811 = vpop.f32.mrf.mxu0
  %v1812 = vadd.f32 %v1771, %v1811
  %v1813 = vpop.f32.mrf.mxu0
  %1814 = vdwg.mxu0
  %1815 = vmatprep.subr.bf16.mxu0 0
  %1816 = vmatpush1.bf16.msra.mxu0 %v1516
  %1817 = vmatprep.subr.bf16.mxu0 0
  %1818 = vmatpush1.bf16.msra.mxu0 %v1515
  %1819 = vmatprep.subr.bf16.mxu0 0
  %1820 = vmatpush1.bf16.msra.mxu0 %v1514
  %1821 = vmatprep.subr.bf16.mxu0 0
  %1822 = vmatpush1.bf16.msra.mxu0 %v1513
  %1823 = vmatprep.subr.bf16.mxu0 0
  %1824 = vmatpush1.bf16.msra.mxu0 %v1512
  %1825 = vmatprep.subr.bf16.mxu0 0
  %1826 = vmatpush1.bf16.msra.mxu0 %v1511
  %1827 = vmatprep.subr.bf16.mxu0 0
  %1828 = vmatpush1.bf16.msra.mxu0 %v1510
  %1829 = vmatprep.subr.bf16.mxu0 0
  %1830 = vmatpush1.bf16.msra.mxu0 %v1509
  %1831 = vmatprep.subr.bf16.mxu0 0
  %1832 = vmatpush2.bf16.msra.mxu0 %v1524
  %1833 = vmatprep.subr.bf16.mxu0 0
  %1834 = vmatpush2.bf16.msra.mxu0 %v1523
  %1835 = vmatprep.subr.bf16.mxu0 0
  %1836 = vmatpush2.bf16.msra.mxu0 %v1522
  %1837 = vmatprep.subr.bf16.mxu0 0
  %1838 = vmatpush2.bf16.msra.mxu0 %v1521
  %1839 = vmatprep.subr.bf16.mxu0 0
  %1840 = vmatpush2.bf16.msra.mxu0 %v1520
  %1841 = vmatprep.subr.bf16.mxu0 0
  %1842 = vmatpush2.bf16.msra.mxu0 %v1519
  %1843 = vmatprep.subr.bf16.mxu0 0
  %1844 = vmatpush2.bf16.msra.mxu0 %v1518
  %1845 = vmatprep.subr.bf16.mxu0 0
  %1846 = vmatpush2.bf16.msra.mxu0 %v1517
  %1847 = vmatprep.mubr.bf16.mxu0 %v691
  %1848 = vmatmul.mubr.bf16.gmra.mxu0 %v690
  %v1849 = vpop.f32.mrf.mxu0
  %v1850 = vadd.f32 %v1809, %v1849
  %v1851 = vpop.f32.mrf.mxu0
  %v1852 = vpop.f32.mrf.mxu0
  %v1853 = vadd.f32 %v1812, %v1852
  %v1854 = vpop.f32.mrf.mxu0
  %1855 = vdwg.mxu0
  %1856 = vmatprep.subr.bf16.mxu0 0
  %1857 = vmatpush1.bf16.msra.mxu0 %v1532
  %1858 = vmatprep.subr.bf16.mxu0 0
  %1859 = vmatpush1.bf16.msra.mxu0 %v1531
  %1860 = vmatprep.subr.bf16.mxu0 0
  %1861 = vmatpush1.bf16.msra.mxu0 %v1530
  %1862 = vmatprep.subr.bf16.mxu0 0
  %1863 = vmatpush1.bf16.msra.mxu0 %v1529
  %1864 = vmatprep.subr.bf16.mxu0 0
  %1865 = vmatpush1.bf16.msra.mxu0 %v1528
  %1866 = vmatprep.subr.bf16.mxu0 0
  %1867 = vmatpush1.bf16.msra.mxu0 %v1527
  %1868 = vmatprep.subr.bf16.mxu0 0
  %1869 = vmatpush1.bf16.msra.mxu0 %v1526
  %1870 = vmatprep.subr.bf16.mxu0 0
  %1871 = vmatpush1.bf16.msra.mxu0 %v1525
  %1872 = vmatprep.subr.bf16.mxu0 0
  %1873 = vmatpush2.bf16.msra.mxu0 %v1540
  %1874 = vmatprep.subr.bf16.mxu0 0
  %1875 = vmatpush2.bf16.msra.mxu0 %v1539
  %1876 = vmatprep.subr.bf16.mxu0 0
  %1877 = vmatpush2.bf16.msra.mxu0 %v1538
  %1878 = vmatprep.subr.bf16.mxu0 0
  %1879 = vmatpush2.bf16.msra.mxu0 %v1537
  %1880 = vmatprep.subr.bf16.mxu0 0
  %1881 = vmatpush2.bf16.msra.mxu0 %v1536
  %1882 = vmatprep.subr.bf16.mxu0 0
  %1883 = vmatpush2.bf16.msra.mxu0 %v1535
  %1884 = vmatprep.subr.bf16.mxu0 0
  %1885 = vmatpush2.bf16.msra.mxu0 %v1534
  %1886 = vmatprep.subr.bf16.mxu0 0
  %1887 = vmatpush2.bf16.msra.mxu0 %v1533
  %1888 = vmatprep.mubr.bf16.mxu0 %v693
  %1889 = vmatmul.mubr.bf16.gmra.mxu0 %v692
  %v1890 = vpop.f32.mrf.mxu0
  %v1891 = vadd.f32 %v1850, %v1890
  %v1892 = vpop.f32.mrf.mxu0
  %v1893 = vpop.f32.mrf.mxu0
  %v1894 = vadd.f32 %v1853, %v1893
  %v1895 = vpop.f32.mrf.mxu0
  %1896 = vdwg.mxu0
  %1897 = vmatprep.subr.bf16.mxu0 0
  %1898 = vmatpush1.bf16.msra.mxu0 %v1548
  %1899 = vmatprep.subr.bf16.mxu0 0
  %1900 = vmatpush1.bf16.msra.mxu0 %v1547
  %1901 = vmatprep.subr.bf16.mxu0 0
  %1902 = vmatpush1.bf16.msra.mxu0 %v1546
  %1903 = vmatprep.subr.bf16.mxu0 0
  %1904 = vmatpush1.bf16.msra.mxu0 %v1545
  %1905 = vmatprep.subr.bf16.mxu0 0
  %1906 = vmatpush1.bf16.msra.mxu0 %v1544
  %1907 = vmatprep.subr.bf16.mxu0 0
  %1908 = vmatpush1.bf16.msra.mxu0 %v1543
  %1909 = vmatprep.subr.bf16.mxu0 0
  %1910 = vmatpush1.bf16.msra.mxu0 %v1542
  %1911 = vmatprep.subr.bf16.mxu0 0
  %1912 = vmatpush1.bf16.msra.mxu0 %v1541
  %1913 = vmatprep.subr.bf16.mxu0 0
  %1914 = vmatpush2.bf16.msra.mxu0 %v1556
  %1915 = vmatprep.subr.bf16.mxu0 0
  %1916 = vmatpush2.bf16.msra.mxu0 %v1555
  %1917 = vmatprep.subr.bf16.mxu0 0
  %1918 = vmatpush2.bf16.msra.mxu0 %v1554
  %1919 = vmatprep.subr.bf16.mxu0 0
  %1920 = vmatpush2.bf16.msra.mxu0 %v1553
  %1921 = vmatprep.subr.bf16.mxu0 0
  %1922 = vmatpush2.bf16.msra.mxu0 %v1552
  %1923 = vmatprep.subr.bf16.mxu0 0
  %1924 = vmatpush2.bf16.msra.mxu0 %v1551
  %1925 = vmatprep.subr.bf16.mxu0 0
  %1926 = vmatpush2.bf16.msra.mxu0 %v1550
  %1927 = vmatprep.subr.bf16.mxu0 0
  %1928 = vmatpush2.bf16.msra.mxu0 %v1549
  %1929 = vmatprep.mubr.bf16.mxu0 %v695
  %1930 = vmatmul.mubr.bf16.gmra.mxu0 %v694
  %v1931 = vpop.f32.mrf.mxu0
  %v1932 = vadd.f32 %v1891, %v1931
  %v1933 = vpop.f32.mrf.mxu0
  %v1934 = vpop.f32.mrf.mxu0
  %v1935 = vadd.f32 %v1894, %v1934
  %v1936 = vpop.f32.mrf.mxu0
  %1937 = vdwg.mxu0
  %1938 = vmatprep.subr.bf16.mxu0 0
  %1939 = vmatpush1.bf16.msra.mxu0 %v1564
  %1940 = vmatprep.subr.bf16.mxu0 0
  %1941 = vmatpush1.bf16.msra.mxu0 %v1563
  %1942 = vmatprep.subr.bf16.mxu0 0
  %1943 = vmatpush1.bf16.msra.mxu0 %v1562
  %1944 = vmatprep.subr.bf16.mxu0 0
  %1945 = vmatpush1.bf16.msra.mxu0 %v1561
  %1946 = vmatprep.subr.bf16.mxu0 0
  %1947 = vmatpush1.bf16.msra.mxu0 %v1560
  %1948 = vmatprep.subr.bf16.mxu0 0
  %1949 = vmatpush1.bf16.msra.mxu0 %v1559
  %1950 = vmatprep.subr.bf16.mxu0 0
  %1951 = vmatpush1.bf16.msra.mxu0 %v1558
  %1952 = vmatprep.subr.bf16.mxu0 0
  %1953 = vmatpush1.bf16.msra.mxu0 %v1557
  %1954 = vmatprep.subr.bf16.mxu0 0
  %1955 = vmatpush2.bf16.msra.mxu0 %v1572
  %1956 = vmatprep.subr.bf16.mxu0 0
  %1957 = vmatpush2.bf16.msra.mxu0 %v1571
  %1958 = vmatprep.subr.bf16.mxu0 0
  %1959 = vmatpush2.bf16.msra.mxu0 %v1570
  %1960 = vmatprep.subr.bf16.mxu0 0
  %1961 = vmatpush2.bf16.msra.mxu0 %v1569
  %1962 = vmatprep.subr.bf16.mxu0 0
  %1963 = vmatpush2.bf16.msra.mxu0 %v1568
  %1964 = vmatprep.subr.bf16.mxu0 0
  %1965 = vmatpush2.bf16.msra.mxu0 %v1567
  %1966 = vmatprep.subr.bf16.mxu0 0
  %1967 = vmatpush2.bf16.msra.mxu0 %v1566
  %1968 = vmatprep.subr.bf16.mxu0 0
  %1969 = vmatpush2.bf16.msra.mxu0 %v1565
  %1970 = vmatprep.mubr.bf16.mxu0 %v697
  %1971 = vmatmul.mubr.bf16.gmra.mxu0 %v696
  %v1972 = vpop.f32.mrf.mxu0
  %v1973 = vadd.f32 %v1932, %v1972
  %v1974 = vpop.f32.mrf.mxu0
  %v1975 = vpop.f32.mrf.mxu0
  %v1976 = vadd.f32 %v1935, %v1975
  %v1977 = vpop.f32.mrf.mxu0
  %1978 = vdwg.mxu0
  %1979 = vmatprep.subr.bf16.mxu0 0
  %1980 = vmatpush1.bf16.msra.mxu0 %v1580
  %1981 = vmatprep.subr.bf16.mxu0 0
  %1982 = vmatpush1.bf16.msra.mxu0 %v1579
  %1983 = vmatprep.subr.bf16.mxu0 0
  %1984 = vmatpush1.bf16.msra.mxu0 %v1578
  %1985 = vmatprep.subr.bf16.mxu0 0
  %1986 = vmatpush1.bf16.msra.mxu0 %v1577
  %1987 = vmatprep.subr.bf16.mxu0 0
  %1988 = vmatpush1.bf16.msra.mxu0 %v1576
  %1989 = vmatprep.subr.bf16.mxu0 0
  %1990 = vmatpush1.bf16.msra.mxu0 %v1575
  %1991 = vmatprep.subr.bf16.mxu0 0
  %1992 = vmatpush1.bf16.msra.mxu0 %v1574
  %1993 = vmatprep.subr.bf16.mxu0 0
  %1994 = vmatpush1.bf16.msra.mxu0 %v1573
  %1995 = vmatprep.subr.bf16.mxu0 0
  %1996 = vmatpush2.bf16.msra.mxu0 %v1588
  %1997 = vmatprep.subr.bf16.mxu0 0
  %1998 = vmatpush2.bf16.msra.mxu0 %v1587
  %1999 = vmatprep.subr.bf16.mxu0 0
  %2000 = vmatpush2.bf16.msra.mxu0 %v1586
  %2001 = vmatprep.subr.bf16.mxu0 0
  %2002 = vmatpush2.bf16.msra.mxu0 %v1585
  %2003 = vmatprep.subr.bf16.mxu0 0
  %2004 = vmatpush2.bf16.msra.mxu0 %v1584
  %2005 = vmatprep.subr.bf16.mxu0 0
  %2006 = vmatpush2.bf16.msra.mxu0 %v1583
  %2007 = vmatprep.subr.bf16.mxu0 0
  %2008 = vmatpush2.bf16.msra.mxu0 %v1582
  %2009 = vmatprep.subr.bf16.mxu0 0
  %2010 = vmatpush2.bf16.msra.mxu0 %v1581
  %2011 = vmatprep.mubr.bf16.mxu0 %v699
  %2012 = vmatmul.mubr.bf16.gmra.mxu0 %v698
  %v2013 = vpop.f32.mrf.mxu0
  %v2014 = vadd.f32 %v1973, %v2013
  %v2015 = vpop.f32.mrf.mxu0
  %v2016 = vpop.f32.mrf.mxu0
  %v2017 = vadd.f32 %v1976, %v2016
  %v2018 = vpop.f32.mrf.mxu0
  %2019 = vdwg.mxu0
  %2020 = vmatprep.subr.bf16.mxu0 0
  %2021 = vmatpush1.bf16.msra.mxu0 %v1596
  %2022 = vmatprep.subr.bf16.mxu0 0
  %2023 = vmatpush1.bf16.msra.mxu0 %v1595
  %2024 = vmatprep.subr.bf16.mxu0 0
  %2025 = vmatpush1.bf16.msra.mxu0 %v1594
  %2026 = vmatprep.subr.bf16.mxu0 0
  %2027 = vmatpush1.bf16.msra.mxu0 %v1593
  %2028 = vmatprep.subr.bf16.mxu0 0
  %2029 = vmatpush1.bf16.msra.mxu0 %v1592
  %2030 = vmatprep.subr.bf16.mxu0 0
  %2031 = vmatpush1.bf16.msra.mxu0 %v1591
  %2032 = vmatprep.subr.bf16.mxu0 0
  %2033 = vmatpush1.bf16.msra.mxu0 %v1590
  %2034 = vmatprep.subr.bf16.mxu0 0
  %2035 = vmatpush1.bf16.msra.mxu0 %v1589
  %2036 = vmatprep.subr.bf16.mxu0 0
  %2037 = vmatpush2.bf16.msra.mxu0 %v1604
  %2038 = vmatprep.subr.bf16.mxu0 0
  %2039 = vmatpush2.bf16.msra.mxu0 %v1603
  %2040 = vmatprep.subr.bf16.mxu0 0
  %2041 = vmatpush2.bf16.msra.mxu0 %v1602
  %2042 = vmatprep.subr.bf16.mxu0 0
  %2043 = vmatpush2.bf16.msra.mxu0 %v1601
  %2044 = vmatprep.subr.bf16.mxu0 0
  %2045 = vmatpush2.bf16.msra.mxu0 %v1600
  %2046 = vmatprep.subr.bf16.mxu0 0
  %2047 = vmatpush2.bf16.msra.mxu0 %v1599
  %2048 = vmatprep.subr.bf16.mxu0 0
  %2049 = vmatpush2.bf16.msra.mxu0 %v1598
  %2050 = vmatprep.subr.bf16.mxu0 0
  %2051 = vmatpush2.bf16.msra.mxu0 %v1597
  %2052 = vmatprep.mubr.bf16.mxu0 %v701
  %2053 = vmatmul.mubr.bf16.gmra.mxu0 %v700
  %v2054 = vpop.f32.mrf.mxu0
  %v2055 = vadd.f32 %v2014, %v2054
  %v2056 = vpop.f32.mrf.mxu0
  %v2057 = vpop.f32.mrf.mxu0
  %v2058 = vadd.f32 %v2017, %v2057
  %v2059 = vpop.f32.mrf.mxu0
  %2060 = vdwg.mxu0
  %v2061 = vadd.f32 %v27, %v2055
  %v2062 = vadd.f32 %v28, %v2058
  %v2063 = vsel %vm306, %v2061, 0.0
  %2064 = vadd.xlane.f32.xlu0 %v2063
  %v2065 = vpop.xlane.xlu0 %2064
  %v2066 = vsel %vm306, %v2062, 0.0
  %2067 = vadd.xlane.f32.xlu0 %v2066
  %v2068 = vpop.xlane.xlu0 %2067
  %v2069 = vrcp.pop 32.0
  %v2070 = vmul.f32 %v2065, %v2069
  %v2071 = vmul.f32 %v2068, %v2069
  %v2072 = vsub.f32 %v2061, %v2070
  %v2073 = vsub.f32 %v2062, %v2071
  %v2074 = vmul.f32 %v2072, %v2072
  %v2075 = vmul.f32 %v2073, %v2073
  %v2076 = vsel %vm306, %v2074, 0.0
  %2077 = vadd.xlane.f32.xlu0 %v2076
  %v2078 = vpop.xlane.xlu0 %2077
  %v2079 = vsel %vm306, %v2075, 0.0
  %2080 = vadd.xlane.f32.xlu0 %v2079
  %v2081 = vpop.xlane.xlu0 %2080
  %v2082 = vmul.f32 %v2078, %v2069
  %v2083 = vmul.f32 %v2081, %v2069
  %v2084 = vadd.f32 %v2082, 1e-05
  %v2085 = vadd.f32 %v2083, 1e-05
  %v2086 = vrsqrt.pop %v2084
  %v2087 = vrsqrt.pop %v2085
  %v2088 = vmul.f32 %v2072, %v2086
  %v2089 = vmul.f32 %v2073, %v2087
  %v2090 = vld [vmem:[%s5] sm:$0x1]
  %v2092 = vlaneseq
  %v2093 = vshrl.u32 %v2092, 7
  %v2094 = vsub.s32 0, %v2093
  %v2095 = vrot.slane %v2090, %v2094
  %v2097 = vmul.f32 %v2088, %v2095
  %v2098 = vmul.f32 %v2089, %v2095
  %v2099 = vld [vmem:[%s6] sm:$0x1]
  %v2101 = vlaneseq
  %v2102 = vshrl.u32 %v2101, 7
  %v2103 = vsub.s32 0, %v2102
  %v2104 = vrot.slane %v2099, %v2103
  %v2106 = vadd.f32 %v2097, %v2104
  %v2107 = vadd.f32 %v2098, %v2104
  %2108 = vst.msk [vmem:[%s7] sm:$0xff] %vm306, %v2106
  %2109 = vst.msk [vmem:[%s7 + $0x8] sm:$0xff] %vm306, %v2107
  // Predicated region
  $region30: #{extractive_transformer_encoder.5} parent=0 // pred_check
    _
  $region31: #{extractive_transformer_encoder.5} parent=0 // pred_check_branch
    %2111 = sbr.rel (0) target = $region33
  $region32: #{extractive_transformer_encoder.5} parent=0 // pred_region
    _
  $region33: #{extractive_transformer_encoder.5} parent=0 // pred_fallthru
    _
  // Predicated region
  $region34: #{extractive_transformer_encoder.5} parent=0 // pred_check
    _
  $region35: #{extractive_transformer_encoder.5} parent=0 // pred_check_branch
    %2113 = sbr.rel (0) target = $region37
  $region36: #{extractive_transformer_encoder.5} parent=0 // pred_region
    _
  $region37: #{extractive_transformer_encoder.5} parent=0 // pred_fallthru
    _

</llo_original>
